<compile_context>
chip_gen: v6e
topology: v6e:2x2x1
jax: 0.10.0
libtpu: 0.0.40
codegen_flags: <defaults>
</compile_context>

<pallas_src>
import functools

import jax
import jax.numpy as jnp
from jax.experimental import pallas as pl
from jax.experimental.pallas import tpu as pltpu

NEG_SLOPE = 0.2      # GATv2Conv default negative_slope
NEG_BIG = -1e30      # additive mask value for non-edges


# ---------------------------------------------------------------------------
# In-kernel helpers
# ---------------------------------------------------------------------------
def _elu(v):
    # min() keeps the discarded exp branch finite; matches F.elu to fp rounding.
    return jnp.where(v > 0.0, v, jnp.exp(jnp.minimum(v, 0.0)) - 1.0)


def _gat_layer(x, edge_bias, w, b, rep, blk, att_blk, hs_mask, b_out,
               *, heads, c_dim, n):
    """One dense GATv2 layer; returns concatenated head outputs [n, heads*c_dim]."""
    hc = heads * c_dim
    nc = n * c_dim

    # Fused lin_l / lin_r projection: one MXU matmul.
    h = jnp.dot(x, w, preferred_element_type=jnp.float32) + b   # [n, 2*hc]
    hs = h[:, :hc]              # source-side features (also the messages)
    ht = h[:, hc:]              # target-side features

    # Lane-dense pairwise slab for ALL heads at once:
    #   slab[i, hd*n*c + j*c + c'] = leaky_relu(ht[i, hd*c+c'] + hs[j, hd*c+c'])
    ht_rep = jnp.dot(ht, rep, preferred_element_type=jnp.float32)   # [n, heads*n*c]
    hs_rep = jnp.dot(hs, rep, preferred_element_type=jnp.float32)   # [n, heads*n*c]
    v = jnp.sum(hs_rep * blk, axis=0, keepdims=True)                # [1, heads*n*c]
    z = ht_rep + v
    slab = jnp.where(z > 0.0, z, NEG_SLOPE * z)                     # one leaky_relu pass

    # Per-head scores (block-diag att MXU reduce) + masked, stable softmax.
    p_list = []
    for hd in range(heads):
        s_h = slab[:, hd * nc:(hd + 1) * nc]                        # 128-aligned lane slice
        a_h = att_blk[hd * nc:(hd + 1) * nc, :]                     # [n*c, n]
        e = jnp.dot(s_h, a_h, preferred_element_type=jnp.float32) + edge_bias
        e = e - jnp.max(e, axis=-1, keepdims=True)
        p = jnp.exp(e)
        denom = jnp.maximum(jnp.sum(p, axis=-1, keepdims=True), 1e-30)
        p_list.append(p / denom)

    # Fused aggregation: one matmul per layer; head-concat falls out directly.
    if heads > 1:
        p_big = jnp.concatenate(p_list, axis=1)                     # [n, heads*n]
        hs_blkdiag = jnp.concatenate([hs] * heads, axis=0) * hs_mask  # [heads*n, heads*c]
        out = jnp.dot(p_big, hs_blkdiag, preferred_element_type=jnp.float32)
    else:
        out = jnp.dot(p_list[0], hs, preferred_element_type=jnp.float32)
    return out + b_out


# ---------------------------------------------------------------------------
# Fused forward kernel (conv1 -> ELU -> conv2 -> ELU -> conv3 -> fc)
# ---------------------------------------------------------------------------
def _fused_gat_kernel(x_ref, ebias_ref,
                      rep_h_ref, blk_h_ref, hsmask_ref, rep1_ref, blk1_ref,
                      w1_ref, b1_ref, a1_ref, bo1_ref,
                      w2_ref, b2_ref, a2_ref, bo2_ref,
                      w3_ref, b3_ref, a3_ref, bo3_ref,
                      fcw_ref, fcb_ref,
                      o_ref,
                      *, heads, hidden, n):
    ebias = ebias_ref[...]
    rep_h = rep_h_ref[...]
    blk_h = blk_h_ref[...]
    hs_mask = hsmask_ref[...]
    rep_1 = rep1_ref[...]
    blk_1 = blk1_ref[...]

    h = _gat_layer(x_ref[...], ebias, w1_ref[...], b1_ref[...], rep_h, blk_h,
                   a1_ref[...], hs_mask, bo1_ref[...],
                   heads=heads, c_dim=hidden, n=n)
    h = _elu(h)
    h = _gat_layer(h, ebias, w2_ref[...], b2_ref[...], rep_h, blk_h,
                   a2_ref[...], hs_mask, bo2_ref[...],
                   heads=heads, c_dim=hidden, n=n)
    h = _elu(h)
    h = _gat_layer(h, ebias, w3_ref[...], b3_ref[...], rep_1, blk_1,
                   a3_ref[...], None, bo3_ref[...],
                   heads=1, c_dim=hidden, n=n)
    o_ref[...] = (jnp.dot(h, fcw_ref[...], preferred_element_type=jnp.float32)
                  + fcb_ref[...])


# ---------------------------------------------------------------------------
# Wrapper-side structural matrices (shape/weight-only; built once by XLA)
# ---------------------------------------------------------------------------
def _rep_and_blk(n, c, heads):
    """rep[k, hd*n*c + j*c + c'] = (k == hd*c + c');  blk[j', m] = (j' == j of m)."""
    m = heads * n * c
    col = jnp.arange(m)
    hd_of = col // (n * c)
    c_of = col % c
    j_of = (col % (n * c)) // c
    rep = (jnp.arange(heads * c)[:, None] == (hd_of * c + c_of)[None, :]
           ).astype(jnp.float32)                                    # [heads*c, m]
    blk = (jnp.arange(n)[:, None] == j_of[None, :]).astype(jnp.float32)  # [n, m]
    return rep, blk


def _att_blockdiag(att, n):
    """att: [heads, c] -> A [heads*n*c, n] with A[hd*n*c + j*c + c', j'] = att[hd,c']*(j==j')."""
    heads, c = att.shape
    row = jnp.arange(n * c)
    j = row // c
    cc = row % c
    blk = (j[:, None] == jnp.arange(n)[None, :]).astype(jnp.float32)     # [n*c, n]
    a = att[:, cc][:, :, None] * blk[None, :, :]                          # [heads, n*c, n]
    return a.reshape(heads * n * c, n)


def _hs_blockdiag_mask(n, c, heads):
    """mask[hd*n + j, hd'*c + c'] = (hd == hd')."""
    rows = jnp.arange(heads * n) // n
    cols = jnp.arange(heads * c) // c
    return (rows[:, None] == cols[None, :]).astype(jnp.float32)


# ---------------------------------------------------------------------------
# Wrapper: single pallas_call for the whole model
# ---------------------------------------------------------------------------
def gatv2_trajectory_predictor(x, adj, params, *, hidden, heads):
    n, in_ch = x.shape
    out_dim = params["fc_w"].shape[1]
    hc = heads * hidden

    def fuse(p):
        return (jnp.concatenate([p["wl"], p["wr"]], axis=1),
                jnp.concatenate([p["bl"], p["br"]], axis=1))

    w1, b1 = fuse(params["conv1"])
    w2, b2 = fuse(params["conv2"])
    w3, b3 = fuse(params["conv3"])

    edge_bias = jnp.where(adj > 0, 0.0, NEG_BIG).astype(jnp.float32)
    rep_h, blk_h = _rep_and_blk(n, hidden, heads)
    rep_1, blk_1 = _rep_and_blk(n, hidden, 1)
    hs_mask = _hs_blockdiag_mask(n, hidden, heads)
    a1 = _att_blockdiag(params["conv1"]["att"], n)
    a2 = _att_blockdiag(params["conv2"]["att"], n)
    a3 = _att_blockdiag(params["conv3"]["att"], n)

    args = (x, edge_bias,
            rep_h, blk_h, hs_mask, rep_1, blk_1,
            w1, b1, a1, params["conv1"]["bout"],
            w2, b2, a2, params["conv2"]["bout"],
            w3, b3, a3, params["conv3"]["bout"],
            params["fc_w"], params["fc_b"])

    # Rough advisory cost estimate for XLA's scheduler.
    flops = (2 * n * in_ch * (2 * hc)
             + 2 * n * hc * (2 * hc)
             + 2 * n * hc * (2 * hidden))
    for h_ in (heads, heads, 1):
        m = h_ * n * hidden
        flops += 2 * 2 * n * (h_ * hidden) * m          # ht@rep, hs@rep
        flops += h_ * 2 * n * (n * hidden) * n           # per-head att reduce
        flops += 2 * n * (h_ * n) * (h_ * hidden)        # fused aggregation
        flops += 6 * h_ * n * n                          # softmax elementwise
    flops += 2 * n * hidden * out_dim
    transcendentals = (2 * heads + 1) * n * n + 2 * n * hc
    bytes_accessed = sum(int(a.size) * 4 for a in args) + n * out_dim * 4

    vmem = pl.BlockSpec(memory_space=pltpu.MemorySpace.VMEM)
    kernel = functools.partial(_fused_gat_kernel, heads=heads, hidden=hidden, n=n)

    return pl.pallas_call(
        kernel,
        out_shape=jax.ShapeDtypeStruct((n, out_dim), jnp.float32),
        in_specs=[vmem] * len(args),
        out_specs=vmem,
        cost_estimate=pl.CostEstimate(flops=int(flops),
                                      transcendentals=int(transcendentals),
                                      bytes_accessed=int(bytes_accessed)),
    )(*args)


# ---------------------------------------------------------------------------
# Parameter construction (deterministic, glorot-uniform style)
# ---------------------------------------------------------------------------
def glorot(key, shape):
    fan_in, fan_out = shape[0], shape[-1]
    limit = (6.0 / (fan_in + fan_out)) ** 0.5
    return jax.random.uniform(key, shape, jnp.float32, -limit, limit)


def make_gat_params(key, in_ch, out_ch, heads):
    ks = jax.random.split(key, 6)
    return dict(
        wl=glorot(ks[0], (in_ch, heads * out_ch)),
        bl=jnp.zeros((1, heads * out_ch), jnp.float32),
        wr=glorot(ks[1], (in_ch, heads * out_ch)),
        br=jnp.zeros((1, heads * out_ch), jnp.float32),
        att=glorot(ks[2], (heads, out_ch)),
        bout=jnp.zeros((1, heads * out_ch), jnp.float32),
    )


# ---------------------------------------------------------------------------
# Pure-JAX reference (same dense math) for correctness check.
# ---------------------------------------------------------------------------
def _ref_gat_layer(x, adj, p, heads, out_ch, apply_elu):
    hs = x @ p["wl"] + p["bl"]
    ht = x @ p["wr"] + p["br"]
    outs = []
    for h in range(heads):
        hs_h = hs[:, h * out_ch:(h + 1) * out_ch]
        ht_h = ht[:, h * out_ch:(h + 1) * out_ch]
        s = jax.nn.leaky_relu(ht_h[:, None, :] + hs_h[None, :, :], NEG_SLOPE)
        e = jnp.sum(s * p["att"][h][None, None, :], axis=-1)
        e = jnp.where(adj > 0, e, NEG_BIG)
        alpha = jax.nn.softmax(e, axis=-1)
        outs.append(alpha @ hs_h)
    out = jnp.concatenate(outs, axis=-1) + p["bout"]
    return jax.nn.elu(out) if apply_elu else out


def _ref_forward(x, adj, params, hidden, heads):
    h = _ref_gat_layer(x, adj, params["conv1"], heads, hidden, True)
    h = _ref_gat_layer(h, adj, params["conv2"], heads, hidden, True)
    h = _ref_gat_layer(h, adj, params["conv3"], 1, hidden, False)
    return h @ params["fc_w"] + params["fc_b"]


# ---------------------------------------------------------------------------
if __name__ == "__main__":
    N = 16              # number of graph nodes
    IN_CH = 8           # in_channels
    HIDDEN = 8          # hidden_channels
    OUT_CH = 4          # out_channels
    HEADS = 4           # num_heads
    NUM_EDGES = 40

    key = jax.random.PRNGKey(0)
    kx, ke, k1, k2, k3, k4 = jax.random.split(key, 6)

    # Node features and random edge_index [2, E] (row 0 = source, row 1 = target).
    x = jax.random.normal(kx, (N, IN_CH), jnp.float32)
    edge_index = jax.random.randint(ke, (2, NUM_EDGES), 0, N)

    # Dense adjacency mask: adj[dst, src] = 1, plus self-loops (GATv2 default).
    adj = jnp.zeros((N, N), jnp.float32)
    adj = adj.at[edge_index[1], edge_index[0]].set(1.0)
    adj = jnp.maximum(adj, jnp.eye(N, dtype=jnp.float32))

    params = dict(
        conv1=make_gat_params(k1, IN_CH, HIDDEN, HEADS),
        conv2=make_gat_params(k2, HIDDEN * HEADS, HIDDEN, HEADS),
        conv3=make_gat_params(k3, HIDDEN * HEADS, HIDDEN, 1),
        fc_w=glorot(k4, (HIDDEN, OUT_CH)),
        fc_b=jnp.zeros((1, OUT_CH), jnp.float32),
    )

    out = gatv2_trajectory_predictor(x, adj, params, hidden=HIDDEN, heads=HEADS)
    out = jax.block_until_ready(out)

    ref = _ref_forward(x, adj, params, HIDDEN, HEADS)
    assert out.shape == (N, OUT_CH)
    assert jnp.allclose(out, ref, atol=1e-4, rtol=1e-3), "mismatch vs reference"

    print("KERNEL_OK")
</pallas_src>

<mosaic_0001>
module attributes {stable_mosaic.version = 11 : i64} {
  func.func @_fused_gat_kernel(%arg0: memref<16x8xf32, #tpu.memory_space<vmem>>, %arg1: memref<16x16xf32, #tpu.memory_space<vmem>>, %arg2: memref<32x512xf32, #tpu.memory_space<vmem>>, %arg3: memref<16x512xf32, #tpu.memory_space<vmem>>, %arg4: memref<64x32xf32, #tpu.memory_space<vmem>>, %arg5: memref<8x128xf32, #tpu.memory_space<vmem>>, %arg6: memref<16x128xf32, #tpu.memory_space<vmem>>, %arg7: memref<8x64xf32, #tpu.memory_space<vmem>>, %arg8: memref<1x64xf32, #tpu.memory_space<vmem>>, %arg9: memref<512x16xf32, #tpu.memory_space<vmem>>, %arg10: memref<1x32xf32, #tpu.memory_space<vmem>>, %arg11: memref<32x64xf32, #tpu.memory_space<vmem>>, %arg12: memref<1x64xf32, #tpu.memory_space<vmem>>, %arg13: memref<512x16xf32, #tpu.memory_space<vmem>>, %arg14: memref<1x32xf32, #tpu.memory_space<vmem>>, %arg15: memref<32x16xf32, #tpu.memory_space<vmem>>, %arg16: memref<1x16xf32, #tpu.memory_space<vmem>>, %arg17: memref<128x16xf32, #tpu.memory_space<vmem>>, %arg18: memref<1x8xf32, #tpu.memory_space<vmem>>, %arg19: memref<8x4xf32, #tpu.memory_space<vmem>>, %arg20: memref<1x4xf32, #tpu.memory_space<vmem>>, %arg21: memref<16x4xf32, #tpu.memory_space<vmem>>) attributes {dimension_semantics = [], scalar_prefetch = 0 : i64, scratch_operands = 0 : i64, tpu.core_type = #tpu.core_type<tc>} {
    %c0 = arith.constant 0 : index
    %c0_0 = arith.constant 0 : index
    %0 = vector.load %arg1[%c0, %c0_0] : memref<16x16xf32, #tpu.memory_space<vmem>>, vector<16x16xf32>
    %c0_1 = arith.constant 0 : index
    %c0_2 = arith.constant 0 : index
    %1 = vector.load %arg2[%c0_1, %c0_2] : memref<32x512xf32, #tpu.memory_space<vmem>>, vector<32x512xf32>
    %c0_3 = arith.constant 0 : index
    %c0_4 = arith.constant 0 : index
    %2 = vector.load %arg3[%c0_3, %c0_4] : memref<16x512xf32, #tpu.memory_space<vmem>>, vector<16x512xf32>
    %c0_5 = arith.constant 0 : index
    %c0_6 = arith.constant 0 : index
    %3 = vector.load %arg4[%c0_5, %c0_6] : memref<64x32xf32, #tpu.memory_space<vmem>>, vector<64x32xf32>
    %c0_7 = arith.constant 0 : index
    %c0_8 = arith.constant 0 : index
    %4 = vector.load %arg5[%c0_7, %c0_8] : memref<8x128xf32, #tpu.memory_space<vmem>>, vector<8x128xf32>
    %c0_9 = arith.constant 0 : index
    %c0_10 = arith.constant 0 : index
    %5 = vector.load %arg6[%c0_9, %c0_10] : memref<16x128xf32, #tpu.memory_space<vmem>>, vector<16x128xf32>
    %c0_11 = arith.constant 0 : index
    %c0_12 = arith.constant 0 : index
    %6 = vector.load %arg0[%c0_11, %c0_12] : memref<16x8xf32, #tpu.memory_space<vmem>>, vector<16x8xf32>
    %c0_13 = arith.constant 0 : index
    %c0_14 = arith.constant 0 : index
    %7 = vector.load %arg7[%c0_13, %c0_14] : memref<8x64xf32, #tpu.memory_space<vmem>>, vector<8x64xf32>
    %c0_15 = arith.constant 0 : index
    %c0_16 = arith.constant 0 : index
    %8 = vector.load %arg8[%c0_15, %c0_16] : memref<1x64xf32, #tpu.memory_space<vmem>>, vector<1x64xf32>
    %c0_17 = arith.constant 0 : index
    %c0_18 = arith.constant 0 : index
    %9 = vector.load %arg9[%c0_17, %c0_18] : memref<512x16xf32, #tpu.memory_space<vmem>>, vector<512x16xf32>
    %c0_19 = arith.constant 0 : index
    %c0_20 = arith.constant 0 : index
    %10 = vector.load %arg10[%c0_19, %c0_20] : memref<1x32xf32, #tpu.memory_space<vmem>>, vector<1x32xf32>
    %cst = arith.constant dense<0.000000e+00> : vector<16x64xf32>
    %11 = tpu.matmul %6, %7, %cst {dimension_numbers = #tpu.dot_dimension_numbers<[1], [0], [0], [1], [0, 0, 1, 1], [], []>} : vector<16x8xf32>, vector<8x64xf32>, vector<16x64xf32> -> vector<16x64xf32>
    %12 = vector.broadcast %8 : vector<1x64xf32> to vector<16x64xf32>
    %13 = arith.addf %11, %12 : vector<16x64xf32>
    %14 = vector.extract_strided_slice %13 {offsets = [0, 0], sizes = [16, 32], strides = [1, 1]} : vector<16x64xf32> to vector<16x32xf32>
    %15 = vector.extract_strided_slice %13 {offsets = [0, 32], sizes = [16, 32], strides = [1, 1]} : vector<16x64xf32> to vector<16x32xf32>
    %cst_21 = arith.constant dense<0.000000e+00> : vector<16x512xf32>
    %16 = tpu.matmul %15, %1, %cst_21 {dimension_numbers = #tpu.dot_dimension_numbers<[1], [0], [0], [1], [0, 0, 1, 1], [], []>} : vector<16x32xf32>, vector<32x512xf32>, vector<16x512xf32> -> vector<16x512xf32>
    %cst_22 = arith.constant dense<0.000000e+00> : vector<16x512xf32>
    %17 = tpu.matmul %14, %1, %cst_22 {dimension_numbers = #tpu.dot_dimension_numbers<[1], [0], [0], [1], [0, 0, 1, 1], [], []>} : vector<16x32xf32>, vector<32x512xf32>, vector<16x512xf32> -> vector<16x512xf32>
    %18 = arith.mulf %17, %2 : vector<16x512xf32>
    %cst_23 = arith.constant dense<0.000000e+00> : vector<512xf32>
    %19 = vector.multi_reduction <add>, %18, %cst_23 [0] : vector<16x512xf32> to vector<512xf32>
    %20 = vector.shape_cast %19 : vector<512xf32> to vector<1x512xf32>
    %21 = vector.broadcast %20 : vector<1x512xf32> to vector<16x512xf32>
    %22 = arith.addf %16, %21 : vector<16x512xf32>
    %cst_24 = arith.constant 0.000000e+00 : f32
    %23 = vector.broadcast %cst_24 : f32 to vector<16x512xf32>
    %24 = arith.cmpf ogt, %22, %23 : vector<16x512xf32>
    %cst_25 = arith.constant 2.000000e-01 : f32
    %25 = vector.broadcast %cst_25 : f32 to vector<16x512xf32>
    %26 = arith.mulf %25, %22 : vector<16x512xf32>
    %27 = arith.select %24, %22, %26 : vector<16x512xi1>, vector<16x512xf32>
    %28 = vector.extract_strided_slice %27 {offsets = [0, 0], sizes = [16, 128], strides = [1, 1]} : vector<16x512xf32> to vector<16x128xf32>
    %29 = vector.extract_strided_slice %9 {offsets = [0, 0], sizes = [128, 16], strides = [1, 1]} : vector<512x16xf32> to vector<128x16xf32>
    %cst_26 = arith.constant dense<0.000000e+00> : vector<16x16xf32>
    %30 = tpu.matmul %28, %29, %cst_26 {dimension_numbers = #tpu.dot_dimension_numbers<[1], [0], [0], [1], [0, 0, 1, 1], [], []>} : vector<16x128xf32>, vector<128x16xf32>, vector<16x16xf32> -> vector<16x16xf32>
    %31 = arith.addf %30, %0 : vector<16x16xf32>
    %cst_27 = arith.constant dense<0xFF800000> : vector<16xf32>
    %32 = vector.multi_reduction <maximumf>, %31, %cst_27 [1] : vector<16x16xf32> to vector<16xf32>
    %33 = vector.shape_cast %32 : vector<16xf32> to vector<16x1xf32>
    %34 = vector.broadcast %33 : vector<16x1xf32> to vector<16x16xf32>
    %35 = arith.subf %31, %34 : vector<16x16xf32>
    %36 = math.exp %35 : vector<16x16xf32>
    %cst_28 = arith.constant dense<0.000000e+00> : vector<16xf32>
    %37 = vector.multi_reduction <add>, %36, %cst_28 [1] : vector<16x16xf32> to vector<16xf32>
    %38 = vector.shape_cast %37 : vector<16xf32> to vector<16x1xf32>
    %cst_29 = arith.constant 1.000000e-30 : f32
    %39 = vector.broadcast %cst_29 : f32 to vector<16x1xf32>
    %40 = arith.maximumf %38, %39 : vector<16x1xf32>
    %41 = vector.broadcast %40 : vector<16x1xf32> to vector<16x16xf32>
    %42 = arith.divf %36, %41 : vector<16x16xf32>
    %43 = vector.extract_strided_slice %27 {offsets = [0, 128], sizes = [16, 128], strides = [1, 1]} : vector<16x512xf32> to vector<16x128xf32>
    %44 = vector.extract_strided_slice %9 {offsets = [128, 0], sizes = [128, 16], strides = [1, 1]} : vector<512x16xf32> to vector<128x16xf32>
    %cst_30 = arith.constant dense<0.000000e+00> : vector<16x16xf32>
    %45 = tpu.matmul %43, %44, %cst_30 {dimension_numbers = #tpu.dot_dimension_numbers<[1], [0], [0], [1], [0, 0, 1, 1], [], []>} : vector<16x128xf32>, vector<128x16xf32>, vector<16x16xf32> -> vector<16x16xf32>
    %46 = arith.addf %45, %0 : vector<16x16xf32>
    %cst_31 = arith.constant dense<0xFF800000> : vector<16xf32>
    %47 = vector.multi_reduction <maximumf>, %46, %cst_31 [1] : vector<16x16xf32> to vector<16xf32>
    %48 = vector.shape_cast %47 : vector<16xf32> to vector<16x1xf32>
    %49 = vector.broadcast %48 : vector<16x1xf32> to vector<16x16xf32>
    %50 = arith.subf %46, %49 : vector<16x16xf32>
    %51 = math.exp %50 : vector<16x16xf32>
    %cst_32 = arith.constant dense<0.000000e+00> : vector<16xf32>
    %52 = vector.multi_reduction <add>, %51, %cst_32 [1] : vector<16x16xf32> to vector<16xf32>
    %53 = vector.shape_cast %52 : vector<16xf32> to vector<16x1xf32>
    %cst_33 = arith.constant 1.000000e-30 : f32
    %54 = vector.broadcast %cst_33 : f32 to vector<16x1xf32>
    %55 = arith.maximumf %53, %54 : vector<16x1xf32>
    %56 = vector.broadcast %55 : vector<16x1xf32> to vector<16x16xf32>
    %57 = arith.divf %51, %56 : vector<16x16xf32>
    %58 = vector.extract_strided_slice %27 {offsets = [0, 256], sizes = [16, 128], strides = [1, 1]} : vector<16x512xf32> to vector<16x128xf32>
    %59 = vector.extract_strided_slice %9 {offsets = [256, 0], sizes = [128, 16], strides = [1, 1]} : vector<512x16xf32> to vector<128x16xf32>
    %cst_34 = arith.constant dense<0.000000e+00> : vector<16x16xf32>
    %60 = tpu.matmul %58, %59, %cst_34 {dimension_numbers = #tpu.dot_dimension_numbers<[1], [0], [0], [1], [0, 0, 1, 1], [], []>} : vector<16x128xf32>, vector<128x16xf32>, vector<16x16xf32> -> vector<16x16xf32>
    %61 = arith.addf %60, %0 : vector<16x16xf32>
    %cst_35 = arith.constant dense<0xFF800000> : vector<16xf32>
    %62 = vector.multi_reduction <maximumf>, %61, %cst_35 [1] : vector<16x16xf32> to vector<16xf32>
    %63 = vector.shape_cast %62 : vector<16xf32> to vector<16x1xf32>
    %64 = vector.broadcast %63 : vector<16x1xf32> to vector<16x16xf32>
    %65 = arith.subf %61, %64 : vector<16x16xf32>
    %66 = math.exp %65 : vector<16x16xf32>
    %cst_36 = arith.constant dense<0.000000e+00> : vector<16xf32>
    %67 = vector.multi_reduction <add>, %66, %cst_36 [1] : vector<16x16xf32> to vector<16xf32>
    %68 = vector.shape_cast %67 : vector<16xf32> to vector<16x1xf32>
    %cst_37 = arith.constant 1.000000e-30 : f32
    %69 = vector.broadcast %cst_37 : f32 to vector<16x1xf32>
    %70 = arith.maximumf %68, %69 : vector<16x1xf32>
    %71 = vector.broadcast %70 : vector<16x1xf32> to vector<16x16xf32>
    %72 = arith.divf %66, %71 : vector<16x16xf32>
    %73 = vector.extract_strided_slice %27 {offsets = [0, 384], sizes = [16, 128], strides = [1, 1]} : vector<16x512xf32> to vector<16x128xf32>
    %74 = vector.extract_strided_slice %9 {offsets = [384, 0], sizes = [128, 16], strides = [1, 1]} : vector<512x16xf32> to vector<128x16xf32>
    %cst_38 = arith.constant dense<0.000000e+00> : vector<16x16xf32>
    %75 = tpu.matmul %73, %74, %cst_38 {dimension_numbers = #tpu.dot_dimension_numbers<[1], [0], [0], [1], [0, 0, 1, 1], [], []>} : vector<16x128xf32>, vector<128x16xf32>, vector<16x16xf32> -> vector<16x16xf32>
    %76 = arith.addf %75, %0 : vector<16x16xf32>
    %cst_39 = arith.constant dense<0xFF800000> : vector<16xf32>
    %77 = vector.multi_reduction <maximumf>, %76, %cst_39 [1] : vector<16x16xf32> to vector<16xf32>
    %78 = vector.shape_cast %77 : vector<16xf32> to vector<16x1xf32>
    %79 = vector.broadcast %78 : vector<16x1xf32> to vector<16x16xf32>
    %80 = arith.subf %76, %79 : vector<16x16xf32>
    %81 = math.exp %80 : vector<16x16xf32>
    %cst_40 = arith.constant dense<0.000000e+00> : vector<16xf32>
    %82 = vector.multi_reduction <add>, %81, %cst_40 [1] : vector<16x16xf32> to vector<16xf32>
    %83 = vector.shape_cast %82 : vector<16xf32> to vector<16x1xf32>
    %cst_41 = arith.constant 1.000000e-30 : f32
    %84 = vector.broadcast %cst_41 : f32 to vector<16x1xf32>
    %85 = arith.maximumf %83, %84 : vector<16x1xf32>
    %86 = vector.broadcast %85 : vector<16x1xf32> to vector<16x16xf32>
    %87 = arith.divf %81, %86 : vector<16x16xf32>
    %88 = tpu.concatenate %42, %57, %72, %87 in 1 : vector<16x16xf32>, vector<16x16xf32>, vector<16x16xf32>, vector<16x16xf32> -> vector<16x64xf32>
    %89 = tpu.concatenate %14, %14, %14, %14 in 0 : vector<16x32xf32>, vector<16x32xf32>, vector<16x32xf32>, vector<16x32xf32> -> vector<64x32xf32>
    %90 = arith.mulf %89, %3 : vector<64x32xf32>
    %cst_42 = arith.constant dense<0.000000e+00> : vector<16x32xf32>
    %91 = tpu.matmul %88, %90, %cst_42 {dimension_numbers = #tpu.dot_dimension_numbers<[1], [0], [0], [1], [0, 0, 1, 1], [], []>} : vector<16x64xf32>, vector<64x32xf32>, vector<16x32xf32> -> vector<16x32xf32>
    %92 = vector.broadcast %10 : vector<1x32xf32> to vector<16x32xf32>
    %93 = arith.addf %91, %92 : vector<16x32xf32>
    %cst_43 = arith.constant 0.000000e+00 : f32
    %94 = vector.broadcast %cst_43 : f32 to vector<16x32xf32>
    %95 = arith.cmpf ogt, %93, %94 : vector<16x32xf32>
    %cst_44 = arith.constant 0.000000e+00 : f32
    %96 = vector.broadcast %cst_44 : f32 to vector<16x32xf32>
    %97 = arith.minimumf %93, %96 : vector<16x32xf32>
    %98 = math.exp %97 : vector<16x32xf32>
    %cst_45 = arith.constant 1.000000e+00 : f32
    %99 = vector.broadcast %cst_45 : f32 to vector<16x32xf32>
    %100 = arith.subf %98, %99 : vector<16x32xf32>
    %101 = arith.select %95, %93, %100 : vector<16x32xi1>, vector<16x32xf32>
    %c0_46 = arith.constant 0 : index
    %c0_47 = arith.constant 0 : index
    %102 = vector.load %arg11[%c0_46, %c0_47] : memref<32x64xf32, #tpu.memory_space<vmem>>, vector<32x64xf32>
    %c0_48 = arith.constant 0 : index
    %c0_49 = arith.constant 0 : index
    %103 = vector.load %arg12[%c0_48, %c0_49] : memref<1x64xf32, #tpu.memory_space<vmem>>, vector<1x64xf32>
    %c0_50 = arith.constant 0 : index
    %c0_51 = arith.constant 0 : index
    %104 = vector.load %arg13[%c0_50, %c0_51] : memref<512x16xf32, #tpu.memory_space<vmem>>, vector<512x16xf32>
    %c0_52 = arith.constant 0 : index
    %c0_53 = arith.constant 0 : index
    %105 = vector.load %arg14[%c0_52, %c0_53] : memref<1x32xf32, #tpu.memory_space<vmem>>, vector<1x32xf32>
    %cst_54 = arith.constant dense<0.000000e+00> : vector<16x64xf32>
    %106 = tpu.matmul %101, %102, %cst_54 {dimension_numbers = #tpu.dot_dimension_numbers<[1], [0], [0], [1], [0, 0, 1, 1], [], []>} : vector<16x32xf32>, vector<32x64xf32>, vector<16x64xf32> -> vector<16x64xf32>
    %107 = vector.broadcast %103 : vector<1x64xf32> to vector<16x64xf32>
    %108 = arith.addf %106, %107 : vector<16x64xf32>
    %109 = vector.extract_strided_slice %108 {offsets = [0, 0], sizes = [16, 32], strides = [1, 1]} : vector<16x64xf32> to vector<16x32xf32>
    %110 = vector.extract_strided_slice %108 {offsets = [0, 32], sizes = [16, 32], strides = [1, 1]} : vector<16x64xf32> to vector<16x32xf32>
    %cst_55 = arith.constant dense<0.000000e+00> : vector<16x512xf32>
    %111 = tpu.matmul %110, %1, %cst_55 {dimension_numbers = #tpu.dot_dimension_numbers<[1], [0], [0], [1], [0, 0, 1, 1], [], []>} : vector<16x32xf32>, vector<32x512xf32>, vector<16x512xf32> -> vector<16x512xf32>
    %cst_56 = arith.constant dense<0.000000e+00> : vector<16x512xf32>
    %112 = tpu.matmul %109, %1, %cst_56 {dimension_numbers = #tpu.dot_dimension_numbers<[1], [0], [0], [1], [0, 0, 1, 1], [], []>} : vector<16x32xf32>, vector<32x512xf32>, vector<16x512xf32> -> vector<16x512xf32>
    %113 = arith.mulf %112, %2 : vector<16x512xf32>
    %cst_57 = arith.constant dense<0.000000e+00> : vector<512xf32>
    %114 = vector.multi_reduction <add>, %113, %cst_57 [0] : vector<16x512xf32> to vector<512xf32>
    %115 = vector.shape_cast %114 : vector<512xf32> to vector<1x512xf32>
    %116 = vector.broadcast %115 : vector<1x512xf32> to vector<16x512xf32>
    %117 = arith.addf %111, %116 : vector<16x512xf32>
    %cst_58 = arith.constant 0.000000e+00 : f32
    %118 = vector.broadcast %cst_58 : f32 to vector<16x512xf32>
    %119 = arith.cmpf ogt, %117, %118 : vector<16x512xf32>
    %cst_59 = arith.constant 2.000000e-01 : f32
    %120 = vector.broadcast %cst_59 : f32 to vector<16x512xf32>
    %121 = arith.mulf %120, %117 : vector<16x512xf32>
    %122 = arith.select %119, %117, %121 : vector<16x512xi1>, vector<16x512xf32>
    %123 = vector.extract_strided_slice %122 {offsets = [0, 0], sizes = [16, 128], strides = [1, 1]} : vector<16x512xf32> to vector<16x128xf32>
    %124 = vector.extract_strided_slice %104 {offsets = [0, 0], sizes = [128, 16], strides = [1, 1]} : vector<512x16xf32> to vector<128x16xf32>
    %cst_60 = arith.constant dense<0.000000e+00> : vector<16x16xf32>
    %125 = tpu.matmul %123, %124, %cst_60 {dimension_numbers = #tpu.dot_dimension_numbers<[1], [0], [0], [1], [0, 0, 1, 1], [], []>} : vector<16x128xf32>, vector<128x16xf32>, vector<16x16xf32> -> vector<16x16xf32>
    %126 = arith.addf %125, %0 : vector<16x16xf32>
    %cst_61 = arith.constant dense<0xFF800000> : vector<16xf32>
    %127 = vector.multi_reduction <maximumf>, %126, %cst_61 [1] : vector<16x16xf32> to vector<16xf32>
    %128 = vector.shape_cast %127 : vector<16xf32> to vector<16x1xf32>
    %129 = vector.broadcast %128 : vector<16x1xf32> to vector<16x16xf32>
    %130 = arith.subf %126, %129 : vector<16x16xf32>
    %131 = math.exp %130 : vector<16x16xf32>
    %cst_62 = arith.constant dense<0.000000e+00> : vector<16xf32>
    %132 = vector.multi_reduction <add>, %131, %cst_62 [1] : vector<16x16xf32> to vector<16xf32>
    %133 = vector.shape_cast %132 : vector<16xf32> to vector<16x1xf32>
    %cst_63 = arith.constant 1.000000e-30 : f32
    %134 = vector.broadcast %cst_63 : f32 to vector<16x1xf32>
    %135 = arith.maximumf %133, %134 : vector<16x1xf32>
    %136 = vector.broadcast %135 : vector<16x1xf32> to vector<16x16xf32>
    %137 = arith.divf %131, %136 : vector<16x16xf32>
    %138 = vector.extract_strided_slice %122 {offsets = [0, 128], sizes = [16, 128], strides = [1, 1]} : vector<16x512xf32> to vector<16x128xf32>
    %139 = vector.extract_strided_slice %104 {offsets = [128, 0], sizes = [128, 16], strides = [1, 1]} : vector<512x16xf32> to vector<128x16xf32>
    %cst_64 = arith.constant dense<0.000000e+00> : vector<16x16xf32>
    %140 = tpu.matmul %138, %139, %cst_64 {dimension_numbers = #tpu.dot_dimension_numbers<[1], [0], [0], [1], [0, 0, 1, 1], [], []>} : vector<16x128xf32>, vector<128x16xf32>, vector<16x16xf32> -> vector<16x16xf32>
    %141 = arith.addf %140, %0 : vector<16x16xf32>
    %cst_65 = arith.constant dense<0xFF800000> : vector<16xf32>
    %142 = vector.multi_reduction <maximumf>, %141, %cst_65 [1] : vector<16x16xf32> to vector<16xf32>
    %143 = vector.shape_cast %142 : vector<16xf32> to vector<16x1xf32>
    %144 = vector.broadcast %143 : vector<16x1xf32> to vector<16x16xf32>
    %145 = arith.subf %141, %144 : vector<16x16xf32>
    %146 = math.exp %145 : vector<16x16xf32>
    %cst_66 = arith.constant dense<0.000000e+00> : vector<16xf32>
    %147 = vector.multi_reduction <add>, %146, %cst_66 [1] : vector<16x16xf32> to vector<16xf32>
    %148 = vector.shape_cast %147 : vector<16xf32> to vector<16x1xf32>
    %cst_67 = arith.constant 1.000000e-30 : f32
    %149 = vector.broadcast %cst_67 : f32 to vector<16x1xf32>
    %150 = arith.maximumf %148, %149 : vector<16x1xf32>
    %151 = vector.broadcast %150 : vector<16x1xf32> to vector<16x16xf32>
    %152 = arith.divf %146, %151 : vector<16x16xf32>
    %153 = vector.extract_strided_slice %122 {offsets = [0, 256], sizes = [16, 128], strides = [1, 1]} : vector<16x512xf32> to vector<16x128xf32>
    %154 = vector.extract_strided_slice %104 {offsets = [256, 0], sizes = [128, 16], strides = [1, 1]} : vector<512x16xf32> to vector<128x16xf32>
    %cst_68 = arith.constant dense<0.000000e+00> : vector<16x16xf32>
    %155 = tpu.matmul %153, %154, %cst_68 {dimension_numbers = #tpu.dot_dimension_numbers<[1], [0], [0], [1], [0, 0, 1, 1], [], []>} : vector<16x128xf32>, vector<128x16xf32>, vector<16x16xf32> -> vector<16x16xf32>
    %156 = arith.addf %155, %0 : vector<16x16xf32>
    %cst_69 = arith.constant dense<0xFF800000> : vector<16xf32>
    %157 = vector.multi_reduction <maximumf>, %156, %cst_69 [1] : vector<16x16xf32> to vector<16xf32>
    %158 = vector.shape_cast %157 : vector<16xf32> to vector<16x1xf32>
    %159 = vector.broadcast %158 : vector<16x1xf32> to vector<16x16xf32>
    %160 = arith.subf %156, %159 : vector<16x16xf32>
    %161 = math.exp %160 : vector<16x16xf32>
    %cst_70 = arith.constant dense<0.000000e+00> : vector<16xf32>
    %162 = vector.multi_reduction <add>, %161, %cst_70 [1] : vector<16x16xf32> to vector<16xf32>
    %163 = vector.shape_cast %162 : vector<16xf32> to vector<16x1xf32>
    %cst_71 = arith.constant 1.000000e-30 : f32
    %164 = vector.broadcast %cst_71 : f32 to vector<16x1xf32>
    %165 = arith.maximumf %163, %164 : vector<16x1xf32>
    %166 = vector.broadcast %165 : vector<16x1xf32> to vector<16x16xf32>
    %167 = arith.divf %161, %166 : vector<16x16xf32>
    %168 = vector.extract_strided_slice %122 {offsets = [0, 384], sizes = [16, 128], strides = [1, 1]} : vector<16x512xf32> to vector<16x128xf32>
    %169 = vector.extract_strided_slice %104 {offsets = [384, 0], sizes = [128, 16], strides = [1, 1]} : vector<512x16xf32> to vector<128x16xf32>
    %cst_72 = arith.constant dense<0.000000e+00> : vector<16x16xf32>
    %170 = tpu.matmul %168, %169, %cst_72 {dimension_numbers = #tpu.dot_dimension_numbers<[1], [0], [0], [1], [0, 0, 1, 1], [], []>} : vector<16x128xf32>, vector<128x16xf32>, vector<16x16xf32> -> vector<16x16xf32>
    %171 = arith.addf %170, %0 : vector<16x16xf32>
    %cst_73 = arith.constant dense<0xFF800000> : vector<16xf32>
    %172 = vector.multi_reduction <maximumf>, %171, %cst_73 [1] : vector<16x16xf32> to vector<16xf32>
    %173 = vector.shape_cast %172 : vector<16xf32> to vector<16x1xf32>
    %174 = vector.broadcast %173 : vector<16x1xf32> to vector<16x16xf32>
    %175 = arith.subf %171, %174 : vector<16x16xf32>
    %176 = math.exp %175 : vector<16x16xf32>
    %cst_74 = arith.constant dense<0.000000e+00> : vector<16xf32>
    %177 = vector.multi_reduction <add>, %176, %cst_74 [1] : vector<16x16xf32> to vector<16xf32>
    %178 = vector.shape_cast %177 : vector<16xf32> to vector<16x1xf32>
    %cst_75 = arith.constant 1.000000e-30 : f32
    %179 = vector.broadcast %cst_75 : f32 to vector<16x1xf32>
    %180 = arith.maximumf %178, %179 : vector<16x1xf32>
    %181 = vector.broadcast %180 : vector<16x1xf32> to vector<16x16xf32>
    %182 = arith.divf %176, %181 : vector<16x16xf32>
    %183 = tpu.concatenate %137, %152, %167, %182 in 1 : vector<16x16xf32>, vector<16x16xf32>, vector<16x16xf32>, vector<16x16xf32> -> vector<16x64xf32>
    %184 = tpu.concatenate %109, %109, %109, %109 in 0 : vector<16x32xf32>, vector<16x32xf32>, vector<16x32xf32>, vector<16x32xf32> -> vector<64x32xf32>
    %185 = arith.mulf %184, %3 : vector<64x32xf32>
    %cst_76 = arith.constant dense<0.000000e+00> : vector<16x32xf32>
    %186 = tpu.matmul %183, %185, %cst_76 {dimension_numbers = #tpu.dot_dimension_numbers<[1], [0], [0], [1], [0, 0, 1, 1], [], []>} : vector<16x64xf32>, vector<64x32xf32>, vector<16x32xf32> -> vector<16x32xf32>
    %187 = vector.broadcast %105 : vector<1x32xf32> to vector<16x32xf32>
    %188 = arith.addf %186, %187 : vector<16x32xf32>
    %cst_77 = arith.constant 0.000000e+00 : f32
    %189 = vector.broadcast %cst_77 : f32 to vector<16x32xf32>
    %190 = arith.cmpf ogt, %188, %189 : vector<16x32xf32>
    %cst_78 = arith.constant 0.000000e+00 : f32
    %191 = vector.broadcast %cst_78 : f32 to vector<16x32xf32>
    %192 = arith.minimumf %188, %191 : vector<16x32xf32>
    %193 = math.exp %192 : vector<16x32xf32>
    %cst_79 = arith.constant 1.000000e+00 : f32
    %194 = vector.broadcast %cst_79 : f32 to vector<16x32xf32>
    %195 = arith.subf %193, %194 : vector<16x32xf32>
    %196 = arith.select %190, %188, %195 : vector<16x32xi1>, vector<16x32xf32>
    %c0_80 = arith.constant 0 : index
    %c0_81 = arith.constant 0 : index
    %197 = vector.load %arg15[%c0_80, %c0_81] : memref<32x16xf32, #tpu.memory_space<vmem>>, vector<32x16xf32>
    %c0_82 = arith.constant 0 : index
    %c0_83 = arith.constant 0 : index
    %198 = vector.load %arg16[%c0_82, %c0_83] : memref<1x16xf32, #tpu.memory_space<vmem>>, vector<1x16xf32>
    %c0_84 = arith.constant 0 : index
    %c0_85 = arith.constant 0 : index
    %199 = vector.load %arg17[%c0_84, %c0_85] : memref<128x16xf32, #tpu.memory_space<vmem>>, vector<128x16xf32>
    %c0_86 = arith.constant 0 : index
    %c0_87 = arith.constant 0 : index
    %200 = vector.load %arg18[%c0_86, %c0_87] : memref<1x8xf32, #tpu.memory_space<vmem>>, vector<1x8xf32>
    %cst_88 = arith.constant dense<0.000000e+00> : vector<16x16xf32>
    %201 = tpu.matmul %196, %197, %cst_88 {dimension_numbers = #tpu.dot_dimension_numbers<[1], [0], [0], [1], [0, 0, 1, 1], [], []>} : vector<16x32xf32>, vector<32x16xf32>, vector<16x16xf32> -> vector<16x16xf32>
    %202 = vector.broadcast %198 : vector<1x16xf32> to vector<16x16xf32>
    %203 = arith.addf %201, %202 : vector<16x16xf32>
    %204 = vector.extract_strided_slice %203 {offsets = [0, 0], sizes = [16, 8], strides = [1, 1]} : vector<16x16xf32> to vector<16x8xf32>
    %205 = vector.extract_strided_slice %203 {offsets = [0, 8], sizes = [16, 8], strides = [1, 1]} : vector<16x16xf32> to vector<16x8xf32>
    %cst_89 = arith.constant dense<0.000000e+00> : vector<16x128xf32>
    %206 = tpu.matmul %205, %4, %cst_89 {dimension_numbers = #tpu.dot_dimension_numbers<[1], [0], [0], [1], [0, 0, 1, 1], [], []>} : vector<16x8xf32>, vector<8x128xf32>, vector<16x128xf32> -> vector<16x128xf32>
    %cst_90 = arith.constant dense<0.000000e+00> : vector<16x128xf32>
    %207 = tpu.matmul %204, %4, %cst_90 {dimension_numbers = #tpu.dot_dimension_numbers<[1], [0], [0], [1], [0, 0, 1, 1], [], []>} : vector<16x8xf32>, vector<8x128xf32>, vector<16x128xf32> -> vector<16x128xf32>
    %208 = arith.mulf %207, %5 : vector<16x128xf32>
    %cst_91 = arith.constant dense<0.000000e+00> : vector<128xf32>
    %209 = vector.multi_reduction <add>, %208, %cst_91 [0] : vector<16x128xf32> to vector<128xf32>
    %210 = vector.shape_cast %209 : vector<128xf32> to vector<1x128xf32>
    %211 = vector.broadcast %210 : vector<1x128xf32> to vector<16x128xf32>
    %212 = arith.addf %206, %211 : vector<16x128xf32>
    %cst_92 = arith.constant 0.000000e+00 : f32
    %213 = vector.broadcast %cst_92 : f32 to vector<16x128xf32>
    %214 = arith.cmpf ogt, %212, %213 : vector<16x128xf32>
    %cst_93 = arith.constant 2.000000e-01 : f32
    %215 = vector.broadcast %cst_93 : f32 to vector<16x128xf32>
    %216 = arith.mulf %215, %212 : vector<16x128xf32>
    %217 = arith.select %214, %212, %216 : vector<16x128xi1>, vector<16x128xf32>
    %cst_94 = arith.constant dense<0.000000e+00> : vector<16x16xf32>
    %218 = tpu.matmul %217, %199, %cst_94 {dimension_numbers = #tpu.dot_dimension_numbers<[1], [0], [0], [1], [0, 0, 1, 1], [], []>} : vector<16x128xf32>, vector<128x16xf32>, vector<16x16xf32> -> vector<16x16xf32>
    %219 = arith.addf %218, %0 : vector<16x16xf32>
    %cst_95 = arith.constant dense<0xFF800000> : vector<16xf32>
    %220 = vector.multi_reduction <maximumf>, %219, %cst_95 [1] : vector<16x16xf32> to vector<16xf32>
    %221 = vector.shape_cast %220 : vector<16xf32> to vector<16x1xf32>
    %222 = vector.broadcast %221 : vector<16x1xf32> to vector<16x16xf32>
    %223 = arith.subf %219, %222 : vector<16x16xf32>
    %224 = math.exp %223 : vector<16x16xf32>
    %cst_96 = arith.constant dense<0.000000e+00> : vector<16xf32>
    %225 = vector.multi_reduction <add>, %224, %cst_96 [1] : vector<16x16xf32> to vector<16xf32>
    %226 = vector.shape_cast %225 : vector<16xf32> to vector<16x1xf32>
    %cst_97 = arith.constant 1.000000e-30 : f32
    %227 = vector.broadcast %cst_97 : f32 to vector<16x1xf32>
    %228 = arith.maximumf %226, %227 : vector<16x1xf32>
    %229 = vector.broadcast %228 : vector<16x1xf32> to vector<16x16xf32>
    %230 = arith.divf %224, %229 : vector<16x16xf32>
    %cst_98 = arith.constant dense<0.000000e+00> : vector<16x8xf32>
    %231 = tpu.matmul %230, %204, %cst_98 {dimension_numbers = #tpu.dot_dimension_numbers<[1], [0], [0], [1], [0, 0, 1, 1], [], []>} : vector<16x16xf32>, vector<16x8xf32>, vector<16x8xf32> -> vector<16x8xf32>
    %232 = vector.broadcast %200 : vector<1x8xf32> to vector<16x8xf32>
    %233 = arith.addf %231, %232 : vector<16x8xf32>
    %c0_99 = arith.constant 0 : index
    %c0_100 = arith.constant 0 : index
    %234 = vector.load %arg19[%c0_99, %c0_100] : memref<8x4xf32, #tpu.memory_space<vmem>>, vector<8x4xf32>
    %cst_101 = arith.constant dense<0.000000e+00> : vector<16x4xf32>
    %235 = tpu.matmul %233, %234, %cst_101 {dimension_numbers = #tpu.dot_dimension_numbers<[1], [0], [0], [1], [0, 0, 1, 1], [], []>} : vector<16x8xf32>, vector<8x4xf32>, vector<16x4xf32> -> vector<16x4xf32>
    %c0_102 = arith.constant 0 : index
    %c0_103 = arith.constant 0 : index
    %236 = vector.load %arg20[%c0_102, %c0_103] : memref<1x4xf32, #tpu.memory_space<vmem>>, vector<1x4xf32>
    %237 = vector.broadcast %236 : vector<1x4xf32> to vector<16x4xf32>
    %238 = arith.addf %235, %237 : vector<16x4xf32>
    %c0_104 = arith.constant 0 : index
    %c0_105 = arith.constant 0 : index
    %239 = vector.load %arg21[%c0_104, %c0_105] : memref<16x4xf32, #tpu.memory_space<vmem>>, vector<16x4xf32>
    tpu.vector_store %arg21[%c0_104, %c0_105], %238 {strides = array<i32>} : memref<16x4xf32, #tpu.memory_space<vmem>>, vector<16x4xf32>,
    return
  }
}

</mosaic_0001>

<llo_original>
// kernel: tpu_custom_call.1
$region0: #{tpu_custom_call.1}
  #allocation0 [shape = 'u32[]', space=smem, size = 0x4, offset = 0x4, fixed_abs, tag = 'smem constant byte address 0x4 - core index']
  #allocation1 [shape = 'u32[144,128]{1,0:T(1,128)}', space=vmem, size = 0x12000, scoped, tag = 'internal scratch']
  %s0 = inlined_call_operand.vmem [shape: f32[16,8], index: 0, kind: input, shape index: {}]
  %s1 = inlined_call_operand.vmem [shape: f32[16,16], index: 1, kind: input, shape index: {}]
  %s2 = inlined_call_operand.vmem [shape: f32[32,512], index: 2, kind: input, shape index: {}]
  %s3 = inlined_call_operand.vmem [shape: f32[16,512], index: 3, kind: input, shape index: {}]
  %s4 = inlined_call_operand.vmem [shape: f32[64,32], index: 4, kind: input, shape index: {}]
  %s5 = inlined_call_operand.vmem [shape: f32[8,128], index: 5, kind: input, shape index: {}]
  %s6 = inlined_call_operand.vmem [shape: f32[16,128], index: 6, kind: input, shape index: {}]
  %s7 = inlined_call_operand.vmem [shape: f32[8,64], index: 7, kind: input, shape index: {}]
  %s8 = inlined_call_operand.vmem [shape: f32[1,64], index: 8, kind: input, shape index: {}]
  %s9 = inlined_call_operand.vmem [shape: f32[512,16], index: 9, kind: input, shape index: {}]
  %s10 = inlined_call_operand.vmem [shape: f32[1,32], index: 10, kind: input, shape index: {}]
  %s11 = inlined_call_operand.vmem [shape: f32[32,64], index: 11, kind: input, shape index: {}]
  %s12 = inlined_call_operand.vmem [shape: f32[1,64], index: 12, kind: input, shape index: {}]
  %s13 = inlined_call_operand.vmem [shape: f32[512,16], index: 13, kind: input, shape index: {}]
  %s14 = inlined_call_operand.vmem [shape: f32[1,32], index: 14, kind: input, shape index: {}]
  %s15 = inlined_call_operand.vmem [shape: f32[32,16], index: 15, kind: input, shape index: {}]
  %s16 = inlined_call_operand.vmem [shape: f32[1,16], index: 16, kind: input, shape index: {}]
  %s17 = inlined_call_operand.vmem [shape: f32[128,16], index: 17, kind: input, shape index: {}]
  %s18 = inlined_call_operand.vmem [shape: f32[1,8], index: 18, kind: input, shape index: {}]
  %s19 = inlined_call_operand.vmem [shape: f32[8,4], index: 19, kind: input, shape index: {}]
  %s20 = inlined_call_operand.vmem [shape: f32[1,4], index: 20, kind: input, shape index: {}]
  %s21 = inlined_call_operand.vmem [shape: f32[16,4], index: 21, kind: output, shape index: {}]
  %s22 = sld [smem:[#allocation0]]
  $region94: #{tpu_custom_call.1} parent=0
    _
  %s24 = ssub.s32 1, %s22
  %s25 = scalar_select 0, %s24, %s22
  // Predicated region
  $region2: #{tpu_custom_call.1} parent=0 // pred_check
    _
  $region3: #{tpu_custom_call.1} parent=0 // pred_check_branch
    %27 = sbr.rel (0) target = $region5
  $region4: #{tpu_custom_call.1} parent=0 // pred_region
    _
  $region5: #{tpu_custom_call.1} parent=0 // pred_fallthru
    _
  // Predicated region
  $region6: #{tpu_custom_call.1} parent=0 // pred_check
    _
  $region7: #{tpu_custom_call.1} parent=0 // pred_check_branch
    %29 = sbr.rel (0) target = $region9
  $region8: #{tpu_custom_call.1} parent=0 // pred_region
    _
  $region9: #{tpu_custom_call.1} parent=0 // pred_fallthru
    _
  // Predicated region
  $region10: #{tpu_custom_call.1} parent=0 // pred_check
    _
  $region11: #{tpu_custom_call.1} parent=0 // pred_check_branch
    %31 = sbr.rel (0) target = $region13
  $region12: #{tpu_custom_call.1} parent=0 // pred_region
    _
  $region13: #{tpu_custom_call.1} parent=0 // pred_fallthru
    _
  // Predicated region
  $region14: #{tpu_custom_call.1} parent=0 // pred_check
    _
  $region15: #{tpu_custom_call.1} parent=0 // pred_check_branch
    %33 = sbr.rel (0) target = $region17
  $region16: #{tpu_custom_call.1} parent=0 // pred_region
    _
  $region17: #{tpu_custom_call.1} parent=0 // pred_fallthru
    _
  // Predicated region
  $region18: #{tpu_custom_call.1} parent=0 // pred_check
    _
  $region19: #{tpu_custom_call.1} parent=0 // pred_check_branch
    %35 = sbr.rel (0) target = $region21
  $region20: #{tpu_custom_call.1} parent=0 // pred_region
    _
  $region21: #{tpu_custom_call.1} parent=0 // pred_fallthru
    _
  // Predicated region
  $region22: #{tpu_custom_call.1} parent=0 // pred_check
    _
  $region23: #{tpu_custom_call.1} parent=0 // pred_check_branch
    %37 = sbr.rel (0) target = $region25
  $region24: #{tpu_custom_call.1} parent=0 // pred_region
    _
  $region25: #{tpu_custom_call.1} parent=0 // pred_fallthru
    _
  // Predicated region
  $region26: #{tpu_custom_call.1} parent=0 // pred_check
    _
  $region27: #{tpu_custom_call.1} parent=0 // pred_check_branch
    %39 = sbr.rel (0) target = $region29
  $region28: #{tpu_custom_call.1} parent=0 // pred_region
    _
  $region29: #{tpu_custom_call.1} parent=0 // pred_fallthru
    _
  // Predicated region
  $region30: #{tpu_custom_call.1} parent=0 // pred_check
    _
  $region31: #{tpu_custom_call.1} parent=0 // pred_check_branch
    %41 = sbr.rel (0) target = $region33
  $region32: #{tpu_custom_call.1} parent=0 // pred_region
    _
  $region33: #{tpu_custom_call.1} parent=0 // pred_fallthru
    _
  // Predicated region
  $region34: #{tpu_custom_call.1} parent=0 // pred_check
    _
  $region35: #{tpu_custom_call.1} parent=0 // pred_check_branch
    %43 = sbr.rel (0) target = $region37
  $region36: #{tpu_custom_call.1} parent=0 // pred_region
    _
  $region37: #{tpu_custom_call.1} parent=0 // pred_fallthru
    _
  // Predicated region
  $region38: #{tpu_custom_call.1} parent=0 // pred_check
    _
  $region39: #{tpu_custom_call.1} parent=0 // pred_check_branch
    %45 = sbr.rel (0) target = $region41
  $region40: #{tpu_custom_call.1} parent=0 // pred_region
    _
  $region41: #{tpu_custom_call.1} parent=0 // pred_fallthru
    _
  // Predicated region
  $region42: #{tpu_custom_call.1} parent=0 // pred_check
    _
  $region43: #{tpu_custom_call.1} parent=0 // pred_check_branch
    %47 = sbr.rel (0) target = $region45
  $region44: #{tpu_custom_call.1} parent=0 // pred_region
    _
  $region45: #{tpu_custom_call.1} parent=0 // pred_fallthru
    _
  // Predicated region
  $region46: #{tpu_custom_call.1} parent=0 // pred_check
    _
  $region47: #{tpu_custom_call.1} parent=0 // pred_check_branch
    %49 = sbr.rel (0) target = $region49
  $region48: #{tpu_custom_call.1} parent=0 // pred_region
    _
  $region49: #{tpu_custom_call.1} parent=0 // pred_fallthru
    _
  // Predicated region
  $region50: #{tpu_custom_call.1} parent=0 // pred_check
    _
  $region51: #{tpu_custom_call.1} parent=0 // pred_check_branch
    %51 = sbr.rel (0) target = $region53
  $region52: #{tpu_custom_call.1} parent=0 // pred_region
    _
  $region53: #{tpu_custom_call.1} parent=0 // pred_fallthru
    _
  // Predicated region
  $region54: #{tpu_custom_call.1} parent=0 // pred_check
    _
  $region55: #{tpu_custom_call.1} parent=0 // pred_check_branch
    %53 = sbr.rel (0) target = $region57
  $region56: #{tpu_custom_call.1} parent=0 // pred_region
    _
  $region57: #{tpu_custom_call.1} parent=0 // pred_fallthru
    _
  // Predicated region
  $region58: #{tpu_custom_call.1} parent=0 // pred_check
    _
  $region59: #{tpu_custom_call.1} parent=0 // pred_check_branch
    %55 = sbr.rel (0) target = $region61
  $region60: #{tpu_custom_call.1} parent=0 // pred_region
    _
  $region61: #{tpu_custom_call.1} parent=0 // pred_fallthru
    _
  // Predicated region
  $region62: #{tpu_custom_call.1} parent=0 // pred_check
    _
  $region63: #{tpu_custom_call.1} parent=0 // pred_check_branch
    %57 = sbr.rel (0) target = $region65
  $region64: #{tpu_custom_call.1} parent=0 // pred_region
    _
  $region65: #{tpu_custom_call.1} parent=0 // pred_fallthru
    _
  // Predicated region
  $region66: #{tpu_custom_call.1} parent=0 // pred_check
    _
  $region67: #{tpu_custom_call.1} parent=0 // pred_check_branch
    %59 = sbr.rel (0) target = $region69
  $region68: #{tpu_custom_call.1} parent=0 // pred_region
    _
  $region69: #{tpu_custom_call.1} parent=0 // pred_fallthru
    _
  // Predicated region
  $region70: #{tpu_custom_call.1} parent=0 // pred_check
    _
  $region71: #{tpu_custom_call.1} parent=0 // pred_check_branch
    %61 = sbr.rel (0) target = $region73
  $region72: #{tpu_custom_call.1} parent=0 // pred_region
    _
  $region73: #{tpu_custom_call.1} parent=0 // pred_fallthru
    _
  // Predicated region
  $region74: #{tpu_custom_call.1} parent=0 // pred_check
    _
  $region75: #{tpu_custom_call.1} parent=0 // pred_check_branch
    %63 = sbr.rel (0) target = $region77
  $region76: #{tpu_custom_call.1} parent=0 // pred_region
    _
  $region77: #{tpu_custom_call.1} parent=0 // pred_fallthru
    _
  // Predicated region
  $region78: #{tpu_custom_call.1} parent=0 // pred_check
    _
  $region79: #{tpu_custom_call.1} parent=0 // pred_check_branch
    %65 = sbr.rel (0) target = $region81
  $region80: #{tpu_custom_call.1} parent=0 // pred_region
    _
  $region81: #{tpu_custom_call.1} parent=0 // pred_fallthru
    _
  // Predicated region
  $region82: #{tpu_custom_call.1} parent=0 // pred_check
    _
  $region83: #{tpu_custom_call.1} parent=0 // pred_check_branch
    %67 = sbr.rel (0) target = $region85
  $region84: #{tpu_custom_call.1} parent=0 // pred_region
    _
  $region85: #{tpu_custom_call.1} parent=0 // pred_fallthru
    _
  %v68 = vld [vmem:[%s1] sm:$0xff]
  %v69 = vld [vmem:[%s1 + $0x8] sm:$0xff]
  %v70 = vld [vmem:[%s2] sm:$0xff]
  %v71 = vld [vmem:[%s2 + $0x8] sm:$0xff]
  %v72 = vld [vmem:[%s2 + $0x10] sm:$0xff]
  %v73 = vld [vmem:[%s2 + $0x18] sm:$0xff]
  %v74 = vld [vmem:[%s2 + $0x20] sm:$0xff]
  %v75 = vld [vmem:[%s2 + $0x28] sm:$0xff]
  %v76 = vld [vmem:[%s2 + $0x30] sm:$0xff]
  %v77 = vld [vmem:[%s2 + $0x38] sm:$0xff]
  %v78 = vld [vmem:[%s2 + $0x40] sm:$0xff]
  %v79 = vld [vmem:[%s2 + $0x48] sm:$0xff]
  %v80 = vld [vmem:[%s2 + $0x50] sm:$0xff]
  %v81 = vld [vmem:[%s2 + $0x58] sm:$0xff]
  %v82 = vld [vmem:[%s2 + $0x60] sm:$0xff]
  %v83 = vld [vmem:[%s2 + $0x68] sm:$0xff]
  %v84 = vld [vmem:[%s2 + $0x70] sm:$0xff]
  %v85 = vld [vmem:[%s2 + $0x78] sm:$0xff]
  %v86 = vld [vmem:[%s3] sm:$0xff]
  %v87 = vld [vmem:[%s3 + $0x8] sm:$0xff]
  %v88 = vld [vmem:[%s3 + $0x10] sm:$0xff]
  %v89 = vld [vmem:[%s3 + $0x18] sm:$0xff]
  %v90 = vld [vmem:[%s3 + $0x20] sm:$0xff]
  %v91 = vld [vmem:[%s3 + $0x28] sm:$0xff]
  %v92 = vld [vmem:[%s3 + $0x30] sm:$0xff]
  %v93 = vld [vmem:[%s3 + $0x38] sm:$0xff]
  %v94 = vld [vmem:[%s4] sm:$0xff]
  %v95 = vld [vmem:[%s4 + $0x8] sm:$0xff]
  %v96 = vld [vmem:[%s4 + $0x10] sm:$0xff]
  %v97 = vld [vmem:[%s4 + $0x18] sm:$0xff]
  %v98 = vld [vmem:[%s4 + $0x20] sm:$0xff]
  %v99 = vld [vmem:[%s4 + $0x28] sm:$0xff]
  %v100 = vld [vmem:[%s4 + $0x30] sm:$0xff]
  %v101 = vld [vmem:[%s4 + $0x38] sm:$0xff]
  %v102 = vld [vmem:[%s5] sm:$0xff]
  %v103 = vld [vmem:[%s6] sm:$0xff]
  %v104 = vld [vmem:[%s6 + $0x8] sm:$0xff]
  %v105 = vld [vmem:[%s0] sm:$0xff]
  %v106 = vld [vmem:[%s0 + $0x8] sm:$0xff]
  %v107 = vld [vmem:[%s7] sm:$0xff]
  %v108 = vld [vmem:[%s8] sm:$0x1]
  %v109 = vld [vmem:[%s9] sm:$0xff]
  %v110 = vld [vmem:[%s9 + $0x8] sm:$0xff]
  %v111 = vld [vmem:[%s9 + $0x10] sm:$0xff]
  %v112 = vld [vmem:[%s9 + $0x18] sm:$0xff]
  %v113 = vld [vmem:[%s9 + $0x20] sm:$0xff]
  %v114 = vld [vmem:[%s9 + $0x28] sm:$0xff]
  %v115 = vld [vmem:[%s9 + $0x30] sm:$0xff]
  %v116 = vld [vmem:[%s9 + $0x38] sm:$0xff]
  %v117 = vld [vmem:[%s9 + $0x40] sm:$0xff]
  %v118 = vld [vmem:[%s9 + $0x48] sm:$0xff]
  %v119 = vld [vmem:[%s9 + $0x50] sm:$0xff]
  %v120 = vld [vmem:[%s9 + $0x58] sm:$0xff]
  %v121 = vld [vmem:[%s9 + $0x60] sm:$0xff]
  %v122 = vld [vmem:[%s9 + $0x68] sm:$0xff]
  %v123 = vld [vmem:[%s9 + $0x70] sm:$0xff]
  %v124 = vld [vmem:[%s9 + $0x78] sm:$0xff]
  %v125 = vld [vmem:[%s9 + $0x80] sm:$0xff]
  %v126 = vld [vmem:[%s9 + $0x88] sm:$0xff]
  %v127 = vld [vmem:[%s9 + $0x90] sm:$0xff]
  %v128 = vld [vmem:[%s9 + $0x98] sm:$0xff]
  %v129 = vld [vmem:[%s9 + $0xa0] sm:$0xff]
  %v130 = vld [vmem:[%s9 + $0xa8] sm:$0xff]
  %v131 = vld [vmem:[%s9 + $0xb0] sm:$0xff]
  %v132 = vld [vmem:[%s9 + $0xb8] sm:$0xff]
  %v133 = vld [vmem:[%s9 + $0xc0] sm:$0xff]
  %v134 = vld [vmem:[%s9 + $0xc8] sm:$0xff]
  %v135 = vld [vmem:[%s9 + $0xd0] sm:$0xff]
  %v136 = vld [vmem:[%s9 + $0xd8] sm:$0xff]
  %v137 = vld [vmem:[%s9 + $0xe0] sm:$0xff]
  %v138 = vld [vmem:[%s9 + $0xe8] sm:$0xff]
  %v139 = vld [vmem:[%s9 + $0xf0] sm:$0xff]
  %v140 = vld [vmem:[%s9 + $0xf8] sm:$0xff]
  %v141 = vld [vmem:[%s9 + $0x100] sm:$0xff]
  %v142 = vld [vmem:[%s9 + $0x108] sm:$0xff]
  %v143 = vld [vmem:[%s9 + $0x110] sm:$0xff]
  %v144 = vld [vmem:[%s9 + $0x118] sm:$0xff]
  %v145 = vld [vmem:[%s9 + $0x120] sm:$0xff]
  %v146 = vld [vmem:[%s9 + $0x128] sm:$0xff]
  %v147 = vld [vmem:[%s9 + $0x130] sm:$0xff]
  %v148 = vld [vmem:[%s9 + $0x138] sm:$0xff]
  %v149 = vld [vmem:[%s9 + $0x140] sm:$0xff]
  %v150 = vld [vmem:[%s9 + $0x148] sm:$0xff]
  %v151 = vld [vmem:[%s9 + $0x150] sm:$0xff]
  %v152 = vld [vmem:[%s9 + $0x158] sm:$0xff]
  %v153 = vld [vmem:[%s9 + $0x160] sm:$0xff]
  %v154 = vld [vmem:[%s9 + $0x168] sm:$0xff]
  %v155 = vld [vmem:[%s9 + $0x170] sm:$0xff]
  %v156 = vld [vmem:[%s9 + $0x178] sm:$0xff]
  %v157 = vld [vmem:[%s9 + $0x180] sm:$0xff]
  %v158 = vld [vmem:[%s9 + $0x188] sm:$0xff]
  %v159 = vld [vmem:[%s9 + $0x190] sm:$0xff]
  %v160 = vld [vmem:[%s9 + $0x198] sm:$0xff]
  %v161 = vld [vmem:[%s9 + $0x1a0] sm:$0xff]
  %v162 = vld [vmem:[%s9 + $0x1a8] sm:$0xff]
  %v163 = vld [vmem:[%s9 + $0x1b0] sm:$0xff]
  %v164 = vld [vmem:[%s9 + $0x1b8] sm:$0xff]
  %v165 = vld [vmem:[%s9 + $0x1c0] sm:$0xff]
  %v166 = vld [vmem:[%s9 + $0x1c8] sm:$0xff]
  %v167 = vld [vmem:[%s9 + $0x1d0] sm:$0xff]
  %v168 = vld [vmem:[%s9 + $0x1d8] sm:$0xff]
  %v169 = vld [vmem:[%s9 + $0x1e0] sm:$0xff]
  %v170 = vld [vmem:[%s9 + $0x1e8] sm:$0xff]
  %v171 = vld [vmem:[%s9 + $0x1f0] sm:$0xff]
  %v172 = vld [vmem:[%s9 + $0x1f8] sm:$0xff]
  %v173 = vld [vmem:[%s10] sm:$0x1]
  %v175 = vlaneseq
  %v176 = vshrl.u32 %v175, 7
  %v177 = vsub.s32 0, %v176
  %v178 = vrot.slane %v108, %v177
  %vm180 = vcmask 64512
  %v182 = vsel %vm180, %v105, 0
  %v185 = vsel %vm180, %v106, 0
  %187 = vmatprep.subr.mxu0 0.0
  %188 = vmatpush1.msra.mxu0 0.0
  %189 = vmatprep.subr.mxu0 0.0
  %190 = vmatpush1.msra.mxu0 0.0
  %191 = vmatprep.subr.mxu0 0.0
  %192 = vmatpush1.msra.mxu0 0.0
  %193 = vmatprep.subr.mxu0 0.0
  %194 = vmatpush1.msra.mxu0 0.0
  %195 = vmatprep.subr.mxu0 0.0
  %196 = vmatpush1.msra.mxu0 0.0
  %197 = vmatprep.subr.mxu0 0.0
  %198 = vmatpush1.msra.mxu0 0.0
  %199 = vmatprep.subr.mxu0 0.0
  %200 = vmatpush1.msra.mxu0 0.0
  %201 = vmatprep.subr.mxu0 0.0
  %202 = vmatpush1.msra.mxu0 0.0
  %203 = vmatprep.subr.mxu0 0.0
  %204 = vmatpush1.msra.mxu0 0.0
  %205 = vmatprep.subr.mxu0 0.0
  %206 = vmatpush1.msra.mxu0 0.0
  %207 = vmatprep.subr.mxu0 0.0
  %208 = vmatpush1.msra.mxu0 0.0
  %209 = vmatprep.subr.mxu0 0.0
  %210 = vmatpush1.msra.mxu0 0.0
  %211 = vmatprep.subr.mxu0 0.0
  %212 = vmatpush1.msra.mxu0 0.0
  %213 = vmatprep.subr.mxu0 0.0
  %214 = vmatpush1.msra.mxu0 0.0
  %215 = vmatprep.subr.mxu0 0.0
  %216 = vmatpush1.msra.mxu0 0.0
  %217 = vmatprep.subr.mxu0 0.0
  %218 = vmatpush1.msra.mxu0 %v107
  %219 = vmatprep.subr.mxu0 0.0
  %220 = vmatpush2.msra.mxu0 0.0
  %221 = vmatprep.subr.mxu0 0.0
  %222 = vmatpush2.msra.mxu0 0.0
  %223 = vmatprep.subr.mxu0 0.0
  %224 = vmatpush2.msra.mxu0 0.0
  %225 = vmatprep.subr.mxu0 0.0
  %226 = vmatpush2.msra.mxu0 0.0
  %227 = vmatprep.subr.mxu0 0.0
  %228 = vmatpush2.msra.mxu0 0.0
  %229 = vmatprep.subr.mxu0 0.0
  %230 = vmatpush2.msra.mxu0 0.0
  %231 = vmatprep.subr.mxu0 0.0
  %232 = vmatpush2.msra.mxu0 0.0
  %233 = vmatprep.subr.mxu0 0.0
  %234 = vmatpush2.msra.mxu0 0.0
  %235 = vmatprep.subr.mxu0 0.0
  %236 = vmatpush2.msra.mxu0 0.0
  %237 = vmatprep.subr.mxu0 0.0
  %238 = vmatpush2.msra.mxu0 0.0
  %239 = vmatprep.subr.mxu0 0.0
  %240 = vmatpush2.msra.mxu0 0.0
  %241 = vmatprep.subr.mxu0 0.0
  %242 = vmatpush2.msra.mxu0 0.0
  %243 = vmatprep.subr.mxu0 0.0
  %244 = vmatpush2.msra.mxu0 0.0
  %245 = vmatprep.subr.mxu0 0.0
  %246 = vmatpush2.msra.mxu0 0.0
  %247 = vmatprep.subr.mxu0 0.0
  %248 = vmatpush2.msra.mxu0 0.0
  %249 = vmatprep.subr.mxu0 0.0
  %250 = vmatpush2.msra.mxu0 0.0
  %251 = vmatprep.mubr.f32.mxu0 0.0
  %252 = vmatmul.mubr.f32.gmra.mxu0 %v182
  %v253 = vpop.f32.mrf.mxu0
  %v254 = vadd.f32 %v178, %v253
  %v255 = vpop.f32.mrf.mxu0
  %256 = vmatprep.mubr.f32.mxu0 0.0
  %257 = vmatmul.mubr.f32.gmra.mxu0 %v185
  %v258 = vpop.f32.mrf.mxu0
  %v259 = vadd.f32 %v178, %v258
  %v260 = vpop.f32.mrf.mxu0
  %261 = vdwg.mxu0
  %vm262 = vcmask 261120
  %v264 = vsel %vm262, %v254, 0
  %v267 = vsel %vm262, %v259, 0
  %269 = vmatprep.subr.mxu0 0.0
  %270 = vmatpush1.msra.mxu0 0.0
  %271 = vmatprep.subr.mxu0 0.0
  %272 = vmatpush1.msra.mxu0 0.0
  %273 = vmatprep.subr.mxu0 0.0
  %274 = vmatpush1.msra.mxu0 0.0
  %275 = vmatprep.subr.mxu0 0.0
  %276 = vmatpush1.msra.mxu0 0.0
  %277 = vmatprep.subr.mxu0 0.0
  %278 = vmatpush1.msra.mxu0 0.0
  %279 = vmatprep.subr.mxu0 0.0
  %280 = vmatpush1.msra.mxu0 0.0
  %281 = vmatprep.subr.mxu0 0.0
  %282 = vmatpush1.msra.mxu0 0.0
  %283 = vmatprep.subr.mxu0 0.0
  %284 = vmatpush1.msra.mxu0 0.0
  %285 = vmatprep.subr.mxu0 0.0
  %286 = vmatpush1.msra.mxu0 0.0
  %287 = vmatprep.subr.mxu0 0.0
  %288 = vmatpush1.msra.mxu0 0.0
  %289 = vmatprep.subr.mxu0 0.0
  %290 = vmatpush1.msra.mxu0 0.0
  %291 = vmatprep.subr.mxu0 0.0
  %292 = vmatpush1.msra.mxu0 0.0
  %293 = vmatprep.subr.mxu0 %v83
  %294 = vmatpush1.msra.mxu0 %v82
  %295 = vmatprep.subr.mxu0 %v79
  %296 = vmatpush1.msra.mxu0 %v78
  %297 = vmatprep.subr.mxu0 %v75
  %298 = vmatpush1.msra.mxu0 %v74
  %299 = vmatprep.subr.mxu0 %v71
  %300 = vmatpush1.msra.mxu0 %v70
  %301 = vmatprep.subr.mxu0 0.0
  %302 = vmatpush2.msra.mxu0 0.0
  %303 = vmatprep.subr.mxu0 0.0
  %304 = vmatpush2.msra.mxu0 0.0
  %305 = vmatprep.subr.mxu0 0.0
  %306 = vmatpush2.msra.mxu0 0.0
  %307 = vmatprep.subr.mxu0 0.0
  %308 = vmatpush2.msra.mxu0 0.0
  %309 = vmatprep.subr.mxu0 0.0
  %310 = vmatpush2.msra.mxu0 0.0
  %311 = vmatprep.subr.mxu0 0.0
  %312 = vmatpush2.msra.mxu0 0.0
  %313 = vmatprep.subr.mxu0 0.0
  %314 = vmatpush2.msra.mxu0 0.0
  %315 = vmatprep.subr.mxu0 0.0
  %316 = vmatpush2.msra.mxu0 0.0
  %317 = vmatprep.subr.mxu0 0.0
  %318 = vmatpush2.msra.mxu0 0.0
  %319 = vmatprep.subr.mxu0 0.0
  %320 = vmatpush2.msra.mxu0 0.0
  %321 = vmatprep.subr.mxu0 0.0
  %322 = vmatpush2.msra.mxu0 0.0
  %323 = vmatprep.subr.mxu0 0.0
  %324 = vmatpush2.msra.mxu0 0.0
  %325 = vmatprep.subr.mxu0 0.0
  %326 = vmatpush2.msra.mxu0 0.0
  %327 = vmatprep.subr.mxu0 0.0
  %328 = vmatpush2.msra.mxu0 0.0
  %329 = vmatprep.subr.mxu0 0.0
  %330 = vmatpush2.msra.mxu0 0.0
  %331 = vmatprep.subr.mxu0 0.0
  %332 = vmatpush2.msra.mxu0 0.0
  %333 = vmatprep.mubr.f32.mxu0 0.0
  %334 = vmatmul.mubr.f32.gmra.mxu0 %v264
  %v335 = vpop.f32.mrf.mxu0
  %v336 = vadd.f32 0.0, %v335
  %v337 = vpop.f32.mrf.mxu0
  %v338 = vadd.f32 0.0, %v337
  %339 = vmatprep.mubr.f32.mxu0 0.0
  %340 = vmatmul.mubr.f32.gmra.mxu0 %v267
  %v341 = vpop.f32.mrf.mxu0
  %v342 = vadd.f32 0.0, %v341
  %v343 = vpop.f32.mrf.mxu0
  %v344 = vadd.f32 0.0, %v343
  %345 = vdwg.mxu0
  %346 = vmatprep.subr.mxu0 0.0
  %347 = vmatpush1.msra.mxu0 0.0
  %348 = vmatprep.subr.mxu0 0.0
  %349 = vmatpush1.msra.mxu0 0.0
  %350 = vmatprep.subr.mxu0 0.0
  %351 = vmatpush1.msra.mxu0 0.0
  %352 = vmatprep.subr.mxu0 0.0
  %353 = vmatpush1.msra.mxu0 0.0
  %354 = vmatprep.subr.mxu0 0.0
  %355 = vmatpush1.msra.mxu0 0.0
  %356 = vmatprep.subr.mxu0 0.0
  %357 = vmatpush1.msra.mxu0 0.0
  %358 = vmatprep.subr.mxu0 0.0
  %359 = vmatpush1.msra.mxu0 0.0
  %360 = vmatprep.subr.mxu0 0.0
  %361 = vmatpush1.msra.mxu0 0.0
  %362 = vmatprep.subr.mxu0 0.0
  %363 = vmatpush1.msra.mxu0 0.0
  %364 = vmatprep.subr.mxu0 0.0
  %365 = vmatpush1.msra.mxu0 0.0
  %366 = vmatprep.subr.mxu0 0.0
  %367 = vmatpush1.msra.mxu0 0.0
  %368 = vmatprep.subr.mxu0 0.0
  %369 = vmatpush1.msra.mxu0 0.0
  %370 = vmatprep.subr.mxu0 %v85
  %371 = vmatpush1.msra.mxu0 %v84
  %372 = vmatprep.subr.mxu0 %v81
  %373 = vmatpush1.msra.mxu0 %v80
  %374 = vmatprep.subr.mxu0 %v77
  %375 = vmatpush1.msra.mxu0 %v76
  %376 = vmatprep.subr.mxu0 %v73
  %377 = vmatpush1.msra.mxu0 %v72
  %378 = vmatprep.subr.mxu0 0.0
  %379 = vmatpush2.msra.mxu0 0.0
  %380 = vmatprep.subr.mxu0 0.0
  %381 = vmatpush2.msra.mxu0 0.0
  %382 = vmatprep.subr.mxu0 0.0
  %383 = vmatpush2.msra.mxu0 0.0
  %384 = vmatprep.subr.mxu0 0.0
  %385 = vmatpush2.msra.mxu0 0.0
  %386 = vmatprep.subr.mxu0 0.0
  %387 = vmatpush2.msra.mxu0 0.0
  %388 = vmatprep.subr.mxu0 0.0
  %389 = vmatpush2.msra.mxu0 0.0
  %390 = vmatprep.subr.mxu0 0.0
  %391 = vmatpush2.msra.mxu0 0.0
  %392 = vmatprep.subr.mxu0 0.0
  %393 = vmatpush2.msra.mxu0 0.0
  %394 = vmatprep.subr.mxu0 0.0
  %395 = vmatpush2.msra.mxu0 0.0
  %396 = vmatprep.subr.mxu0 0.0
  %397 = vmatpush2.msra.mxu0 0.0
  %398 = vmatprep.subr.mxu0 0.0
  %399 = vmatpush2.msra.mxu0 0.0
  %400 = vmatprep.subr.mxu0 0.0
  %401 = vmatpush2.msra.mxu0 0.0
  %402 = vmatprep.subr.mxu0 0.0
  %403 = vmatpush2.msra.mxu0 0.0
  %404 = vmatprep.subr.mxu0 0.0
  %405 = vmatpush2.msra.mxu0 0.0
  %406 = vmatprep.subr.mxu0 0.0
  %407 = vmatpush2.msra.mxu0 0.0
  %408 = vmatprep.subr.mxu0 0.0
  %409 = vmatpush2.msra.mxu0 0.0
  %410 = vmatprep.mubr.f32.mxu0 0.0
  %411 = vmatmul.mubr.f32.gmra.mxu0 %v264
  %v412 = vpop.f32.mrf.mxu0
  %v413 = vadd.f32 0.0, %v412
  %v414 = vpop.f32.mrf.mxu0
  %v415 = vadd.f32 0.0, %v414
  %416 = vmatprep.mubr.f32.mxu0 0.0
  %417 = vmatmul.mubr.f32.gmra.mxu0 %v267
  %v418 = vpop.f32.mrf.mxu0
  %v419 = vadd.f32 0.0, %v418
  %v420 = vpop.f32.mrf.mxu0
  %v421 = vadd.f32 0.0, %v420
  %422 = vdwg.mxu0
  %v423 = vmul.f32 %v336, %v86
  %v424 = vmul.f32 %v338, %v87
  %v425 = vmul.f32 %v413, %v88
  %v426 = vmul.f32 %v415, %v89
  %v427 = vmul.f32 %v342, %v90
  %v428 = vmul.f32 %v344, %v91
  %v429 = vmul.f32 %v419, %v92
  %v430 = vmul.f32 %v421, %v93
  %v431 = vadd.f32 %v423, %v427
  %v432 = vrot.slane %v431, 4
  %v433 = vadd.f32 %v431, %v432
  %v434 = vrot.slane %v433, 2
  %v435 = vadd.f32 %v433, %v434
  %v436 = vrot.slane %v435, 1
  %v437 = vadd.f32 %v435, %v436
  %v438 = vadd.f32 %v424, %v428
  %v439 = vrot.slane %v438, 4
  %v440 = vadd.f32 %v438, %v439
  %v441 = vrot.slane %v440, 2
  %v442 = vadd.f32 %v440, %v441
  %v443 = vrot.slane %v442, 1
  %v444 = vadd.f32 %v442, %v443
  %v445 = vadd.f32 %v425, %v429
  %v446 = vrot.slane %v445, 4
  %v447 = vadd.f32 %v445, %v446
  %v448 = vrot.slane %v447, 2
  %v449 = vadd.f32 %v447, %v448
  %v450 = vrot.slane %v449, 1
  %v451 = vadd.f32 %v449, %v450
  %v452 = vadd.f32 %v426, %v430
  %v453 = vrot.slane %v452, 4
  %v454 = vadd.f32 %v452, %v453
  %v455 = vrot.slane %v454, 2
  %v456 = vadd.f32 %v454, %v455
  %v457 = vrot.slane %v456, 1
  %v458 = vadd.f32 %v456, %v457
  %459 = vrot.lane.b32.xlu0 %v254, 96
  %v460 = vpop.permute.xlu0 %459
  %461 = vrot.lane.b32.xlu0 %v259, 96
  %v462 = vpop.permute.xlu0 %461
  %v463 = vsel %vm262, %v460, 0
  %v465 = vsel %vm262, %v462, 0
  %467 = vmatprep.subr.mxu0 0.0
  %468 = vmatpush1.msra.mxu0 0.0
  %469 = vmatprep.subr.mxu0 0.0
  %470 = vmatpush1.msra.mxu0 0.0
  %471 = vmatprep.subr.mxu0 0.0
  %472 = vmatpush1.msra.mxu0 0.0
  %473 = vmatprep.subr.mxu0 0.0
  %474 = vmatpush1.msra.mxu0 0.0
  %475 = vmatprep.subr.mxu0 0.0
  %476 = vmatpush1.msra.mxu0 0.0
  %477 = vmatprep.subr.mxu0 0.0
  %478 = vmatpush1.msra.mxu0 0.0
  %479 = vmatprep.subr.mxu0 0.0
  %480 = vmatpush1.msra.mxu0 0.0
  %481 = vmatprep.subr.mxu0 0.0
  %482 = vmatpush1.msra.mxu0 0.0
  %483 = vmatprep.subr.mxu0 0.0
  %484 = vmatpush1.msra.mxu0 0.0
  %485 = vmatprep.subr.mxu0 0.0
  %486 = vmatpush1.msra.mxu0 0.0
  %487 = vmatprep.subr.mxu0 0.0
  %488 = vmatpush1.msra.mxu0 0.0
  %489 = vmatprep.subr.mxu0 0.0
  %490 = vmatpush1.msra.mxu0 0.0
  %491 = vmatprep.subr.mxu0 %v83
  %492 = vmatpush1.msra.mxu0 %v82
  %493 = vmatprep.subr.mxu0 %v79
  %494 = vmatpush1.msra.mxu0 %v78
  %495 = vmatprep.subr.mxu0 %v75
  %496 = vmatpush1.msra.mxu0 %v74
  %497 = vmatprep.subr.mxu0 %v71
  %498 = vmatpush1.msra.mxu0 %v70
  %499 = vmatprep.subr.mxu0 0.0
  %500 = vmatpush2.msra.mxu0 0.0
  %501 = vmatprep.subr.mxu0 0.0
  %502 = vmatpush2.msra.mxu0 0.0
  %503 = vmatprep.subr.mxu0 0.0
  %504 = vmatpush2.msra.mxu0 0.0
  %505 = vmatprep.subr.mxu0 0.0
  %506 = vmatpush2.msra.mxu0 0.0
  %507 = vmatprep.subr.mxu0 0.0
  %508 = vmatpush2.msra.mxu0 0.0
  %509 = vmatprep.subr.mxu0 0.0
  %510 = vmatpush2.msra.mxu0 0.0
  %511 = vmatprep.subr.mxu0 0.0
  %512 = vmatpush2.msra.mxu0 0.0
  %513 = vmatprep.subr.mxu0 0.0
  %514 = vmatpush2.msra.mxu0 0.0
  %515 = vmatprep.subr.mxu0 0.0
  %516 = vmatpush2.msra.mxu0 0.0
  %517 = vmatprep.subr.mxu0 0.0
  %518 = vmatpush2.msra.mxu0 0.0
  %519 = vmatprep.subr.mxu0 0.0
  %520 = vmatpush2.msra.mxu0 0.0
  %521 = vmatprep.subr.mxu0 0.0
  %522 = vmatpush2.msra.mxu0 0.0
  %523 = vmatprep.subr.mxu0 0.0
  %524 = vmatpush2.msra.mxu0 0.0
  %525 = vmatprep.subr.mxu0 0.0
  %526 = vmatpush2.msra.mxu0 0.0
  %527 = vmatprep.subr.mxu0 0.0
  %528 = vmatpush2.msra.mxu0 0.0
  %529 = vmatprep.subr.mxu0 0.0
  %530 = vmatpush2.msra.mxu0 0.0
  %531 = vmatprep.mubr.f32.mxu0 0.0
  %532 = vmatmul.mubr.f32.gmra.mxu0 %v463
  %v533 = vpop.f32.mrf.mxu0
  %v534 = vadd.f32 %v437, %v533
  %v535 = vpop.f32.mrf.mxu0
  %v536 = vadd.f32 %v444, %v535
  %537 = vmatprep.mubr.f32.mxu0 0.0
  %538 = vmatmul.mubr.f32.gmra.mxu0 %v465
  %v539 = vpop.f32.mrf.mxu0
  %v540 = vadd.f32 %v437, %v539
  %v541 = vpop.f32.mrf.mxu0
  %v542 = vadd.f32 %v444, %v541
  %543 = vdwg.mxu0
  %544 = vmatprep.subr.mxu0 0.0
  %545 = vmatpush1.msra.mxu0 0.0
  %546 = vmatprep.subr.mxu0 0.0
  %547 = vmatpush1.msra.mxu0 0.0
  %548 = vmatprep.subr.mxu0 0.0
  %549 = vmatpush1.msra.mxu0 0.0
  %550 = vmatprep.subr.mxu0 0.0
  %551 = vmatpush1.msra.mxu0 0.0
  %552 = vmatprep.subr.mxu0 0.0
  %553 = vmatpush1.msra.mxu0 0.0
  %554 = vmatprep.subr.mxu0 0.0
  %555 = vmatpush1.msra.mxu0 0.0
  %556 = vmatprep.subr.mxu0 0.0
  %557 = vmatpush1.msra.mxu0 0.0
  %558 = vmatprep.subr.mxu0 0.0
  %559 = vmatpush1.msra.mxu0 0.0
  %560 = vmatprep.subr.mxu0 0.0
  %561 = vmatpush1.msra.mxu0 0.0
  %562 = vmatprep.subr.mxu0 0.0
  %563 = vmatpush1.msra.mxu0 0.0
  %564 = vmatprep.subr.mxu0 0.0
  %565 = vmatpush1.msra.mxu0 0.0
  %566 = vmatprep.subr.mxu0 0.0
  %567 = vmatpush1.msra.mxu0 0.0
  %568 = vmatprep.subr.mxu0 %v85
  %569 = vmatpush1.msra.mxu0 %v84
  %570 = vmatprep.subr.mxu0 %v81
  %571 = vmatpush1.msra.mxu0 %v80
  %572 = vmatprep.subr.mxu0 %v77
  %573 = vmatpush1.msra.mxu0 %v76
  %574 = vmatprep.subr.mxu0 %v73
  %575 = vmatpush1.msra.mxu0 %v72
  %576 = vmatprep.subr.mxu0 0.0
  %577 = vmatpush2.msra.mxu0 0.0
  %578 = vmatprep.subr.mxu0 0.0
  %579 = vmatpush2.msra.mxu0 0.0
  %580 = vmatprep.subr.mxu0 0.0
  %581 = vmatpush2.msra.mxu0 0.0
  %582 = vmatprep.subr.mxu0 0.0
  %583 = vmatpush2.msra.mxu0 0.0
  %584 = vmatprep.subr.mxu0 0.0
  %585 = vmatpush2.msra.mxu0 0.0
  %586 = vmatprep.subr.mxu0 0.0
  %587 = vmatpush2.msra.mxu0 0.0
  %588 = vmatprep.subr.mxu0 0.0
  %589 = vmatpush2.msra.mxu0 0.0
  %590 = vmatprep.subr.mxu0 0.0
  %591 = vmatpush2.msra.mxu0 0.0
  %592 = vmatprep.subr.mxu0 0.0
  %593 = vmatpush2.msra.mxu0 0.0
  %594 = vmatprep.subr.mxu0 0.0
  %595 = vmatpush2.msra.mxu0 0.0
  %596 = vmatprep.subr.mxu0 0.0
  %597 = vmatpush2.msra.mxu0 0.0
  %598 = vmatprep.subr.mxu0 0.0
  %599 = vmatpush2.msra.mxu0 0.0
  %600 = vmatprep.subr.mxu0 0.0
  %601 = vmatpush2.msra.mxu0 0.0
  %602 = vmatprep.subr.mxu0 0.0
  %603 = vmatpush2.msra.mxu0 0.0
  %604 = vmatprep.subr.mxu0 0.0
  %605 = vmatpush2.msra.mxu0 0.0
  %606 = vmatprep.subr.mxu0 0.0
  %607 = vmatpush2.msra.mxu0 0.0
  %608 = vmatprep.mubr.f32.mxu0 0.0
  %609 = vmatmul.mubr.f32.gmra.mxu0 %v463
  %v610 = vpop.f32.mrf.mxu0
  %v611 = vadd.f32 %v451, %v610
  %v612 = vpop.f32.mrf.mxu0
  %v613 = vadd.f32 %v458, %v612
  %614 = vmatprep.mubr.f32.mxu0 0.0
  %615 = vmatmul.mubr.f32.gmra.mxu0 %v465
  %v616 = vpop.f32.mrf.mxu0
  %v617 = vadd.f32 %v451, %v616
  %v618 = vpop.f32.mrf.mxu0
  %v619 = vadd.f32 %v458, %v618
  %620 = vdwg.mxu0
  %vm621 = vcmp.gt.f32.partialorder %v534, 0.0
  %vm622 = vcmp.gt.f32.partialorder %v536, 0.0
  %vm623 = vcmp.gt.f32.partialorder %v611, 0.0
  %vm624 = vcmp.gt.f32.partialorder %v613, 0.0
  %vm625 = vcmp.gt.f32.partialorder %v540, 0.0
  %vm626 = vcmp.gt.f32.partialorder %v542, 0.0
  %vm627 = vcmp.gt.f32.partialorder %v617, 0.0
  %vm628 = vcmp.gt.f32.partialorder %v619, 0.0
  %v629 = vmul.f32 %v534, 0.2
  %v630 = vmul.f32 %v536, 0.2
  %v631 = vmul.f32 %v611, 0.2
  %v632 = vmul.f32 %v613, 0.2
  %v633 = vmul.f32 %v540, 0.2
  %v634 = vmul.f32 %v542, 0.2
  %v635 = vmul.f32 %v617, 0.2
  %v636 = vmul.f32 %v619, 0.2
  %v637 = vsel %vm621, %v534, %v629
  %v638 = vsel %vm622, %v536, %v630
  %v639 = vsel %vm623, %v611, %v631
  %v640 = vsel %vm624, %v613, %v632
  %v641 = vsel %vm625, %v540, %v633
  %v642 = vsel %vm626, %v542, %v634
  %v643 = vsel %vm627, %v617, %v635
  %v644 = vsel %vm628, %v619, %v636
  %645 = vmatprep.subr.mxu0 0.0
  %646 = vmatpush1.msra.mxu0 %v124
  %647 = vmatprep.subr.mxu0 0.0
  %648 = vmatpush1.msra.mxu0 %v123
  %649 = vmatprep.subr.mxu0 0.0
  %650 = vmatpush1.msra.mxu0 %v122
  %651 = vmatprep.subr.mxu0 0.0
  %652 = vmatpush1.msra.mxu0 %v121
  %653 = vmatprep.subr.mxu0 0.0
  %654 = vmatpush1.msra.mxu0 %v120
  %655 = vmatprep.subr.mxu0 0.0
  %656 = vmatpush1.msra.mxu0 %v119
  %657 = vmatprep.subr.mxu0 0.0
  %658 = vmatpush1.msra.mxu0 %v118
  %659 = vmatprep.subr.mxu0 0.0
  %660 = vmatpush1.msra.mxu0 %v117
  %661 = vmatprep.subr.mxu0 0.0
  %662 = vmatpush1.msra.mxu0 %v116
  %663 = vmatprep.subr.mxu0 0.0
  %664 = vmatpush1.msra.mxu0 %v115
  %665 = vmatprep.subr.mxu0 0.0
  %666 = vmatpush1.msra.mxu0 %v114
  %667 = vmatprep.subr.mxu0 0.0
  %668 = vmatpush1.msra.mxu0 %v113
  %669 = vmatprep.subr.mxu0 0.0
  %670 = vmatpush1.msra.mxu0 %v112
  %671 = vmatprep.subr.mxu0 0.0
  %672 = vmatpush1.msra.mxu0 %v111
  %673 = vmatprep.subr.mxu0 0.0
  %674 = vmatpush1.msra.mxu0 %v110
  %675 = vmatprep.subr.mxu0 0.0
  %676 = vmatpush1.msra.mxu0 %v109
  %677 = vmatprep.subr.mxu0 0.0
  %678 = vmatpush2.msra.mxu0 0.0
  %679 = vmatprep.subr.mxu0 0.0
  %680 = vmatpush2.msra.mxu0 0.0
  %681 = vmatprep.subr.mxu0 0.0
  %682 = vmatpush2.msra.mxu0 0.0
  %683 = vmatprep.subr.mxu0 0.0
  %684 = vmatpush2.msra.mxu0 0.0
  %685 = vmatprep.subr.mxu0 0.0
  %686 = vmatpush2.msra.mxu0 0.0
  %687 = vmatprep.subr.mxu0 0.0
  %688 = vmatpush2.msra.mxu0 0.0
  %689 = vmatprep.subr.mxu0 0.0
  %690 = vmatpush2.msra.mxu0 0.0
  %691 = vmatprep.subr.mxu0 0.0
  %692 = vmatpush2.msra.mxu0 0.0
  %693 = vmatprep.subr.mxu0 0.0
  %694 = vmatpush2.msra.mxu0 0.0
  %695 = vmatprep.subr.mxu0 0.0
  %696 = vmatpush2.msra.mxu0 0.0
  %697 = vmatprep.subr.mxu0 0.0
  %698 = vmatpush2.msra.mxu0 0.0
  %699 = vmatprep.subr.mxu0 0.0
  %700 = vmatpush2.msra.mxu0 0.0
  %701 = vmatprep.subr.mxu0 0.0
  %702 = vmatpush2.msra.mxu0 0.0
  %703 = vmatprep.subr.mxu0 0.0
  %704 = vmatpush2.msra.mxu0 0.0
  %705 = vmatprep.subr.mxu0 0.0
  %706 = vmatpush2.msra.mxu0 0.0
  %707 = vmatprep.subr.mxu0 0.0
  %708 = vmatpush2.msra.mxu0 0.0
  %709 = vmatprep.mubr.f32.mxu0 0.0
  %710 = vmatmul.mubr.f32.gmra.mxu0 %v637
  %v711 = vpop.f32.mrf.mxu0
  %v712 = vadd.f32 %v68, %v711
  %v713 = vpop.f32.mrf.mxu0
  %714 = vmatprep.mubr.f32.mxu0 0.0
  %715 = vmatmul.mubr.f32.gmra.mxu0 %v641
  %v716 = vpop.f32.mrf.mxu0
  %v717 = vadd.f32 %v69, %v716
  %v718 = vpop.f32.mrf.mxu0
  %719 = vdwg.mxu0
  %vm720 = vcmask 130048
  %v721 = vsel %vm720, %v712, -inf
  %722 = vmax.xlane.f32.xlu0 %v721
  %v723 = vpop.xlane.xlu0 %722
  %v724 = vsel %vm720, %v717, -inf
  %725 = vmax.xlane.f32.xlu0 %v724
  %v726 = vpop.xlane.xlu0 %725
  %v727 = vsub.f32 %v712, %v723
  %v728 = vsub.f32 %v717, %v726
  %v729 = vmul.f32 %v727, 1.442695
  %v730 = vpow.pop %v729
  %v731 = vmul.f32 %v728, 1.442695
  %v732 = vpow.pop %v731
  %v733 = vsel %vm720, %v730, 0.0
  %734 = vadd.xlane.f32.xlu0 %v733
  %v735 = vpop.xlane.xlu0 %734
  %v736 = vsel %vm720, %v732, 0.0
  %737 = vadd.xlane.f32.xlu0 %v736
  %v738 = vpop.xlane.xlu0 %737
  %v739 = vmax.f32 %v735, 1e-30
  %v740 = vmax.f32 %v738, 1e-30
  %v741 = vrcp.pop %v739
  %v742 = vmul.f32 %v730, %v741
  %v743 = vrcp.pop %v740
  %v744 = vmul.f32 %v732, %v743
  %745 = vmatprep.subr.mxu0 0.0
  %746 = vmatpush1.msra.mxu0 %v140
  %747 = vmatprep.subr.mxu0 0.0
  %748 = vmatpush1.msra.mxu0 %v139
  %749 = vmatprep.subr.mxu0 0.0
  %750 = vmatpush1.msra.mxu0 %v138
  %751 = vmatprep.subr.mxu0 0.0
  %752 = vmatpush1.msra.mxu0 %v137
  %753 = vmatprep.subr.mxu0 0.0
  %754 = vmatpush1.msra.mxu0 %v136
  %755 = vmatprep.subr.mxu0 0.0
  %756 = vmatpush1.msra.mxu0 %v135
  %757 = vmatprep.subr.mxu0 0.0
  %758 = vmatpush1.msra.mxu0 %v134
  %759 = vmatprep.subr.mxu0 0.0
  %760 = vmatpush1.msra.mxu0 %v133
  %761 = vmatprep.subr.mxu0 0.0
  %762 = vmatpush1.msra.mxu0 %v132
  %763 = vmatprep.subr.mxu0 0.0
  %764 = vmatpush1.msra.mxu0 %v131
  %765 = vmatprep.subr.mxu0 0.0
  %766 = vmatpush1.msra.mxu0 %v130
  %767 = vmatprep.subr.mxu0 0.0
  %768 = vmatpush1.msra.mxu0 %v129
  %769 = vmatprep.subr.mxu0 0.0
  %770 = vmatpush1.msra.mxu0 %v128
  %771 = vmatprep.subr.mxu0 0.0
  %772 = vmatpush1.msra.mxu0 %v127
  %773 = vmatprep.subr.mxu0 0.0
  %774 = vmatpush1.msra.mxu0 %v126
  %775 = vmatprep.subr.mxu0 0.0
  %776 = vmatpush1.msra.mxu0 %v125
  %777 = vmatprep.subr.mxu0 0.0
  %778 = vmatpush2.msra.mxu0 0.0
  %779 = vmatprep.subr.mxu0 0.0
  %780 = vmatpush2.msra.mxu0 0.0
  %781 = vmatprep.subr.mxu0 0.0
  %782 = vmatpush2.msra.mxu0 0.0
  %783 = vmatprep.subr.mxu0 0.0
  %784 = vmatpush2.msra.mxu0 0.0
  %785 = vmatprep.subr.mxu0 0.0
  %786 = vmatpush2.msra.mxu0 0.0
  %787 = vmatprep.subr.mxu0 0.0
  %788 = vmatpush2.msra.mxu0 0.0
  %789 = vmatprep.subr.mxu0 0.0
  %790 = vmatpush2.msra.mxu0 0.0
  %791 = vmatprep.subr.mxu0 0.0
  %792 = vmatpush2.msra.mxu0 0.0
  %793 = vmatprep.subr.mxu0 0.0
  %794 = vmatpush2.msra.mxu0 0.0
  %795 = vmatprep.subr.mxu0 0.0
  %796 = vmatpush2.msra.mxu0 0.0
  %797 = vmatprep.subr.mxu0 0.0
  %798 = vmatpush2.msra.mxu0 0.0
  %799 = vmatprep.subr.mxu0 0.0
  %800 = vmatpush2.msra.mxu0 0.0
  %801 = vmatprep.subr.mxu0 0.0
  %802 = vmatpush2.msra.mxu0 0.0
  %803 = vmatprep.subr.mxu0 0.0
  %804 = vmatpush2.msra.mxu0 0.0
  %805 = vmatprep.subr.mxu0 0.0
  %806 = vmatpush2.msra.mxu0 0.0
  %807 = vmatprep.subr.mxu0 0.0
  %808 = vmatpush2.msra.mxu0 0.0
  %809 = vmatprep.mubr.f32.mxu0 0.0
  %810 = vmatmul.mubr.f32.gmra.mxu0 %v638
  %v811 = vpop.f32.mrf.mxu0
  %v812 = vadd.f32 %v68, %v811
  %v813 = vpop.f32.mrf.mxu0
  %814 = vmatprep.mubr.f32.mxu0 0.0
  %815 = vmatmul.mubr.f32.gmra.mxu0 %v642
  %v816 = vpop.f32.mrf.mxu0
  %v817 = vadd.f32 %v69, %v816
  %v818 = vpop.f32.mrf.mxu0
  %819 = vdwg.mxu0
  %v820 = vsel %vm720, %v812, -inf
  %821 = vmax.xlane.f32.xlu0 %v820
  %v822 = vpop.xlane.xlu0 %821
  %v823 = vsel %vm720, %v817, -inf
  %824 = vmax.xlane.f32.xlu0 %v823
  %v825 = vpop.xlane.xlu0 %824
  %v826 = vsub.f32 %v812, %v822
  %v827 = vsub.f32 %v817, %v825
  %v828 = vmul.f32 %v826, 1.442695
  %v829 = vpow.pop %v828
  %v830 = vmul.f32 %v827, 1.442695
  %v831 = vpow.pop %v830
  %v832 = vsel %vm720, %v829, 0.0
  %833 = vadd.xlane.f32.xlu0 %v832
  %v834 = vpop.xlane.xlu0 %833
  %v835 = vsel %vm720, %v831, 0.0
  %836 = vadd.xlane.f32.xlu0 %v835
  %v837 = vpop.xlane.xlu0 %836
  %v838 = vmax.f32 %v834, 1e-30
  %v839 = vmax.f32 %v837, 1e-30
  %v840 = vrcp.pop %v838
  %v841 = vmul.f32 %v829, %v840
  %v842 = vrcp.pop %v839
  %v843 = vmul.f32 %v831, %v842
  %844 = vmatprep.subr.mxu0 0.0
  %845 = vmatpush1.msra.mxu0 %v156
  %846 = vmatprep.subr.mxu0 0.0
  %847 = vmatpush1.msra.mxu0 %v155
  %848 = vmatprep.subr.mxu0 0.0
  %849 = vmatpush1.msra.mxu0 %v154
  %850 = vmatprep.subr.mxu0 0.0
  %851 = vmatpush1.msra.mxu0 %v153
  %852 = vmatprep.subr.mxu0 0.0
  %853 = vmatpush1.msra.mxu0 %v152
  %854 = vmatprep.subr.mxu0 0.0
  %855 = vmatpush1.msra.mxu0 %v151
  %856 = vmatprep.subr.mxu0 0.0
  %857 = vmatpush1.msra.mxu0 %v150
  %858 = vmatprep.subr.mxu0 0.0
  %859 = vmatpush1.msra.mxu0 %v149
  %860 = vmatprep.subr.mxu0 0.0
  %861 = vmatpush1.msra.mxu0 %v148
  %862 = vmatprep.subr.mxu0 0.0
  %863 = vmatpush1.msra.mxu0 %v147
  %864 = vmatprep.subr.mxu0 0.0
  %865 = vmatpush1.msra.mxu0 %v146
  %866 = vmatprep.subr.mxu0 0.0
  %867 = vmatpush1.msra.mxu0 %v145
  %868 = vmatprep.subr.mxu0 0.0
  %869 = vmatpush1.msra.mxu0 %v144
  %870 = vmatprep.subr.mxu0 0.0
  %871 = vmatpush1.msra.mxu0 %v143
  %872 = vmatprep.subr.mxu0 0.0
  %873 = vmatpush1.msra.mxu0 %v142
  %874 = vmatprep.subr.mxu0 0.0
  %875 = vmatpush1.msra.mxu0 %v141
  %876 = vmatprep.subr.mxu0 0.0
  %877 = vmatpush2.msra.mxu0 0.0
  %878 = vmatprep.subr.mxu0 0.0
  %879 = vmatpush2.msra.mxu0 0.0
  %880 = vmatprep.subr.mxu0 0.0
  %881 = vmatpush2.msra.mxu0 0.0
  %882 = vmatprep.subr.mxu0 0.0
  %883 = vmatpush2.msra.mxu0 0.0
  %884 = vmatprep.subr.mxu0 0.0
  %885 = vmatpush2.msra.mxu0 0.0
  %886 = vmatprep.subr.mxu0 0.0
  %887 = vmatpush2.msra.mxu0 0.0
  %888 = vmatprep.subr.mxu0 0.0
  %889 = vmatpush2.msra.mxu0 0.0
  %890 = vmatprep.subr.mxu0 0.0
  %891 = vmatpush2.msra.mxu0 0.0
  %892 = vmatprep.subr.mxu0 0.0
  %893 = vmatpush2.msra.mxu0 0.0
  %894 = vmatprep.subr.mxu0 0.0
  %895 = vmatpush2.msra.mxu0 0.0
  %896 = vmatprep.subr.mxu0 0.0
  %897 = vmatpush2.msra.mxu0 0.0
  %898 = vmatprep.subr.mxu0 0.0
  %899 = vmatpush2.msra.mxu0 0.0
  %900 = vmatprep.subr.mxu0 0.0
  %901 = vmatpush2.msra.mxu0 0.0
  %902 = vmatprep.subr.mxu0 0.0
  %903 = vmatpush2.msra.mxu0 0.0
  %904 = vmatprep.subr.mxu0 0.0
  %905 = vmatpush2.msra.mxu0 0.0
  %906 = vmatprep.subr.mxu0 0.0
  %907 = vmatpush2.msra.mxu0 0.0
  %908 = vmatprep.mubr.f32.mxu0 0.0
  %909 = vmatmul.mubr.f32.gmra.mxu0 %v639
  %v910 = vpop.f32.mrf.mxu0
  %v911 = vadd.f32 %v68, %v910
  %v912 = vpop.f32.mrf.mxu0
  %913 = vmatprep.mubr.f32.mxu0 0.0
  %914 = vmatmul.mubr.f32.gmra.mxu0 %v643
  %v915 = vpop.f32.mrf.mxu0
  %v916 = vadd.f32 %v69, %v915
  %v917 = vpop.f32.mrf.mxu0
  %918 = vdwg.mxu0
  %v919 = vsel %vm720, %v911, -inf
  %920 = vmax.xlane.f32.xlu0 %v919
  %v921 = vpop.xlane.xlu0 %920
  %v922 = vsel %vm720, %v916, -inf
  %923 = vmax.xlane.f32.xlu0 %v922
  %v924 = vpop.xlane.xlu0 %923
  %v925 = vsub.f32 %v911, %v921
  %v926 = vsub.f32 %v916, %v924
  %v927 = vmul.f32 %v925, 1.442695
  %v928 = vpow.pop %v927
  %v929 = vmul.f32 %v926, 1.442695
  %v930 = vpow.pop %v929
  %v931 = vsel %vm720, %v928, 0.0
  %932 = vadd.xlane.f32.xlu0 %v931
  %v933 = vpop.xlane.xlu0 %932
  %v934 = vsel %vm720, %v930, 0.0
  %935 = vadd.xlane.f32.xlu0 %v934
  %v936 = vpop.xlane.xlu0 %935
  %v937 = vmax.f32 %v933, 1e-30
  %v938 = vmax.f32 %v936, 1e-30
  %v939 = vrcp.pop %v937
  %v940 = vmul.f32 %v928, %v939
  %v941 = vrcp.pop %v938
  %v942 = vmul.f32 %v930, %v941
  %943 = vmatprep.subr.mxu0 0.0
  %944 = vmatpush1.msra.mxu0 %v172
  %945 = vmatprep.subr.mxu0 0.0
  %946 = vmatpush1.msra.mxu0 %v171
  %947 = vmatprep.subr.mxu0 0.0
  %948 = vmatpush1.msra.mxu0 %v170
  %949 = vmatprep.subr.mxu0 0.0
  %950 = vmatpush1.msra.mxu0 %v169
  %951 = vmatprep.subr.mxu0 0.0
  %952 = vmatpush1.msra.mxu0 %v168
  %953 = vmatprep.subr.mxu0 0.0
  %954 = vmatpush1.msra.mxu0 %v167
  %955 = vmatprep.subr.mxu0 0.0
  %956 = vmatpush1.msra.mxu0 %v166
  %957 = vmatprep.subr.mxu0 0.0
  %958 = vmatpush1.msra.mxu0 %v165
  %959 = vmatprep.subr.mxu0 0.0
  %960 = vmatpush1.msra.mxu0 %v164
  %961 = vmatprep.subr.mxu0 0.0
  %962 = vmatpush1.msra.mxu0 %v163
  %963 = vmatprep.subr.mxu0 0.0
  %964 = vmatpush1.msra.mxu0 %v162
  %965 = vmatprep.subr.mxu0 0.0
  %966 = vmatpush1.msra.mxu0 %v161
  %967 = vmatprep.subr.mxu0 0.0
  %968 = vmatpush1.msra.mxu0 %v160
  %969 = vmatprep.subr.mxu0 0.0
  %970 = vmatpush1.msra.mxu0 %v159
  %971 = vmatprep.subr.mxu0 0.0
  %972 = vmatpush1.msra.mxu0 %v158
  %973 = vmatprep.subr.mxu0 0.0
  %974 = vmatpush1.msra.mxu0 %v157
  %975 = vmatprep.subr.mxu0 0.0
  %976 = vmatpush2.msra.mxu0 0.0
  %977 = vmatprep.subr.mxu0 0.0
  %978 = vmatpush2.msra.mxu0 0.0
  %979 = vmatprep.subr.mxu0 0.0
  %980 = vmatpush2.msra.mxu0 0.0
  %981 = vmatprep.subr.mxu0 0.0
  %982 = vmatpush2.msra.mxu0 0.0
  %983 = vmatprep.subr.mxu0 0.0
  %984 = vmatpush2.msra.mxu0 0.0
  %985 = vmatprep.subr.mxu0 0.0
  %986 = vmatpush2.msra.mxu0 0.0
  %987 = vmatprep.subr.mxu0 0.0
  %988 = vmatpush2.msra.mxu0 0.0
  %989 = vmatprep.subr.mxu0 0.0
  %990 = vmatpush2.msra.mxu0 0.0
  %991 = vmatprep.subr.mxu0 0.0
  %992 = vmatpush2.msra.mxu0 0.0
  %993 = vmatprep.subr.mxu0 0.0
  %994 = vmatpush2.msra.mxu0 0.0
  %995 = vmatprep.subr.mxu0 0.0
  %996 = vmatpush2.msra.mxu0 0.0
  %997 = vmatprep.subr.mxu0 0.0
  %998 = vmatpush2.msra.mxu0 0.0
  %999 = vmatprep.subr.mxu0 0.0
  %1000 = vmatpush2.msra.mxu0 0.0
  %1001 = vmatprep.subr.mxu0 0.0
  %1002 = vmatpush2.msra.mxu0 0.0
  %1003 = vmatprep.subr.mxu0 0.0
  %1004 = vmatpush2.msra.mxu0 0.0
  %1005 = vmatprep.subr.mxu0 0.0
  %1006 = vmatpush2.msra.mxu0 0.0
  %1007 = vmatprep.mubr.f32.mxu0 0.0
  %1008 = vmatmul.mubr.f32.gmra.mxu0 %v640
  %v1009 = vpop.f32.mrf.mxu0
  %v1010 = vadd.f32 %v68, %v1009
  %v1011 = vpop.f32.mrf.mxu0
  %1012 = vmatprep.mubr.f32.mxu0 0.0
  %1013 = vmatmul.mubr.f32.gmra.mxu0 %v644
  %v1014 = vpop.f32.mrf.mxu0
  %v1015 = vadd.f32 %v69, %v1014
  %v1016 = vpop.f32.mrf.mxu0
  %1017 = vdwg.mxu0
  %v1018 = vsel %vm720, %v1010, -inf
  %1019 = vmax.xlane.f32.xlu0 %v1018
  %v1020 = vpop.xlane.xlu0 %1019
  %v1021 = vsel %vm720, %v1015, -inf
  %1022 = vmax.xlane.f32.xlu0 %v1021
  %v1023 = vpop.xlane.xlu0 %1022
  %v1024 = vsub.f32 %v1010, %v1020
  %v1025 = vsub.f32 %v1015, %v1023
  %v1026 = vmul.f32 %v1024, 1.442695
  %v1027 = vpow.pop %v1026
  %v1028 = vmul.f32 %v1025, 1.442695
  %v1029 = vpow.pop %v1028
  %v1030 = vsel %vm720, %v1027, 0.0
  %1031 = vadd.xlane.f32.xlu0 %v1030
  %v1032 = vpop.xlane.xlu0 %1031
  %v1033 = vsel %vm720, %v1029, 0.0
  %1034 = vadd.xlane.f32.xlu0 %v1033
  %v1035 = vpop.xlane.xlu0 %1034
  %v1036 = vmax.f32 %v1032, 1e-30
  %v1037 = vmax.f32 %v1035, 1e-30
  %v1038 = vrcp.pop %v1036
  %v1039 = vmul.f32 %v1027, %v1038
  %v1040 = vrcp.pop %v1037
  %v1041 = vmul.f32 %v1029, %v1040
  %1044 = vrot.lane.b32.xlu0 %v841, 16
  %v1045 = vpop.permute.xlu0 %1044
  %1046 = vrot.lane.b32.xlu0 %v843, 16
  %v1047 = vpop.permute.xlu0 %1046
  %1052 = vrot.lane.b32.xlu0 %v940, 32
  %v1053 = vpop.permute.xlu0 %1052
  %1054 = vrot.lane.b32.xlu0 %v942, 32
  %v1055 = vpop.permute.xlu0 %1054
  %1060 = vrot.lane.b32.xlu0 %v1039, 48
  %v1061 = vpop.permute.xlu0 %1060
  %1062 = vrot.lane.b32.xlu0 %v1041, 48
  %v1063 = vpop.permute.xlu0 %1062
  %v1066 = vsel %vm720, %v742, %v1045
  %v1067 = vsel %vm720, %v744, %v1047
  %v1068 = vsel %vm262, %v1066, %v1053
  %v1069 = vsel %vm262, %v1067, %v1055
  %vm1070 = vcmask 392192
  %v1071 = vsel %vm1070, %v1068, %v1061
  %v1072 = vsel %vm1070, %v1069, %v1063
  %v1073 = vmul.f32 %v254, %v94
  %v1074 = vmul.f32 %v259, %v95
  %v1075 = vmul.f32 %v254, %v96
  %v1076 = vmul.f32 %v259, %v97
  %v1077 = vmul.f32 %v254, %v98
  %v1078 = vmul.f32 %v259, %v99
  %v1079 = vmul.f32 %v254, %v100
  %v1080 = vmul.f32 %v259, %v101
  %v1082 = vlaneseq
  %v1083 = vshrl.u32 %v1082, 7
  %v1084 = vsub.s32 0, %v1083
  %v1085 = vrot.slane %v173, %v1084
  %vm1087 = vcmask 523264
  %v1089 = vsel %vm1087, %v1071, 0
  %v1092 = vsel %vm1087, %v1072, 0
  %1094 = vmatprep.subr.mxu0 0.0
  %1095 = vmatpush1.msra.mxu0 0.0
  %1096 = vmatprep.subr.mxu0 0.0
  %1097 = vmatpush1.msra.mxu0 0.0
  %1098 = vmatprep.subr.mxu0 0.0
  %1099 = vmatpush1.msra.mxu0 0.0
  %1100 = vmatprep.subr.mxu0 0.0
  %1101 = vmatpush1.msra.mxu0 0.0
  %1102 = vmatprep.subr.mxu0 0.0
  %1103 = vmatpush1.msra.mxu0 0.0
  %1104 = vmatprep.subr.mxu0 0.0
  %1105 = vmatpush1.msra.mxu0 0.0
  %1106 = vmatprep.subr.mxu0 0.0
  %1107 = vmatpush1.msra.mxu0 0.0
  %1108 = vmatprep.subr.mxu0 0.0
  %1109 = vmatpush1.msra.mxu0 0.0
  %1110 = vmatprep.subr.mxu0 0.0
  %1111 = vmatpush1.msra.mxu0 %v1080
  %1112 = vmatprep.subr.mxu0 0.0
  %1113 = vmatpush1.msra.mxu0 %v1079
  %1114 = vmatprep.subr.mxu0 0.0
  %1115 = vmatpush1.msra.mxu0 %v1078
  %1116 = vmatprep.subr.mxu0 0.0
  %1117 = vmatpush1.msra.mxu0 %v1077
  %1118 = vmatprep.subr.mxu0 0.0
  %1119 = vmatpush1.msra.mxu0 %v1076
  %1120 = vmatprep.subr.mxu0 0.0
  %1121 = vmatpush1.msra.mxu0 %v1075
  %1122 = vmatprep.subr.mxu0 0.0
  %1123 = vmatpush1.msra.mxu0 %v1074
  %1124 = vmatprep.subr.mxu0 0.0
  %1125 = vmatpush1.msra.mxu0 %v1073
  %1126 = vmatprep.subr.mxu0 0.0
  %1127 = vmatpush2.msra.mxu0 0.0
  %1128 = vmatprep.subr.mxu0 0.0
  %1129 = vmatpush2.msra.mxu0 0.0
  %1130 = vmatprep.subr.mxu0 0.0
  %1131 = vmatpush2.msra.mxu0 0.0
  %1132 = vmatprep.subr.mxu0 0.0
  %1133 = vmatpush2.msra.mxu0 0.0
  %1134 = vmatprep.subr.mxu0 0.0
  %1135 = vmatpush2.msra.mxu0 0.0
  %1136 = vmatprep.subr.mxu0 0.0
  %1137 = vmatpush2.msra.mxu0 0.0
  %1138 = vmatprep.subr.mxu0 0.0
  %1139 = vmatpush2.msra.mxu0 0.0
  %1140 = vmatprep.subr.mxu0 0.0
  %1141 = vmatpush2.msra.mxu0 0.0
  %1142 = vmatprep.subr.mxu0 0.0
  %1143 = vmatpush2.msra.mxu0 0.0
  %1144 = vmatprep.subr.mxu0 0.0
  %1145 = vmatpush2.msra.mxu0 0.0
  %1146 = vmatprep.subr.mxu0 0.0
  %1147 = vmatpush2.msra.mxu0 0.0
  %1148 = vmatprep.subr.mxu0 0.0
  %1149 = vmatpush2.msra.mxu0 0.0
  %1150 = vmatprep.subr.mxu0 0.0
  %1151 = vmatpush2.msra.mxu0 0.0
  %1152 = vmatprep.subr.mxu0 0.0
  %1153 = vmatpush2.msra.mxu0 0.0
  %1154 = vmatprep.subr.mxu0 0.0
  %1155 = vmatpush2.msra.mxu0 0.0
  %1156 = vmatprep.subr.mxu0 0.0
  %1157 = vmatpush2.msra.mxu0 0.0
  %1158 = vmatprep.mubr.f32.mxu0 0.0
  %1159 = vmatmul.mubr.f32.gmra.mxu0 %v1089
  %v1160 = vpop.f32.mrf.mxu0
  %v1161 = vadd.f32 %v1085, %v1160
  %v1162 = vpop.f32.mrf.mxu0
  %1163 = vmatprep.mubr.f32.mxu0 0.0
  %1164 = vmatmul.mubr.f32.gmra.mxu0 %v1092
  %v1165 = vpop.f32.mrf.mxu0
  %v1166 = vadd.f32 %v1085, %v1165
  %v1167 = vpop.f32.mrf.mxu0
  %1168 = vdwg.mxu0
  %vm1169 = vcmp.gt.f32.partialorder %v1161, 0.0
  %vm1170 = vcmp.gt.f32.partialorder %v1166, 0.0
  %v1171 = vmin.f32 %v1161, 0.0
  %v1172 = vmin.f32 %v1166, 0.0
  %v1173 = vmul.f32 %v1171, 1.442695
  %v1174 = vpow.pop %v1173
  %v1175 = vmul.f32 %v1172, 1.442695
  %v1176 = vpow.pop %v1175
  %v1177 = vsub.f32 %v1174, 1.0
  %v1178 = vsub.f32 %v1176, 1.0
  %v1179 = vsel %vm1169, %v1161, %v1177
  %v1180 = vsel %vm1170, %v1166, %v1178
  %v1181 = vld [vmem:[%s11] sm:$0xff]
  %v1182 = vld [vmem:[%s11 + $0x8] sm:$0xff]
  %v1183 = vld [vmem:[%s11 + $0x10] sm:$0xff]
  %v1184 = vld [vmem:[%s11 + $0x18] sm:$0xff]
  %v1185 = vld [vmem:[%s12] sm:$0x1]
  %v1186 = vld [vmem:[%s13] sm:$0xff]
  %v1187 = vld [vmem:[%s13 + $0x8] sm:$0xff]
  %v1188 = vld [vmem:[%s13 + $0x10] sm:$0xff]
  %v1189 = vld [vmem:[%s13 + $0x18] sm:$0xff]
  %v1190 = vld [vmem:[%s13 + $0x20] sm:$0xff]
  %v1191 = vld [vmem:[%s13 + $0x28] sm:$0xff]
  %v1192 = vld [vmem:[%s13 + $0x30] sm:$0xff]
  %v1193 = vld [vmem:[%s13 + $0x38] sm:$0xff]
  %v1194 = vld [vmem:[%s13 + $0x40] sm:$0xff]
  %v1195 = vld [vmem:[%s13 + $0x48] sm:$0xff]
  %v1196 = vld [vmem:[%s13 + $0x50] sm:$0xff]
  %v1197 = vld [vmem:[%s13 + $0x58] sm:$0xff]
  %v1198 = vld [vmem:[%s13 + $0x60] sm:$0xff]
  %v1199 = vld [vmem:[%s13 + $0x68] sm:$0xff]
  %v1200 = vld [vmem:[%s13 + $0x70] sm:$0xff]
  %v1201 = vld [vmem:[%s13 + $0x78] sm:$0xff]
  %v1202 = vld [vmem:[%s13 + $0x80] sm:$0xff]
  %v1203 = vld [vmem:[%s13 + $0x88] sm:$0xff]
  %v1204 = vld [vmem:[%s13 + $0x90] sm:$0xff]
  %v1205 = vld [vmem:[%s13 + $0x98] sm:$0xff]
  %v1206 = vld [vmem:[%s13 + $0xa0] sm:$0xff]
  %v1207 = vld [vmem:[%s13 + $0xa8] sm:$0xff]
  %v1208 = vld [vmem:[%s13 + $0xb0] sm:$0xff]
  %v1209 = vld [vmem:[%s13 + $0xb8] sm:$0xff]
  %v1210 = vld [vmem:[%s13 + $0xc0] sm:$0xff]
  %v1211 = vld [vmem:[%s13 + $0xc8] sm:$0xff]
  %v1212 = vld [vmem:[%s13 + $0xd0] sm:$0xff]
  %v1213 = vld [vmem:[%s13 + $0xd8] sm:$0xff]
  %v1214 = vld [vmem:[%s13 + $0xe0] sm:$0xff]
  %v1215 = vld [vmem:[%s13 + $0xe8] sm:$0xff]
  %v1216 = vld [vmem:[%s13 + $0xf0] sm:$0xff]
  %v1217 = vld [vmem:[%s13 + $0xf8] sm:$0xff]
  %v1218 = vld [vmem:[%s13 + $0x100] sm:$0xff]
  %v1219 = vld [vmem:[%s13 + $0x108] sm:$0xff]
  %v1220 = vld [vmem:[%s13 + $0x110] sm:$0xff]
  %v1221 = vld [vmem:[%s13 + $0x118] sm:$0xff]
  %v1222 = vld [vmem:[%s13 + $0x120] sm:$0xff]
  %v1223 = vld [vmem:[%s13 + $0x128] sm:$0xff]
  %v1224 = vld [vmem:[%s13 + $0x130] sm:$0xff]
  %v1225 = vld [vmem:[%s13 + $0x138] sm:$0xff]
  %v1226 = vld [vmem:[%s13 + $0x140] sm:$0xff]
  %v1227 = vld [vmem:[%s13 + $0x148] sm:$0xff]
  %v1228 = vld [vmem:[%s13 + $0x150] sm:$0xff]
  %v1229 = vld [vmem:[%s13 + $0x158] sm:$0xff]
  %v1230 = vld [vmem:[%s13 + $0x160] sm:$0xff]
  %v1231 = vld [vmem:[%s13 + $0x168] sm:$0xff]
  %v1232 = vld [vmem:[%s13 + $0x170] sm:$0xff]
  %v1233 = vld [vmem:[%s13 + $0x178] sm:$0xff]
  %v1234 = vld [vmem:[%s13 + $0x180] sm:$0xff]
  %v1235 = vld [vmem:[%s13 + $0x188] sm:$0xff]
  %v1236 = vld [vmem:[%s13 + $0x190] sm:$0xff]
  %v1237 = vld [vmem:[%s13 + $0x198] sm:$0xff]
  %v1238 = vld [vmem:[%s13 + $0x1a0] sm:$0xff]
  %v1239 = vld [vmem:[%s13 + $0x1a8] sm:$0xff]
  %v1240 = vld [vmem:[%s13 + $0x1b0] sm:$0xff]
  %v1241 = vld [vmem:[%s13 + $0x1b8] sm:$0xff]
  %v1242 = vld [vmem:[%s13 + $0x1c0] sm:$0xff]
  %v1243 = vld [vmem:[%s13 + $0x1c8] sm:$0xff]
  %v1244 = vld [vmem:[%s13 + $0x1d0] sm:$0xff]
  %v1245 = vld [vmem:[%s13 + $0x1d8] sm:$0xff]
  %v1246 = vld [vmem:[%s13 + $0x1e0] sm:$0xff]
  %v1247 = vld [vmem:[%s13 + $0x1e8] sm:$0xff]
  %v1248 = vld [vmem:[%s13 + $0x1f0] sm:$0xff]
  %v1249 = vld [vmem:[%s13 + $0x1f8] sm:$0xff]
  %v1250 = vld [vmem:[%s14] sm:$0x1]
  %v1252 = vlaneseq
  %v1253 = vshrl.u32 %v1252, 7
  %v1254 = vsub.s32 0, %v1253
  %v1255 = vrot.slane %v1185, %v1254
  %v1258 = vsel %vm262, %v1179, 0
  %v1261 = vsel %vm262, %v1180, 0
  %1263 = vmatprep.subr.mxu0 0.0
  %1264 = vmatpush1.msra.mxu0 0.0
  %1265 = vmatprep.subr.mxu0 0.0
  %1266 = vmatpush1.msra.mxu0 0.0
  %1267 = vmatprep.subr.mxu0 0.0
  %1268 = vmatpush1.msra.mxu0 0.0
  %1269 = vmatprep.subr.mxu0 0.0
  %1270 = vmatpush1.msra.mxu0 0.0
  %1271 = vmatprep.subr.mxu0 0.0
  %1272 = vmatpush1.msra.mxu0 0.0
  %1273 = vmatprep.subr.mxu0 0.0
  %1274 = vmatpush1.msra.mxu0 0.0
  %1275 = vmatprep.subr.mxu0 0.0
  %1276 = vmatpush1.msra.mxu0 0.0
  %1277 = vmatprep.subr.mxu0 0.0
  %1278 = vmatpush1.msra.mxu0 0.0
  %1279 = vmatprep.subr.mxu0 0.0
  %1280 = vmatpush1.msra.mxu0 0.0
  %1281 = vmatprep.subr.mxu0 0.0
  %1282 = vmatpush1.msra.mxu0 0.0
  %1283 = vmatprep.subr.mxu0 0.0
  %1284 = vmatpush1.msra.mxu0 0.0
  %1285 = vmatprep.subr.mxu0 0.0
  %1286 = vmatpush1.msra.mxu0 0.0
  %1287 = vmatprep.subr.mxu0 0.0
  %1288 = vmatpush1.msra.mxu0 %v1184
  %1289 = vmatprep.subr.mxu0 0.0
  %1290 = vmatpush1.msra.mxu0 %v1183
  %1291 = vmatprep.subr.mxu0 0.0
  %1292 = vmatpush1.msra.mxu0 %v1182
  %1293 = vmatprep.subr.mxu0 0.0
  %1294 = vmatpush1.msra.mxu0 %v1181
  %1295 = vmatprep.subr.mxu0 0.0
  %1296 = vmatpush2.msra.mxu0 0.0
  %1297 = vmatprep.subr.mxu0 0.0
  %1298 = vmatpush2.msra.mxu0 0.0
  %1299 = vmatprep.subr.mxu0 0.0
  %1300 = vmatpush2.msra.mxu0 0.0
  %1301 = vmatprep.subr.mxu0 0.0
  %1302 = vmatpush2.msra.mxu0 0.0
  %1303 = vmatprep.subr.mxu0 0.0
  %1304 = vmatpush2.msra.mxu0 0.0
  %1305 = vmatprep.subr.mxu0 0.0
  %1306 = vmatpush2.msra.mxu0 0.0
  %1307 = vmatprep.subr.mxu0 0.0
  %1308 = vmatpush2.msra.mxu0 0.0
  %1309 = vmatprep.subr.mxu0 0.0
  %1310 = vmatpush2.msra.mxu0 0.0
  %1311 = vmatprep.subr.mxu0 0.0
  %1312 = vmatpush2.msra.mxu0 0.0
  %1313 = vmatprep.subr.mxu0 0.0
  %1314 = vmatpush2.msra.mxu0 0.0
  %1315 = vmatprep.subr.mxu0 0.0
  %1316 = vmatpush2.msra.mxu0 0.0
  %1317 = vmatprep.subr.mxu0 0.0
  %1318 = vmatpush2.msra.mxu0 0.0
  %1319 = vmatprep.subr.mxu0 0.0
  %1320 = vmatpush2.msra.mxu0 0.0
  %1321 = vmatprep.subr.mxu0 0.0
  %1322 = vmatpush2.msra.mxu0 0.0
  %1323 = vmatprep.subr.mxu0 0.0
  %1324 = vmatpush2.msra.mxu0 0.0
  %1325 = vmatprep.subr.mxu0 0.0
  %1326 = vmatpush2.msra.mxu0 0.0
  %1327 = vmatprep.mubr.f32.mxu0 0.0
  %1328 = vmatmul.mubr.f32.gmra.mxu0 %v1258
  %v1329 = vpop.f32.mrf.mxu0
  %v1330 = vadd.f32 %v1255, %v1329
  %v1331 = vpop.f32.mrf.mxu0
  %1332 = vmatprep.mubr.f32.mxu0 0.0
  %1333 = vmatmul.mubr.f32.gmra.mxu0 %v1261
  %v1334 = vpop.f32.mrf.mxu0
  %v1335 = vadd.f32 %v1255, %v1334
  %v1336 = vpop.f32.mrf.mxu0
  %1337 = vdwg.mxu0
  %v1339 = vsel %vm262, %v1330, 0
  %v1342 = vsel %vm262, %v1335, 0
  %1344 = vmatprep.subr.mxu0 0.0
  %1345 = vmatpush1.msra.mxu0 0.0
  %1346 = vmatprep.subr.mxu0 0.0
  %1347 = vmatpush1.msra.mxu0 0.0
  %1348 = vmatprep.subr.mxu0 0.0
  %1349 = vmatpush1.msra.mxu0 0.0
  %1350 = vmatprep.subr.mxu0 0.0
  %1351 = vmatpush1.msra.mxu0 0.0
  %1352 = vmatprep.subr.mxu0 0.0
  %1353 = vmatpush1.msra.mxu0 0.0
  %1354 = vmatprep.subr.mxu0 0.0
  %1355 = vmatpush1.msra.mxu0 0.0
  %1356 = vmatprep.subr.mxu0 0.0
  %1357 = vmatpush1.msra.mxu0 0.0
  %1358 = vmatprep.subr.mxu0 0.0
  %1359 = vmatpush1.msra.mxu0 0.0
  %1360 = vmatprep.subr.mxu0 0.0
  %1361 = vmatpush1.msra.mxu0 0.0
  %1362 = vmatprep.subr.mxu0 0.0
  %1363 = vmatpush1.msra.mxu0 0.0
  %1364 = vmatprep.subr.mxu0 0.0
  %1365 = vmatpush1.msra.mxu0 0.0
  %1366 = vmatprep.subr.mxu0 0.0
  %1367 = vmatpush1.msra.mxu0 0.0
  %1368 = vmatprep.subr.mxu0 %v83
  %1369 = vmatpush1.msra.mxu0 %v82
  %1370 = vmatprep.subr.mxu0 %v79
  %1371 = vmatpush1.msra.mxu0 %v78
  %1372 = vmatprep.subr.mxu0 %v75
  %1373 = vmatpush1.msra.mxu0 %v74
  %1374 = vmatprep.subr.mxu0 %v71
  %1375 = vmatpush1.msra.mxu0 %v70
  %1376 = vmatprep.subr.mxu0 0.0
  %1377 = vmatpush2.msra.mxu0 0.0
  %1378 = vmatprep.subr.mxu0 0.0
  %1379 = vmatpush2.msra.mxu0 0.0
  %1380 = vmatprep.subr.mxu0 0.0
  %1381 = vmatpush2.msra.mxu0 0.0
  %1382 = vmatprep.subr.mxu0 0.0
  %1383 = vmatpush2.msra.mxu0 0.0
  %1384 = vmatprep.subr.mxu0 0.0
  %1385 = vmatpush2.msra.mxu0 0.0
  %1386 = vmatprep.subr.mxu0 0.0
  %1387 = vmatpush2.msra.mxu0 0.0
  %1388 = vmatprep.subr.mxu0 0.0
  %1389 = vmatpush2.msra.mxu0 0.0
  %1390 = vmatprep.subr.mxu0 0.0
  %1391 = vmatpush2.msra.mxu0 0.0
  %1392 = vmatprep.subr.mxu0 0.0
  %1393 = vmatpush2.msra.mxu0 0.0
  %1394 = vmatprep.subr.mxu0 0.0
  %1395 = vmatpush2.msra.mxu0 0.0
  %1396 = vmatprep.subr.mxu0 0.0
  %1397 = vmatpush2.msra.mxu0 0.0
  %1398 = vmatprep.subr.mxu0 0.0
  %1399 = vmatpush2.msra.mxu0 0.0
  %1400 = vmatprep.subr.mxu0 0.0
  %1401 = vmatpush2.msra.mxu0 0.0
  %1402 = vmatprep.subr.mxu0 0.0
  %1403 = vmatpush2.msra.mxu0 0.0
  %1404 = vmatprep.subr.mxu0 0.0
  %1405 = vmatpush2.msra.mxu0 0.0
  %1406 = vmatprep.subr.mxu0 0.0
  %1407 = vmatpush2.msra.mxu0 0.0
  %1408 = vmatprep.mubr.f32.mxu0 0.0
  %1409 = vmatmul.mubr.f32.gmra.mxu0 %v1339
  %v1410 = vpop.f32.mrf.mxu0
  %v1411 = vadd.f32 0.0, %v1410
  %v1412 = vpop.f32.mrf.mxu0
  %v1413 = vadd.f32 0.0, %v1412
  %1414 = vmatprep.mubr.f32.mxu0 0.0
  %1415 = vmatmul.mubr.f32.gmra.mxu0 %v1342
  %v1416 = vpop.f32.mrf.mxu0
  %v1417 = vadd.f32 0.0, %v1416
  %v1418 = vpop.f32.mrf.mxu0
  %v1419 = vadd.f32 0.0, %v1418
  %1420 = vdwg.mxu0
  %1421 = vmatprep.subr.mxu0 0.0
  %1422 = vmatpush1.msra.mxu0 0.0
  %1423 = vmatprep.subr.mxu0 0.0
  %1424 = vmatpush1.msra.mxu0 0.0
  %1425 = vmatprep.subr.mxu0 0.0
  %1426 = vmatpush1.msra.mxu0 0.0
  %1427 = vmatprep.subr.mxu0 0.0
  %1428 = vmatpush1.msra.mxu0 0.0
  %1429 = vmatprep.subr.mxu0 0.0
  %1430 = vmatpush1.msra.mxu0 0.0
  %1431 = vmatprep.subr.mxu0 0.0
  %1432 = vmatpush1.msra.mxu0 0.0
  %1433 = vmatprep.subr.mxu0 0.0
  %1434 = vmatpush1.msra.mxu0 0.0
  %1435 = vmatprep.subr.mxu0 0.0
  %1436 = vmatpush1.msra.mxu0 0.0
  %1437 = vmatprep.subr.mxu0 0.0
  %1438 = vmatpush1.msra.mxu0 0.0
  %1439 = vmatprep.subr.mxu0 0.0
  %1440 = vmatpush1.msra.mxu0 0.0
  %1441 = vmatprep.subr.mxu0 0.0
  %1442 = vmatpush1.msra.mxu0 0.0
  %1443 = vmatprep.subr.mxu0 0.0
  %1444 = vmatpush1.msra.mxu0 0.0
  %1445 = vmatprep.subr.mxu0 %v85
  %1446 = vmatpush1.msra.mxu0 %v84
  %1447 = vmatprep.subr.mxu0 %v81
  %1448 = vmatpush1.msra.mxu0 %v80
  %1449 = vmatprep.subr.mxu0 %v77
  %1450 = vmatpush1.msra.mxu0 %v76
  %1451 = vmatprep.subr.mxu0 %v73
  %1452 = vmatpush1.msra.mxu0 %v72
  %1453 = vmatprep.subr.mxu0 0.0
  %1454 = vmatpush2.msra.mxu0 0.0
  %1455 = vmatprep.subr.mxu0 0.0
  %1456 = vmatpush2.msra.mxu0 0.0
  %1457 = vmatprep.subr.mxu0 0.0
  %1458 = vmatpush2.msra.mxu0 0.0
  %1459 = vmatprep.subr.mxu0 0.0
  %1460 = vmatpush2.msra.mxu0 0.0
  %1461 = vmatprep.subr.mxu0 0.0
  %1462 = vmatpush2.msra.mxu0 0.0
  %1463 = vmatprep.subr.mxu0 0.0
  %1464 = vmatpush2.msra.mxu0 0.0
  %1465 = vmatprep.subr.mxu0 0.0
  %1466 = vmatpush2.msra.mxu0 0.0
  %1467 = vmatprep.subr.mxu0 0.0
  %1468 = vmatpush2.msra.mxu0 0.0
  %1469 = vmatprep.subr.mxu0 0.0
  %1470 = vmatpush2.msra.mxu0 0.0
  %1471 = vmatprep.subr.mxu0 0.0
  %1472 = vmatpush2.msra.mxu0 0.0
  %1473 = vmatprep.subr.mxu0 0.0
  %1474 = vmatpush2.msra.mxu0 0.0
  %1475 = vmatprep.subr.mxu0 0.0
  %1476 = vmatpush2.msra.mxu0 0.0
  %1477 = vmatprep.subr.mxu0 0.0
  %1478 = vmatpush2.msra.mxu0 0.0
  %1479 = vmatprep.subr.mxu0 0.0
  %1480 = vmatpush2.msra.mxu0 0.0
  %1481 = vmatprep.subr.mxu0 0.0
  %1482 = vmatpush2.msra.mxu0 0.0
  %1483 = vmatprep.subr.mxu0 0.0
  %1484 = vmatpush2.msra.mxu0 0.0
  %1485 = vmatprep.mubr.f32.mxu0 0.0
  %1486 = vmatmul.mubr.f32.gmra.mxu0 %v1339
  %v1487 = vpop.f32.mrf.mxu0
  %v1488 = vadd.f32 0.0, %v1487
  %v1489 = vpop.f32.mrf.mxu0
  %v1490 = vadd.f32 0.0, %v1489
  %1491 = vmatprep.mubr.f32.mxu0 0.0
  %1492 = vmatmul.mubr.f32.gmra.mxu0 %v1342
  %v1493 = vpop.f32.mrf.mxu0
  %v1494 = vadd.f32 0.0, %v1493
  %v1495 = vpop.f32.mrf.mxu0
  %v1496 = vadd.f32 0.0, %v1495
  %1497 = vdwg.mxu0
  %v1498 = vmul.f32 %v1411, %v86
  %v1499 = vmul.f32 %v1413, %v87
  %v1500 = vmul.f32 %v1488, %v88
  %v1501 = vmul.f32 %v1490, %v89
  %v1502 = vmul.f32 %v1417, %v90
  %v1503 = vmul.f32 %v1419, %v91
  %v1504 = vmul.f32 %v1494, %v92
  %v1505 = vmul.f32 %v1496, %v93
  %v1506 = vadd.f32 %v1498, %v1502
  %v1507 = vrot.slane %v1506, 4
  %v1508 = vadd.f32 %v1506, %v1507
  %v1509 = vrot.slane %v1508, 2
  %v1510 = vadd.f32 %v1508, %v1509
  %v1511 = vrot.slane %v1510, 1
  %v1512 = vadd.f32 %v1510, %v1511
  %v1513 = vadd.f32 %v1499, %v1503
  %v1514 = vrot.slane %v1513, 4
  %v1515 = vadd.f32 %v1513, %v1514
  %v1516 = vrot.slane %v1515, 2
  %v1517 = vadd.f32 %v1515, %v1516
  %v1518 = vrot.slane %v1517, 1
  %v1519 = vadd.f32 %v1517, %v1518
  %v1520 = vadd.f32 %v1500, %v1504
  %v1521 = vrot.slane %v1520, 4
  %v1522 = vadd.f32 %v1520, %v1521
  %v1523 = vrot.slane %v1522, 2
  %v1524 = vadd.f32 %v1522, %v1523
  %v1525 = vrot.slane %v1524, 1
  %v1526 = vadd.f32 %v1524, %v1525
  %v1527 = vadd.f32 %v1501, %v1505
  %v1528 = vrot.slane %v1527, 4
  %v1529 = vadd.f32 %v1527, %v1528
  %v1530 = vrot.slane %v1529, 2
  %v1531 = vadd.f32 %v1529, %v1530
  %v1532 = vrot.slane %v1531, 1
  %v1533 = vadd.f32 %v1531, %v1532
  %1534 = vrot.lane.b32.xlu0 %v1330, 96
  %v1535 = vpop.permute.xlu0 %1534
  %1536 = vrot.lane.b32.xlu0 %v1335, 96
  %v1537 = vpop.permute.xlu0 %1536
  %v1538 = vsel %vm262, %v1535, 0
  %v1540 = vsel %vm262, %v1537, 0
  %1542 = vmatprep.subr.mxu0 0.0
  %1543 = vmatpush1.msra.mxu0 0.0
  %1544 = vmatprep.subr.mxu0 0.0
  %1545 = vmatpush1.msra.mxu0 0.0
  %1546 = vmatprep.subr.mxu0 0.0
  %1547 = vmatpush1.msra.mxu0 0.0
  %1548 = vmatprep.subr.mxu0 0.0
  %1549 = vmatpush1.msra.mxu0 0.0
  %1550 = vmatprep.subr.mxu0 0.0
  %1551 = vmatpush1.msra.mxu0 0.0
  %1552 = vmatprep.subr.mxu0 0.0
  %1553 = vmatpush1.msra.mxu0 0.0
  %1554 = vmatprep.subr.mxu0 0.0
  %1555 = vmatpush1.msra.mxu0 0.0
  %1556 = vmatprep.subr.mxu0 0.0
  %1557 = vmatpush1.msra.mxu0 0.0
  %1558 = vmatprep.subr.mxu0 0.0
  %1559 = vmatpush1.msra.mxu0 0.0
  %1560 = vmatprep.subr.mxu0 0.0
  %1561 = vmatpush1.msra.mxu0 0.0
  %1562 = vmatprep.subr.mxu0 0.0
  %1563 = vmatpush1.msra.mxu0 0.0
  %1564 = vmatprep.subr.mxu0 0.0
  %1565 = vmatpush1.msra.mxu0 0.0
  %1566 = vmatprep.subr.mxu0 %v83
  %1567 = vmatpush1.msra.mxu0 %v82
  %1568 = vmatprep.subr.mxu0 %v79
  %1569 = vmatpush1.msra.mxu0 %v78
  %1570 = vmatprep.subr.mxu0 %v75
  %1571 = vmatpush1.msra.mxu0 %v74
  %1572 = vmatprep.subr.mxu0 %v71
  %1573 = vmatpush1.msra.mxu0 %v70
  %1574 = vmatprep.subr.mxu0 0.0
  %1575 = vmatpush2.msra.mxu0 0.0
  %1576 = vmatprep.subr.mxu0 0.0
  %1577 = vmatpush2.msra.mxu0 0.0
  %1578 = vmatprep.subr.mxu0 0.0
  %1579 = vmatpush2.msra.mxu0 0.0
  %1580 = vmatprep.subr.mxu0 0.0
  %1581 = vmatpush2.msra.mxu0 0.0
  %1582 = vmatprep.subr.mxu0 0.0
  %1583 = vmatpush2.msra.mxu0 0.0
  %1584 = vmatprep.subr.mxu0 0.0
  %1585 = vmatpush2.msra.mxu0 0.0
  %1586 = vmatprep.subr.mxu0 0.0
  %1587 = vmatpush2.msra.mxu0 0.0
  %1588 = vmatprep.subr.mxu0 0.0
  %1589 = vmatpush2.msra.mxu0 0.0
  %1590 = vmatprep.subr.mxu0 0.0
  %1591 = vmatpush2.msra.mxu0 0.0
  %1592 = vmatprep.subr.mxu0 0.0
  %1593 = vmatpush2.msra.mxu0 0.0
  %1594 = vmatprep.subr.mxu0 0.0
  %1595 = vmatpush2.msra.mxu0 0.0
  %1596 = vmatprep.subr.mxu0 0.0
  %1597 = vmatpush2.msra.mxu0 0.0
  %1598 = vmatprep.subr.mxu0 0.0
  %1599 = vmatpush2.msra.mxu0 0.0
  %1600 = vmatprep.subr.mxu0 0.0
  %1601 = vmatpush2.msra.mxu0 0.0
  %1602 = vmatprep.subr.mxu0 0.0
  %1603 = vmatpush2.msra.mxu0 0.0
  %1604 = vmatprep.subr.mxu0 0.0
  %1605 = vmatpush2.msra.mxu0 0.0
  %1606 = vmatprep.mubr.f32.mxu0 0.0
  %1607 = vmatmul.mubr.f32.gmra.mxu0 %v1538
  %v1608 = vpop.f32.mrf.mxu0
  %v1609 = vadd.f32 %v1512, %v1608
  %v1610 = vpop.f32.mrf.mxu0
  %v1611 = vadd.f32 %v1519, %v1610
  %1612 = vmatprep.mubr.f32.mxu0 0.0
  %1613 = vmatmul.mubr.f32.gmra.mxu0 %v1540
  %v1614 = vpop.f32.mrf.mxu0
  %v1615 = vadd.f32 %v1512, %v1614
  %v1616 = vpop.f32.mrf.mxu0
  %v1617 = vadd.f32 %v1519, %v1616
  %1618 = vdwg.mxu0
  %1619 = vmatprep.subr.mxu0 0.0
  %1620 = vmatpush1.msra.mxu0 0.0
  %1621 = vmatprep.subr.mxu0 0.0
  %1622 = vmatpush1.msra.mxu0 0.0
  %1623 = vmatprep.subr.mxu0 0.0
  %1624 = vmatpush1.msra.mxu0 0.0
  %1625 = vmatprep.subr.mxu0 0.0
  %1626 = vmatpush1.msra.mxu0 0.0
  %1627 = vmatprep.subr.mxu0 0.0
  %1628 = vmatpush1.msra.mxu0 0.0
  %1629 = vmatprep.subr.mxu0 0.0
  %1630 = vmatpush1.msra.mxu0 0.0
  %1631 = vmatprep.subr.mxu0 0.0
  %1632 = vmatpush1.msra.mxu0 0.0
  %1633 = vmatprep.subr.mxu0 0.0
  %1634 = vmatpush1.msra.mxu0 0.0
  %1635 = vmatprep.subr.mxu0 0.0
  %1636 = vmatpush1.msra.mxu0 0.0
  %1637 = vmatprep.subr.mxu0 0.0
  %1638 = vmatpush1.msra.mxu0 0.0
  %1639 = vmatprep.subr.mxu0 0.0
  %1640 = vmatpush1.msra.mxu0 0.0
  %1641 = vmatprep.subr.mxu0 0.0
  %1642 = vmatpush1.msra.mxu0 0.0
  %1643 = vmatprep.subr.mxu0 %v85
  %1644 = vmatpush1.msra.mxu0 %v84
  %1645 = vmatprep.subr.mxu0 %v81
  %1646 = vmatpush1.msra.mxu0 %v80
  %1647 = vmatprep.subr.mxu0 %v77
  %1648 = vmatpush1.msra.mxu0 %v76
  %1649 = vmatprep.subr.mxu0 %v73
  %1650 = vmatpush1.msra.mxu0 %v72
  %1651 = vmatprep.subr.mxu0 0.0
  %1652 = vmatpush2.msra.mxu0 0.0
  %1653 = vmatprep.subr.mxu0 0.0
  %1654 = vmatpush2.msra.mxu0 0.0
  %1655 = vmatprep.subr.mxu0 0.0
  %1656 = vmatpush2.msra.mxu0 0.0
  %1657 = vmatprep.subr.mxu0 0.0
  %1658 = vmatpush2.msra.mxu0 0.0
  %1659 = vmatprep.subr.mxu0 0.0
  %1660 = vmatpush2.msra.mxu0 0.0
  %1661 = vmatprep.subr.mxu0 0.0
  %1662 = vmatpush2.msra.mxu0 0.0
  %1663 = vmatprep.subr.mxu0 0.0
  %1664 = vmatpush2.msra.mxu0 0.0
  %1665 = vmatprep.subr.mxu0 0.0
  %1666 = vmatpush2.msra.mxu0 0.0
  %1667 = vmatprep.subr.mxu0 0.0
  %1668 = vmatpush2.msra.mxu0 0.0
  %1669 = vmatprep.subr.mxu0 0.0
  %1670 = vmatpush2.msra.mxu0 0.0
  %1671 = vmatprep.subr.mxu0 0.0
  %1672 = vmatpush2.msra.mxu0 0.0
  %1673 = vmatprep.subr.mxu0 0.0
  %1674 = vmatpush2.msra.mxu0 0.0
  %1675 = vmatprep.subr.mxu0 0.0
  %1676 = vmatpush2.msra.mxu0 0.0
  %1677 = vmatprep.subr.mxu0 0.0
  %1678 = vmatpush2.msra.mxu0 0.0
  %1679 = vmatprep.subr.mxu0 0.0
  %1680 = vmatpush2.msra.mxu0 0.0
  %1681 = vmatprep.subr.mxu0 0.0
  %1682 = vmatpush2.msra.mxu0 0.0
  %1683 = vmatprep.mubr.f32.mxu0 0.0
  %1684 = vmatmul.mubr.f32.gmra.mxu0 %v1538
  %v1685 = vpop.f32.mrf.mxu0
  %v1686 = vadd.f32 %v1526, %v1685
  %v1687 = vpop.f32.mrf.mxu0
  %v1688 = vadd.f32 %v1533, %v1687
  %1689 = vmatprep.mubr.f32.mxu0 0.0
  %1690 = vmatmul.mubr.f32.gmra.mxu0 %v1540
  %v1691 = vpop.f32.mrf.mxu0
  %v1692 = vadd.f32 %v1526, %v1691
  %v1693 = vpop.f32.mrf.mxu0
  %v1694 = vadd.f32 %v1533, %v1693
  %1695 = vdwg.mxu0
  %vm1696 = vcmp.gt.f32.partialorder %v1609, 0.0
  %vm1697 = vcmp.gt.f32.partialorder %v1611, 0.0
  %vm1698 = vcmp.gt.f32.partialorder %v1686, 0.0
  %vm1699 = vcmp.gt.f32.partialorder %v1688, 0.0
  %vm1700 = vcmp.gt.f32.partialorder %v1615, 0.0
  %vm1701 = vcmp.gt.f32.partialorder %v1617, 0.0
  %vm1702 = vcmp.gt.f32.partialorder %v1692, 0.0
  %vm1703 = vcmp.gt.f32.partialorder %v1694, 0.0
  %v1704 = vmul.f32 %v1609, 0.2
  %v1705 = vmul.f32 %v1611, 0.2
  %v1706 = vmul.f32 %v1686, 0.2
  %v1707 = vmul.f32 %v1688, 0.2
  %v1708 = vmul.f32 %v1615, 0.2
  %v1709 = vmul.f32 %v1617, 0.2
  %v1710 = vmul.f32 %v1692, 0.2
  %v1711 = vmul.f32 %v1694, 0.2
  %v1712 = vsel %vm1696, %v1609, %v1704
  %v1713 = vsel %vm1697, %v1611, %v1705
  %v1714 = vsel %vm1698, %v1686, %v1706
  %v1715 = vsel %vm1699, %v1688, %v1707
  %v1716 = vsel %vm1700, %v1615, %v1708
  %v1717 = vsel %vm1701, %v1617, %v1709
  %v1718 = vsel %vm1702, %v1692, %v1710
  %v1719 = vsel %vm1703, %v1694, %v1711
  %1720 = vmatprep.subr.mxu0 0.0
  %1721 = vmatpush1.msra.mxu0 %v1201
  %1722 = vmatprep.subr.mxu0 0.0
  %1723 = vmatpush1.msra.mxu0 %v1200
  %1724 = vmatprep.subr.mxu0 0.0
  %1725 = vmatpush1.msra.mxu0 %v1199
  %1726 = vmatprep.subr.mxu0 0.0
  %1727 = vmatpush1.msra.mxu0 %v1198
  %1728 = vmatprep.subr.mxu0 0.0
  %1729 = vmatpush1.msra.mxu0 %v1197
  %1730 = vmatprep.subr.mxu0 0.0
  %1731 = vmatpush1.msra.mxu0 %v1196
  %1732 = vmatprep.subr.mxu0 0.0
  %1733 = vmatpush1.msra.mxu0 %v1195
  %1734 = vmatprep.subr.mxu0 0.0
  %1735 = vmatpush1.msra.mxu0 %v1194
  %1736 = vmatprep.subr.mxu0 0.0
  %1737 = vmatpush1.msra.mxu0 %v1193
  %1738 = vmatprep.subr.mxu0 0.0
  %1739 = vmatpush1.msra.mxu0 %v1192
  %1740 = vmatprep.subr.mxu0 0.0
  %1741 = vmatpush1.msra.mxu0 %v1191
  %1742 = vmatprep.subr.mxu0 0.0
  %1743 = vmatpush1.msra.mxu0 %v1190
  %1744 = vmatprep.subr.mxu0 0.0
  %1745 = vmatpush1.msra.mxu0 %v1189
  %1746 = vmatprep.subr.mxu0 0.0
  %1747 = vmatpush1.msra.mxu0 %v1188
  %1748 = vmatprep.subr.mxu0 0.0
  %1749 = vmatpush1.msra.mxu0 %v1187
  %1750 = vmatprep.subr.mxu0 0.0
  %1751 = vmatpush1.msra.mxu0 %v1186
  %1752 = vmatprep.subr.mxu0 0.0
  %1753 = vmatpush2.msra.mxu0 0.0
  %1754 = vmatprep.subr.mxu0 0.0
  %1755 = vmatpush2.msra.mxu0 0.0
  %1756 = vmatprep.subr.mxu0 0.0
  %1757 = vmatpush2.msra.mxu0 0.0
  %1758 = vmatprep.subr.mxu0 0.0
  %1759 = vmatpush2.msra.mxu0 0.0
  %1760 = vmatprep.subr.mxu0 0.0
  %1761 = vmatpush2.msra.mxu0 0.0
  %1762 = vmatprep.subr.mxu0 0.0
  %1763 = vmatpush2.msra.mxu0 0.0
  %1764 = vmatprep.subr.mxu0 0.0
  %1765 = vmatpush2.msra.mxu0 0.0
  %1766 = vmatprep.subr.mxu0 0.0
  %1767 = vmatpush2.msra.mxu0 0.0
  %1768 = vmatprep.subr.mxu0 0.0
  %1769 = vmatpush2.msra.mxu0 0.0
  %1770 = vmatprep.subr.mxu0 0.0
  %1771 = vmatpush2.msra.mxu0 0.0
  %1772 = vmatprep.subr.mxu0 0.0
  %1773 = vmatpush2.msra.mxu0 0.0
  %1774 = vmatprep.subr.mxu0 0.0
  %1775 = vmatpush2.msra.mxu0 0.0
  %1776 = vmatprep.subr.mxu0 0.0
  %1777 = vmatpush2.msra.mxu0 0.0
  %1778 = vmatprep.subr.mxu0 0.0
  %1779 = vmatpush2.msra.mxu0 0.0
  %1780 = vmatprep.subr.mxu0 0.0
  %1781 = vmatpush2.msra.mxu0 0.0
  %1782 = vmatprep.subr.mxu0 0.0
  %1783 = vmatpush2.msra.mxu0 0.0
  %1784 = vmatprep.mubr.f32.mxu0 0.0
  %1785 = vmatmul.mubr.f32.gmra.mxu0 %v1712
  %v1786 = vpop.f32.mrf.mxu0
  %v1787 = vadd.f32 %v68, %v1786
  %v1788 = vpop.f32.mrf.mxu0
  %1789 = vmatprep.mubr.f32.mxu0 0.0
  %1790 = vmatmul.mubr.f32.gmra.mxu0 %v1716
  %v1791 = vpop.f32.mrf.mxu0
  %v1792 = vadd.f32 %v69, %v1791
  %v1793 = vpop.f32.mrf.mxu0
  %1794 = vdwg.mxu0
  %v1795 = vsel %vm720, %v1787, -inf
  %1796 = vmax.xlane.f32.xlu0 %v1795
  %v1797 = vpop.xlane.xlu0 %1796
  %v1798 = vsel %vm720, %v1792, -inf
  %1799 = vmax.xlane.f32.xlu0 %v1798
  %v1800 = vpop.xlane.xlu0 %1799
  %v1801 = vsub.f32 %v1787, %v1797
  %v1802 = vsub.f32 %v1792, %v1800
  %v1803 = vmul.f32 %v1801, 1.442695
  %v1804 = vpow.pop %v1803
  %v1805 = vmul.f32 %v1802, 1.442695
  %v1806 = vpow.pop %v1805
  %v1807 = vsel %vm720, %v1804, 0.0
  %1808 = vadd.xlane.f32.xlu0 %v1807
  %v1809 = vpop.xlane.xlu0 %1808
  %v1810 = vsel %vm720, %v1806, 0.0
  %1811 = vadd.xlane.f32.xlu0 %v1810
  %v1812 = vpop.xlane.xlu0 %1811
  %v1813 = vmax.f32 %v1809, 1e-30
  %v1814 = vmax.f32 %v1812, 1e-30
  %v1815 = vrcp.pop %v1813
  %v1816 = vmul.f32 %v1804, %v1815
  %v1817 = vrcp.pop %v1814
  %v1818 = vmul.f32 %v1806, %v1817
  %1819 = vmatprep.subr.mxu0 0.0
  %1820 = vmatpush1.msra.mxu0 %v1217
  %1821 = vmatprep.subr.mxu0 0.0
  %1822 = vmatpush1.msra.mxu0 %v1216
  %1823 = vmatprep.subr.mxu0 0.0
  %1824 = vmatpush1.msra.mxu0 %v1215
  %1825 = vmatprep.subr.mxu0 0.0
  %1826 = vmatpush1.msra.mxu0 %v1214
  %1827 = vmatprep.subr.mxu0 0.0
  %1828 = vmatpush1.msra.mxu0 %v1213
  %1829 = vmatprep.subr.mxu0 0.0
  %1830 = vmatpush1.msra.mxu0 %v1212
  %1831 = vmatprep.subr.mxu0 0.0
  %1832 = vmatpush1.msra.mxu0 %v1211
  %1833 = vmatprep.subr.mxu0 0.0
  %1834 = vmatpush1.msra.mxu0 %v1210
  %1835 = vmatprep.subr.mxu0 0.0
  %1836 = vmatpush1.msra.mxu0 %v1209
  %1837 = vmatprep.subr.mxu0 0.0
  %1838 = vmatpush1.msra.mxu0 %v1208
  %1839 = vmatprep.subr.mxu0 0.0
  %1840 = vmatpush1.msra.mxu0 %v1207
  %1841 = vmatprep.subr.mxu0 0.0
  %1842 = vmatpush1.msra.mxu0 %v1206
  %1843 = vmatprep.subr.mxu0 0.0
  %1844 = vmatpush1.msra.mxu0 %v1205
  %1845 = vmatprep.subr.mxu0 0.0
  %1846 = vmatpush1.msra.mxu0 %v1204
  %1847 = vmatprep.subr.mxu0 0.0
  %1848 = vmatpush1.msra.mxu0 %v1203
  %1849 = vmatprep.subr.mxu0 0.0
  %1850 = vmatpush1.msra.mxu0 %v1202
  %1851 = vmatprep.subr.mxu0 0.0
  %1852 = vmatpush2.msra.mxu0 0.0
  %1853 = vmatprep.subr.mxu0 0.0
  %1854 = vmatpush2.msra.mxu0 0.0
  %1855 = vmatprep.subr.mxu0 0.0
  %1856 = vmatpush2.msra.mxu0 0.0
  %1857 = vmatprep.subr.mxu0 0.0
  %1858 = vmatpush2.msra.mxu0 0.0
  %1859 = vmatprep.subr.mxu0 0.0
  %1860 = vmatpush2.msra.mxu0 0.0
  %1861 = vmatprep.subr.mxu0 0.0
  %1862 = vmatpush2.msra.mxu0 0.0
  %1863 = vmatprep.subr.mxu0 0.0
  %1864 = vmatpush2.msra.mxu0 0.0
  %1865 = vmatprep.subr.mxu0 0.0
  %1866 = vmatpush2.msra.mxu0 0.0
  %1867 = vmatprep.subr.mxu0 0.0
  %1868 = vmatpush2.msra.mxu0 0.0
  %1869 = vmatprep.subr.mxu0 0.0
  %1870 = vmatpush2.msra.mxu0 0.0
  %1871 = vmatprep.subr.mxu0 0.0
  %1872 = vmatpush2.msra.mxu0 0.0
  %1873 = vmatprep.subr.mxu0 0.0
  %1874 = vmatpush2.msra.mxu0 0.0
  %1875 = vmatprep.subr.mxu0 0.0
  %1876 = vmatpush2.msra.mxu0 0.0
  %1877 = vmatprep.subr.mxu0 0.0
  %1878 = vmatpush2.msra.mxu0 0.0
  %1879 = vmatprep.subr.mxu0 0.0
  %1880 = vmatpush2.msra.mxu0 0.0
  %1881 = vmatprep.subr.mxu0 0.0
  %1882 = vmatpush2.msra.mxu0 0.0
  %1883 = vmatprep.mubr.f32.mxu0 0.0
  %1884 = vmatmul.mubr.f32.gmra.mxu0 %v1713
  %v1885 = vpop.f32.mrf.mxu0
  %v1886 = vadd.f32 %v68, %v1885
  %v1887 = vpop.f32.mrf.mxu0
  %1888 = vmatprep.mubr.f32.mxu0 0.0
  %1889 = vmatmul.mubr.f32.gmra.mxu0 %v1717
  %v1890 = vpop.f32.mrf.mxu0
  %v1891 = vadd.f32 %v69, %v1890
  %v1892 = vpop.f32.mrf.mxu0
  %1893 = vdwg.mxu0
  %v1894 = vsel %vm720, %v1886, -inf
  %1895 = vmax.xlane.f32.xlu0 %v1894
  %v1896 = vpop.xlane.xlu0 %1895
  %v1897 = vsel %vm720, %v1891, -inf
  %1898 = vmax.xlane.f32.xlu0 %v1897
  %v1899 = vpop.xlane.xlu0 %1898
  %v1900 = vsub.f32 %v1886, %v1896
  %v1901 = vsub.f32 %v1891, %v1899
  %v1902 = vmul.f32 %v1900, 1.442695
  %v1903 = vpow.pop %v1902
  %v1904 = vmul.f32 %v1901, 1.442695
  %v1905 = vpow.pop %v1904
  %v1906 = vsel %vm720, %v1903, 0.0
  %1907 = vadd.xlane.f32.xlu0 %v1906
  %v1908 = vpop.xlane.xlu0 %1907
  %v1909 = vsel %vm720, %v1905, 0.0
  %1910 = vadd.xlane.f32.xlu0 %v1909
  %v1911 = vpop.xlane.xlu0 %1910
  %v1912 = vmax.f32 %v1908, 1e-30
  %v1913 = vmax.f32 %v1911, 1e-30
  %v1914 = vrcp.pop %v1912
  %v1915 = vmul.f32 %v1903, %v1914
  %v1916 = vrcp.pop %v1913
  %v1917 = vmul.f32 %v1905, %v1916
  %1918 = vmatprep.subr.mxu0 0.0
  %1919 = vmatpush1.msra.mxu0 %v1233
  %1920 = vmatprep.subr.mxu0 0.0
  %1921 = vmatpush1.msra.mxu0 %v1232
  %1922 = vmatprep.subr.mxu0 0.0
  %1923 = vmatpush1.msra.mxu0 %v1231
  %1924 = vmatprep.subr.mxu0 0.0
  %1925 = vmatpush1.msra.mxu0 %v1230
  %1926 = vmatprep.subr.mxu0 0.0
  %1927 = vmatpush1.msra.mxu0 %v1229
  %1928 = vmatprep.subr.mxu0 0.0
  %1929 = vmatpush1.msra.mxu0 %v1228
  %1930 = vmatprep.subr.mxu0 0.0
  %1931 = vmatpush1.msra.mxu0 %v1227
  %1932 = vmatprep.subr.mxu0 0.0
  %1933 = vmatpush1.msra.mxu0 %v1226
  %1934 = vmatprep.subr.mxu0 0.0
  %1935 = vmatpush1.msra.mxu0 %v1225
  %1936 = vmatprep.subr.mxu0 0.0
  %1937 = vmatpush1.msra.mxu0 %v1224
  %1938 = vmatprep.subr.mxu0 0.0
  %1939 = vmatpush1.msra.mxu0 %v1223
  %1940 = vmatprep.subr.mxu0 0.0
  %1941 = vmatpush1.msra.mxu0 %v1222
  %1942 = vmatprep.subr.mxu0 0.0
  %1943 = vmatpush1.msra.mxu0 %v1221
  %1944 = vmatprep.subr.mxu0 0.0
  %1945 = vmatpush1.msra.mxu0 %v1220
  %1946 = vmatprep.subr.mxu0 0.0
  %1947 = vmatpush1.msra.mxu0 %v1219
  %1948 = vmatprep.subr.mxu0 0.0
  %1949 = vmatpush1.msra.mxu0 %v1218
  %1950 = vmatprep.subr.mxu0 0.0
  %1951 = vmatpush2.msra.mxu0 0.0
  %1952 = vmatprep.subr.mxu0 0.0
  %1953 = vmatpush2.msra.mxu0 0.0
  %1954 = vmatprep.subr.mxu0 0.0
  %1955 = vmatpush2.msra.mxu0 0.0
  %1956 = vmatprep.subr.mxu0 0.0
  %1957 = vmatpush2.msra.mxu0 0.0
  %1958 = vmatprep.subr.mxu0 0.0
  %1959 = vmatpush2.msra.mxu0 0.0
  %1960 = vmatprep.subr.mxu0 0.0
  %1961 = vmatpush2.msra.mxu0 0.0
  %1962 = vmatprep.subr.mxu0 0.0
  %1963 = vmatpush2.msra.mxu0 0.0
  %1964 = vmatprep.subr.mxu0 0.0
  %1965 = vmatpush2.msra.mxu0 0.0
  %1966 = vmatprep.subr.mxu0 0.0
  %1967 = vmatpush2.msra.mxu0 0.0
  %1968 = vmatprep.subr.mxu0 0.0
  %1969 = vmatpush2.msra.mxu0 0.0
  %1970 = vmatprep.subr.mxu0 0.0
  %1971 = vmatpush2.msra.mxu0 0.0
  %1972 = vmatprep.subr.mxu0 0.0
  %1973 = vmatpush2.msra.mxu0 0.0
  %1974 = vmatprep.subr.mxu0 0.0
  %1975 = vmatpush2.msra.mxu0 0.0
  %1976 = vmatprep.subr.mxu0 0.0
  %1977 = vmatpush2.msra.mxu0 0.0
  %1978 = vmatprep.subr.mxu0 0.0
  %1979 = vmatpush2.msra.mxu0 0.0
  %1980 = vmatprep.subr.mxu0 0.0
  %1981 = vmatpush2.msra.mxu0 0.0
  %1982 = vmatprep.mubr.f32.mxu0 0.0
  %1983 = vmatmul.mubr.f32.gmra.mxu0 %v1714
  %v1984 = vpop.f32.mrf.mxu0
  %v1985 = vadd.f32 %v68, %v1984
  %v1986 = vpop.f32.mrf.mxu0
  %1987 = vmatprep.mubr.f32.mxu0 0.0
  %1988 = vmatmul.mubr.f32.gmra.mxu0 %v1718
  %v1989 = vpop.f32.mrf.mxu0
  %v1990 = vadd.f32 %v69, %v1989
  %v1991 = vpop.f32.mrf.mxu0
  %1992 = vdwg.mxu0
  %v1993 = vsel %vm720, %v1985, -inf
  %1994 = vmax.xlane.f32.xlu0 %v1993
  %v1995 = vpop.xlane.xlu0 %1994
  %v1996 = vsel %vm720, %v1990, -inf
  %1997 = vmax.xlane.f32.xlu0 %v1996
  %v1998 = vpop.xlane.xlu0 %1997
  %v1999 = vsub.f32 %v1985, %v1995
  %v2000 = vsub.f32 %v1990, %v1998
  %v2001 = vmul.f32 %v1999, 1.442695
  %v2002 = vpow.pop %v2001
  %v2003 = vmul.f32 %v2000, 1.442695
  %v2004 = vpow.pop %v2003
  %v2005 = vsel %vm720, %v2002, 0.0
  %2006 = vadd.xlane.f32.xlu0 %v2005
  %v2007 = vpop.xlane.xlu0 %2006
  %v2008 = vsel %vm720, %v2004, 0.0
  %2009 = vadd.xlane.f32.xlu0 %v2008
  %v2010 = vpop.xlane.xlu0 %2009
  %v2011 = vmax.f32 %v2007, 1e-30
  %v2012 = vmax.f32 %v2010, 1e-30
  %v2013 = vrcp.pop %v2011
  %v2014 = vmul.f32 %v2002, %v2013
  %v2015 = vrcp.pop %v2012
  %v2016 = vmul.f32 %v2004, %v2015
  %2017 = vmatprep.subr.mxu0 0.0
  %2018 = vmatpush1.msra.mxu0 %v1249
  %2019 = vmatprep.subr.mxu0 0.0
  %2020 = vmatpush1.msra.mxu0 %v1248
  %2021 = vmatprep.subr.mxu0 0.0
  %2022 = vmatpush1.msra.mxu0 %v1247
  %2023 = vmatprep.subr.mxu0 0.0
  %2024 = vmatpush1.msra.mxu0 %v1246
  %2025 = vmatprep.subr.mxu0 0.0
  %2026 = vmatpush1.msra.mxu0 %v1245
  %2027 = vmatprep.subr.mxu0 0.0
  %2028 = vmatpush1.msra.mxu0 %v1244
  %2029 = vmatprep.subr.mxu0 0.0
  %2030 = vmatpush1.msra.mxu0 %v1243
  %2031 = vmatprep.subr.mxu0 0.0
  %2032 = vmatpush1.msra.mxu0 %v1242
  %2033 = vmatprep.subr.mxu0 0.0
  %2034 = vmatpush1.msra.mxu0 %v1241
  %2035 = vmatprep.subr.mxu0 0.0
  %2036 = vmatpush1.msra.mxu0 %v1240
  %2037 = vmatprep.subr.mxu0 0.0
  %2038 = vmatpush1.msra.mxu0 %v1239
  %2039 = vmatprep.subr.mxu0 0.0
  %2040 = vmatpush1.msra.mxu0 %v1238
  %2041 = vmatprep.subr.mxu0 0.0
  %2042 = vmatpush1.msra.mxu0 %v1237
  %2043 = vmatprep.subr.mxu0 0.0
  %2044 = vmatpush1.msra.mxu0 %v1236
  %2045 = vmatprep.subr.mxu0 0.0
  %2046 = vmatpush1.msra.mxu0 %v1235
  %2047 = vmatprep.subr.mxu0 0.0
  %2048 = vmatpush1.msra.mxu0 %v1234
  %2049 = vmatprep.subr.mxu0 0.0
  %2050 = vmatpush2.msra.mxu0 0.0
  %2051 = vmatprep.subr.mxu0 0.0
  %2052 = vmatpush2.msra.mxu0 0.0
  %2053 = vmatprep.subr.mxu0 0.0
  %2054 = vmatpush2.msra.mxu0 0.0
  %2055 = vmatprep.subr.mxu0 0.0
  %2056 = vmatpush2.msra.mxu0 0.0
  %2057 = vmatprep.subr.mxu0 0.0
  %2058 = vmatpush2.msra.mxu0 0.0
  %2059 = vmatprep.subr.mxu0 0.0
  %2060 = vmatpush2.msra.mxu0 0.0
  %2061 = vmatprep.subr.mxu0 0.0
  %2062 = vmatpush2.msra.mxu0 0.0
  %2063 = vmatprep.subr.mxu0 0.0
  %2064 = vmatpush2.msra.mxu0 0.0
  %2065 = vmatprep.subr.mxu0 0.0
  %2066 = vmatpush2.msra.mxu0 0.0
  %2067 = vmatprep.subr.mxu0 0.0
  %2068 = vmatpush2.msra.mxu0 0.0
  %2069 = vmatprep.subr.mxu0 0.0
  %2070 = vmatpush2.msra.mxu0 0.0
  %2071 = vmatprep.subr.mxu0 0.0
  %2072 = vmatpush2.msra.mxu0 0.0
  %2073 = vmatprep.subr.mxu0 0.0
  %2074 = vmatpush2.msra.mxu0 0.0
  %2075 = vmatprep.subr.mxu0 0.0
  %2076 = vmatpush2.msra.mxu0 0.0
  %2077 = vmatprep.subr.mxu0 0.0
  %2078 = vmatpush2.msra.mxu0 0.0
  %2079 = vmatprep.subr.mxu0 0.0
  %2080 = vmatpush2.msra.mxu0 0.0
  %2081 = vmatprep.mubr.f32.mxu0 0.0
  %2082 = vmatmul.mubr.f32.gmra.mxu0 %v1715
  %v2083 = vpop.f32.mrf.mxu0
  %v2084 = vadd.f32 %v68, %v2083
  %v2085 = vpop.f32.mrf.mxu0
  %2086 = vmatprep.mubr.f32.mxu0 0.0
  %2087 = vmatmul.mubr.f32.gmra.mxu0 %v1719
  %v2088 = vpop.f32.mrf.mxu0
  %v2089 = vadd.f32 %v69, %v2088
  %v2090 = vpop.f32.mrf.mxu0
  %2091 = vdwg.mxu0
  %v2092 = vsel %vm720, %v2084, -inf
  %2093 = vmax.xlane.f32.xlu0 %v2092
  %v2094 = vpop.xlane.xlu0 %2093
  %v2095 = vsel %vm720, %v2089, -inf
  %2096 = vmax.xlane.f32.xlu0 %v2095
  %v2097 = vpop.xlane.xlu0 %2096
  %v2098 = vsub.f32 %v2084, %v2094
  %v2099 = vsub.f32 %v2089, %v2097
  %v2100 = vmul.f32 %v2098, 1.442695
  %v2101 = vpow.pop %v2100
  %v2102 = vmul.f32 %v2099, 1.442695
  %v2103 = vpow.pop %v2102
  %v2104 = vsel %vm720, %v2101, 0.0
  %2105 = vadd.xlane.f32.xlu0 %v2104
  %v2106 = vpop.xlane.xlu0 %2105
  %v2107 = vsel %vm720, %v2103, 0.0
  %2108 = vadd.xlane.f32.xlu0 %v2107
  %v2109 = vpop.xlane.xlu0 %2108
  %v2110 = vmax.f32 %v2106, 1e-30
  %v2111 = vmax.f32 %v2109, 1e-30
  %v2112 = vrcp.pop %v2110
  %v2113 = vmul.f32 %v2101, %v2112
  %v2114 = vrcp.pop %v2111
  %v2115 = vmul.f32 %v2103, %v2114
  %2118 = vrot.lane.b32.xlu0 %v1915, 16
  %v2119 = vpop.permute.xlu0 %2118
  %2120 = vrot.lane.b32.xlu0 %v1917, 16
  %v2121 = vpop.permute.xlu0 %2120
  %2126 = vrot.lane.b32.xlu0 %v2014, 32
  %v2127 = vpop.permute.xlu0 %2126
  %2128 = vrot.lane.b32.xlu0 %v2016, 32
  %v2129 = vpop.permute.xlu0 %2128
  %2134 = vrot.lane.b32.xlu0 %v2113, 48
  %v2135 = vpop.permute.xlu0 %2134
  %2136 = vrot.lane.b32.xlu0 %v2115, 48
  %v2137 = vpop.permute.xlu0 %2136
  %v2140 = vsel %vm720, %v1816, %v2119
  %v2141 = vsel %vm720, %v1818, %v2121
  %v2142 = vsel %vm262, %v2140, %v2127
  %v2143 = vsel %vm262, %v2141, %v2129
  %v2144 = vsel %vm1070, %v2142, %v2135
  %v2145 = vsel %vm1070, %v2143, %v2137
  %v2146 = vmul.f32 %v1330, %v94
  %v2147 = vmul.f32 %v1335, %v95
  %v2148 = vmul.f32 %v1330, %v96
  %v2149 = vmul.f32 %v1335, %v97
  %v2150 = vmul.f32 %v1330, %v98
  %v2151 = vmul.f32 %v1335, %v99
  %v2152 = vmul.f32 %v1330, %v100
  %v2153 = vmul.f32 %v1335, %v101
  %v2155 = vlaneseq
  %v2156 = vshrl.u32 %v2155, 7
  %v2157 = vsub.s32 0, %v2156
  %v2158 = vrot.slane %v1250, %v2157
  %v2161 = vsel %vm1087, %v2144, 0
  %v2164 = vsel %vm1087, %v2145, 0
  %2166 = vmatprep.subr.mxu0 0.0
  %2167 = vmatpush1.msra.mxu0 0.0
  %2168 = vmatprep.subr.mxu0 0.0
  %2169 = vmatpush1.msra.mxu0 0.0
  %2170 = vmatprep.subr.mxu0 0.0
  %2171 = vmatpush1.msra.mxu0 0.0
  %2172 = vmatprep.subr.mxu0 0.0
  %2173 = vmatpush1.msra.mxu0 0.0
  %2174 = vmatprep.subr.mxu0 0.0
  %2175 = vmatpush1.msra.mxu0 0.0
  %2176 = vmatprep.subr.mxu0 0.0
  %2177 = vmatpush1.msra.mxu0 0.0
  %2178 = vmatprep.subr.mxu0 0.0
  %2179 = vmatpush1.msra.mxu0 0.0
  %2180 = vmatprep.subr.mxu0 0.0
  %2181 = vmatpush1.msra.mxu0 0.0
  %2182 = vmatprep.subr.mxu0 0.0
  %2183 = vmatpush1.msra.mxu0 %v2153
  %2184 = vmatprep.subr.mxu0 0.0
  %2185 = vmatpush1.msra.mxu0 %v2152
  %2186 = vmatprep.subr.mxu0 0.0
  %2187 = vmatpush1.msra.mxu0 %v2151
  %2188 = vmatprep.subr.mxu0 0.0
  %2189 = vmatpush1.msra.mxu0 %v2150
  %2190 = vmatprep.subr.mxu0 0.0
  %2191 = vmatpush1.msra.mxu0 %v2149
  %2192 = vmatprep.subr.mxu0 0.0
  %2193 = vmatpush1.msra.mxu0 %v2148
  %2194 = vmatprep.subr.mxu0 0.0
  %2195 = vmatpush1.msra.mxu0 %v2147
  %2196 = vmatprep.subr.mxu0 0.0
  %2197 = vmatpush1.msra.mxu0 %v2146
  %2198 = vmatprep.subr.mxu0 0.0
  %2199 = vmatpush2.msra.mxu0 0.0
  %2200 = vmatprep.subr.mxu0 0.0
  %2201 = vmatpush2.msra.mxu0 0.0
  %2202 = vmatprep.subr.mxu0 0.0
  %2203 = vmatpush2.msra.mxu0 0.0
  %2204 = vmatprep.subr.mxu0 0.0
  %2205 = vmatpush2.msra.mxu0 0.0
  %2206 = vmatprep.subr.mxu0 0.0
  %2207 = vmatpush2.msra.mxu0 0.0
  %2208 = vmatprep.subr.mxu0 0.0
  %2209 = vmatpush2.msra.mxu0 0.0
  %2210 = vmatprep.subr.mxu0 0.0
  %2211 = vmatpush2.msra.mxu0 0.0
  %2212 = vmatprep.subr.mxu0 0.0
  %2213 = vmatpush2.msra.mxu0 0.0
  %2214 = vmatprep.subr.mxu0 0.0
  %2215 = vmatpush2.msra.mxu0 0.0
  %2216 = vmatprep.subr.mxu0 0.0
  %2217 = vmatpush2.msra.mxu0 0.0
  %2218 = vmatprep.subr.mxu0 0.0
  %2219 = vmatpush2.msra.mxu0 0.0
  %2220 = vmatprep.subr.mxu0 0.0
  %2221 = vmatpush2.msra.mxu0 0.0
  %2222 = vmatprep.subr.mxu0 0.0
  %2223 = vmatpush2.msra.mxu0 0.0
  %2224 = vmatprep.subr.mxu0 0.0
  %2225 = vmatpush2.msra.mxu0 0.0
  %2226 = vmatprep.subr.mxu0 0.0
  %2227 = vmatpush2.msra.mxu0 0.0
  %2228 = vmatprep.subr.mxu0 0.0
  %2229 = vmatpush2.msra.mxu0 0.0
  %2230 = vmatprep.mubr.f32.mxu0 0.0
  %2231 = vmatmul.mubr.f32.gmra.mxu0 %v2161
  %v2232 = vpop.f32.mrf.mxu0
  %v2233 = vadd.f32 %v2158, %v2232
  %v2234 = vpop.f32.mrf.mxu0
  %2235 = vmatprep.mubr.f32.mxu0 0.0
  %2236 = vmatmul.mubr.f32.gmra.mxu0 %v2164
  %v2237 = vpop.f32.mrf.mxu0
  %v2238 = vadd.f32 %v2158, %v2237
  %v2239 = vpop.f32.mrf.mxu0
  %2240 = vdwg.mxu0
  %vm2241 = vcmp.gt.f32.partialorder %v2233, 0.0
  %vm2242 = vcmp.gt.f32.partialorder %v2238, 0.0
  %v2243 = vmin.f32 %v2233, 0.0
  %v2244 = vmin.f32 %v2238, 0.0
  %v2245 = vmul.f32 %v2243, 1.442695
  %v2246 = vpow.pop %v2245
  %v2247 = vmul.f32 %v2244, 1.442695
  %v2248 = vpow.pop %v2247
  %v2249 = vsub.f32 %v2246, 1.0
  %v2250 = vsub.f32 %v2248, 1.0
  %v2251 = vsel %vm2241, %v2233, %v2249
  %v2252 = vsel %vm2242, %v2238, %v2250
  %v2253 = vld [vmem:[%s15] sm:$0xff]
  %v2254 = vld [vmem:[%s15 + $0x8] sm:$0xff]
  %v2255 = vld [vmem:[%s15 + $0x10] sm:$0xff]
  %v2256 = vld [vmem:[%s15 + $0x18] sm:$0xff]
  %v2257 = vld [vmem:[%s16] sm:$0x1]
  %v2258 = vld [vmem:[%s17] sm:$0xff]
  %v2259 = vld [vmem:[%s17 + $0x8] sm:$0xff]
  %v2260 = vld [vmem:[%s17 + $0x10] sm:$0xff]
  %v2261 = vld [vmem:[%s17 + $0x18] sm:$0xff]
  %v2262 = vld [vmem:[%s17 + $0x20] sm:$0xff]
  %v2263 = vld [vmem:[%s17 + $0x28] sm:$0xff]
  %v2264 = vld [vmem:[%s17 + $0x30] sm:$0xff]
  %v2265 = vld [vmem:[%s17 + $0x38] sm:$0xff]
  %v2266 = vld [vmem:[%s17 + $0x40] sm:$0xff]
  %v2267 = vld [vmem:[%s17 + $0x48] sm:$0xff]
  %v2268 = vld [vmem:[%s17 + $0x50] sm:$0xff]
  %v2269 = vld [vmem:[%s17 + $0x58] sm:$0xff]
  %v2270 = vld [vmem:[%s17 + $0x60] sm:$0xff]
  %v2271 = vld [vmem:[%s17 + $0x68] sm:$0xff]
  %v2272 = vld [vmem:[%s17 + $0x70] sm:$0xff]
  %v2273 = vld [vmem:[%s17 + $0x78] sm:$0xff]
  %v2274 = vld [vmem:[%s18] sm:$0x1]
  %v2276 = vlaneseq
  %v2277 = vshrl.u32 %v2276, 7
  %v2278 = vsub.s32 0, %v2277
  %v2279 = vrot.slane %v2257, %v2278
  %v2282 = vsel %vm262, %v2251, 0
  %v2285 = vsel %vm262, %v2252, 0
  %2287 = vmatprep.subr.mxu0 0.0
  %2288 = vmatpush1.msra.mxu0 0.0
  %2289 = vmatprep.subr.mxu0 0.0
  %2290 = vmatpush1.msra.mxu0 0.0
  %2291 = vmatprep.subr.mxu0 0.0
  %2292 = vmatpush1.msra.mxu0 0.0
  %2293 = vmatprep.subr.mxu0 0.0
  %2294 = vmatpush1.msra.mxu0 0.0
  %2295 = vmatprep.subr.mxu0 0.0
  %2296 = vmatpush1.msra.mxu0 0.0
  %2297 = vmatprep.subr.mxu0 0.0
  %2298 = vmatpush1.msra.mxu0 0.0
  %2299 = vmatprep.subr.mxu0 0.0
  %2300 = vmatpush1.msra.mxu0 0.0
  %2301 = vmatprep.subr.mxu0 0.0
  %2302 = vmatpush1.msra.mxu0 0.0
  %2303 = vmatprep.subr.mxu0 0.0
  %2304 = vmatpush1.msra.mxu0 0.0
  %2305 = vmatprep.subr.mxu0 0.0
  %2306 = vmatpush1.msra.mxu0 0.0
  %2307 = vmatprep.subr.mxu0 0.0
  %2308 = vmatpush1.msra.mxu0 0.0
  %2309 = vmatprep.subr.mxu0 0.0
  %2310 = vmatpush1.msra.mxu0 0.0
  %2311 = vmatprep.subr.mxu0 0.0
  %2312 = vmatpush1.msra.mxu0 %v2256
  %2313 = vmatprep.subr.mxu0 0.0
  %2314 = vmatpush1.msra.mxu0 %v2255
  %2315 = vmatprep.subr.mxu0 0.0
  %2316 = vmatpush1.msra.mxu0 %v2254
  %2317 = vmatprep.subr.mxu0 0.0
  %2318 = vmatpush1.msra.mxu0 %v2253
  %2319 = vmatprep.subr.mxu0 0.0
  %2320 = vmatpush2.msra.mxu0 0.0
  %2321 = vmatprep.subr.mxu0 0.0
  %2322 = vmatpush2.msra.mxu0 0.0
  %2323 = vmatprep.subr.mxu0 0.0
  %2324 = vmatpush2.msra.mxu0 0.0
  %2325 = vmatprep.subr.mxu0 0.0
  %2326 = vmatpush2.msra.mxu0 0.0
  %2327 = vmatprep.subr.mxu0 0.0
  %2328 = vmatpush2.msra.mxu0 0.0
  %2329 = vmatprep.subr.mxu0 0.0
  %2330 = vmatpush2.msra.mxu0 0.0
  %2331 = vmatprep.subr.mxu0 0.0
  %2332 = vmatpush2.msra.mxu0 0.0
  %2333 = vmatprep.subr.mxu0 0.0
  %2334 = vmatpush2.msra.mxu0 0.0
  %2335 = vmatprep.subr.mxu0 0.0
  %2336 = vmatpush2.msra.mxu0 0.0
  %2337 = vmatprep.subr.mxu0 0.0
  %2338 = vmatpush2.msra.mxu0 0.0
  %2339 = vmatprep.subr.mxu0 0.0
  %2340 = vmatpush2.msra.mxu0 0.0
  %2341 = vmatprep.subr.mxu0 0.0
  %2342 = vmatpush2.msra.mxu0 0.0
  %2343 = vmatprep.subr.mxu0 0.0
  %2344 = vmatpush2.msra.mxu0 0.0
  %2345 = vmatprep.subr.mxu0 0.0
  %2346 = vmatpush2.msra.mxu0 0.0
  %2347 = vmatprep.subr.mxu0 0.0
  %2348 = vmatpush2.msra.mxu0 0.0
  %2349 = vmatprep.subr.mxu0 0.0
  %2350 = vmatpush2.msra.mxu0 0.0
  %2351 = vmatprep.mubr.f32.mxu0 0.0
  %2352 = vmatmul.mubr.f32.gmra.mxu0 %v2282
  %v2353 = vpop.f32.mrf.mxu0
  %v2354 = vadd.f32 %v2279, %v2353
  %v2355 = vpop.f32.mrf.mxu0
  %2356 = vmatprep.mubr.f32.mxu0 0.0
  %2357 = vmatmul.mubr.f32.gmra.mxu0 %v2285
  %v2358 = vpop.f32.mrf.mxu0
  %v2359 = vadd.f32 %v2279, %v2358
  %v2360 = vpop.f32.mrf.mxu0
  %2361 = vdwg.mxu0
  %v2363 = vsel %vm180, %v2354, 0
  %v2366 = vsel %vm180, %v2359, 0
  %2368 = vmatprep.subr.mxu0 0.0
  %2369 = vmatpush1.msra.mxu0 0.0
  %2370 = vmatprep.subr.mxu0 0.0
  %2371 = vmatpush1.msra.mxu0 0.0
  %2372 = vmatprep.subr.mxu0 0.0
  %2373 = vmatpush1.msra.mxu0 0.0
  %2374 = vmatprep.subr.mxu0 0.0
  %2375 = vmatpush1.msra.mxu0 0.0
  %2376 = vmatprep.subr.mxu0 0.0
  %2377 = vmatpush1.msra.mxu0 0.0
  %2378 = vmatprep.subr.mxu0 0.0
  %2379 = vmatpush1.msra.mxu0 0.0
  %2380 = vmatprep.subr.mxu0 0.0
  %2381 = vmatpush1.msra.mxu0 0.0
  %2382 = vmatprep.subr.mxu0 0.0
  %2383 = vmatpush1.msra.mxu0 0.0
  %2384 = vmatprep.subr.mxu0 0.0
  %2385 = vmatpush1.msra.mxu0 0.0
  %2386 = vmatprep.subr.mxu0 0.0
  %2387 = vmatpush1.msra.mxu0 0.0
  %2388 = vmatprep.subr.mxu0 0.0
  %2389 = vmatpush1.msra.mxu0 0.0
  %2390 = vmatprep.subr.mxu0 0.0
  %2391 = vmatpush1.msra.mxu0 0.0
  %2392 = vmatprep.subr.mxu0 0.0
  %2393 = vmatpush1.msra.mxu0 0.0
  %2394 = vmatprep.subr.mxu0 0.0
  %2395 = vmatpush1.msra.mxu0 0.0
  %2396 = vmatprep.subr.mxu0 0.0
  %2397 = vmatpush1.msra.mxu0 0.0
  %2398 = vmatprep.subr.mxu0 0.0
  %2399 = vmatpush1.msra.mxu0 %v102
  %2400 = vmatprep.subr.mxu0 0.0
  %2401 = vmatpush2.msra.mxu0 0.0
  %2402 = vmatprep.subr.mxu0 0.0
  %2403 = vmatpush2.msra.mxu0 0.0
  %2404 = vmatprep.subr.mxu0 0.0
  %2405 = vmatpush2.msra.mxu0 0.0
  %2406 = vmatprep.subr.mxu0 0.0
  %2407 = vmatpush2.msra.mxu0 0.0
  %2408 = vmatprep.subr.mxu0 0.0
  %2409 = vmatpush2.msra.mxu0 0.0
  %2410 = vmatprep.subr.mxu0 0.0
  %2411 = vmatpush2.msra.mxu0 0.0
  %2412 = vmatprep.subr.mxu0 0.0
  %2413 = vmatpush2.msra.mxu0 0.0
  %2414 = vmatprep.subr.mxu0 0.0
  %2415 = vmatpush2.msra.mxu0 0.0
  %2416 = vmatprep.subr.mxu0 0.0
  %2417 = vmatpush2.msra.mxu0 0.0
  %2418 = vmatprep.subr.mxu0 0.0
  %2419 = vmatpush2.msra.mxu0 0.0
  %2420 = vmatprep.subr.mxu0 0.0
  %2421 = vmatpush2.msra.mxu0 0.0
  %2422 = vmatprep.subr.mxu0 0.0
  %2423 = vmatpush2.msra.mxu0 0.0
  %2424 = vmatprep.subr.mxu0 0.0
  %2425 = vmatpush2.msra.mxu0 0.0
  %2426 = vmatprep.subr.mxu0 0.0
  %2427 = vmatpush2.msra.mxu0 0.0
  %2428 = vmatprep.subr.mxu0 0.0
  %2429 = vmatpush2.msra.mxu0 0.0
  %2430 = vmatprep.subr.mxu0 0.0
  %2431 = vmatpush2.msra.mxu0 0.0
  %2432 = vmatprep.mubr.f32.mxu0 0.0
  %2433 = vmatmul.mubr.f32.gmra.mxu0 %v2363
  %v2434 = vpop.f32.mrf.mxu0
  %v2435 = vadd.f32 0.0, %v2434
  %v2436 = vpop.f32.mrf.mxu0
  %2437 = vmatprep.mubr.f32.mxu0 0.0
  %2438 = vmatmul.mubr.f32.gmra.mxu0 %v2366
  %v2439 = vpop.f32.mrf.mxu0
  %v2440 = vadd.f32 0.0, %v2439
  %v2441 = vpop.f32.mrf.mxu0
  %2442 = vdwg.mxu0
  %v2443 = vmul.f32 %v2435, %v103
  %v2444 = vmul.f32 %v2440, %v104
  %v2445 = vadd.f32 %v2443, %v2444
  %v2446 = vrot.slane %v2445, 4
  %v2447 = vadd.f32 %v2445, %v2446
  %v2448 = vrot.slane %v2447, 2
  %v2449 = vadd.f32 %v2447, %v2448
  %v2450 = vrot.slane %v2449, 1
  %v2451 = vadd.f32 %v2449, %v2450
  %2452 = vrot.lane.b32.xlu0 %v2354, 120
  %v2453 = vpop.permute.xlu0 %2452
  %2454 = vrot.lane.b32.xlu0 %v2359, 120
  %v2455 = vpop.permute.xlu0 %2454
  %v2456 = vsel %vm180, %v2453, 0
  %v2458 = vsel %vm180, %v2455, 0
  %2460 = vmatprep.subr.mxu0 0.0
  %2461 = vmatpush1.msra.mxu0 0.0
  %2462 = vmatprep.subr.mxu0 0.0
  %2463 = vmatpush1.msra.mxu0 0.0
  %2464 = vmatprep.subr.mxu0 0.0
  %2465 = vmatpush1.msra.mxu0 0.0
  %2466 = vmatprep.subr.mxu0 0.0
  %2467 = vmatpush1.msra.mxu0 0.0
  %2468 = vmatprep.subr.mxu0 0.0
  %2469 = vmatpush1.msra.mxu0 0.0
  %2470 = vmatprep.subr.mxu0 0.0
  %2471 = vmatpush1.msra.mxu0 0.0
  %2472 = vmatprep.subr.mxu0 0.0
  %2473 = vmatpush1.msra.mxu0 0.0
  %2474 = vmatprep.subr.mxu0 0.0
  %2475 = vmatpush1.msra.mxu0 0.0
  %2476 = vmatprep.subr.mxu0 0.0
  %2477 = vmatpush1.msra.mxu0 0.0
  %2478 = vmatprep.subr.mxu0 0.0
  %2479 = vmatpush1.msra.mxu0 0.0
  %2480 = vmatprep.subr.mxu0 0.0
  %2481 = vmatpush1.msra.mxu0 0.0
  %2482 = vmatprep.subr.mxu0 0.0
  %2483 = vmatpush1.msra.mxu0 0.0
  %2484 = vmatprep.subr.mxu0 0.0
  %2485 = vmatpush1.msra.mxu0 0.0
  %2486 = vmatprep.subr.mxu0 0.0
  %2487 = vmatpush1.msra.mxu0 0.0
  %2488 = vmatprep.subr.mxu0 0.0
  %2489 = vmatpush1.msra.mxu0 0.0
  %2490 = vmatprep.subr.mxu0 0.0
  %2491 = vmatpush1.msra.mxu0 %v102
  %2492 = vmatprep.subr.mxu0 0.0
  %2493 = vmatpush2.msra.mxu0 0.0
  %2494 = vmatprep.subr.mxu0 0.0
  %2495 = vmatpush2.msra.mxu0 0.0
  %2496 = vmatprep.subr.mxu0 0.0
  %2497 = vmatpush2.msra.mxu0 0.0
  %2498 = vmatprep.subr.mxu0 0.0
  %2499 = vmatpush2.msra.mxu0 0.0
  %2500 = vmatprep.subr.mxu0 0.0
  %2501 = vmatpush2.msra.mxu0 0.0
  %2502 = vmatprep.subr.mxu0 0.0
  %2503 = vmatpush2.msra.mxu0 0.0
  %2504 = vmatprep.subr.mxu0 0.0
  %2505 = vmatpush2.msra.mxu0 0.0
  %2506 = vmatprep.subr.mxu0 0.0
  %2507 = vmatpush2.msra.mxu0 0.0
  %2508 = vmatprep.subr.mxu0 0.0
  %2509 = vmatpush2.msra.mxu0 0.0
  %2510 = vmatprep.subr.mxu0 0.0
  %2511 = vmatpush2.msra.mxu0 0.0
  %2512 = vmatprep.subr.mxu0 0.0
  %2513 = vmatpush2.msra.mxu0 0.0
  %2514 = vmatprep.subr.mxu0 0.0
  %2515 = vmatpush2.msra.mxu0 0.0
  %2516 = vmatprep.subr.mxu0 0.0
  %2517 = vmatpush2.msra.mxu0 0.0
  %2518 = vmatprep.subr.mxu0 0.0
  %2519 = vmatpush2.msra.mxu0 0.0
  %2520 = vmatprep.subr.mxu0 0.0
  %2521 = vmatpush2.msra.mxu0 0.0
  %2522 = vmatprep.subr.mxu0 0.0
  %2523 = vmatpush2.msra.mxu0 0.0
  %2524 = vmatprep.mubr.f32.mxu0 0.0
  %2525 = vmatmul.mubr.f32.gmra.mxu0 %v2456
  %v2526 = vpop.f32.mrf.mxu0
  %v2527 = vadd.f32 %v2451, %v2526
  %v2528 = vpop.f32.mrf.mxu0
  %2529 = vmatprep.mubr.f32.mxu0 0.0
  %2530 = vmatmul.mubr.f32.gmra.mxu0 %v2458
  %v2531 = vpop.f32.mrf.mxu0
  %v2532 = vadd.f32 %v2451, %v2531
  %v2533 = vpop.f32.mrf.mxu0
  %2534 = vdwg.mxu0
  %vm2535 = vcmp.gt.f32.partialorder %v2527, 0.0
  %vm2536 = vcmp.gt.f32.partialorder %v2532, 0.0
  %v2537 = vmul.f32 %v2527, 0.2
  %v2538 = vmul.f32 %v2532, 0.2
  %v2539 = vsel %vm2535, %v2527, %v2537
  %v2540 = vsel %vm2536, %v2532, %v2538
  %2541 = vmatprep.subr.mxu0 0.0
  %2542 = vmatpush1.msra.mxu0 %v2273
  %2543 = vmatprep.subr.mxu0 0.0
  %2544 = vmatpush1.msra.mxu0 %v2272
  %2545 = vmatprep.subr.mxu0 0.0
  %2546 = vmatpush1.msra.mxu0 %v2271
  %2547 = vmatprep.subr.mxu0 0.0
  %2548 = vmatpush1.msra.mxu0 %v2270
  %2549 = vmatprep.subr.mxu0 0.0
  %2550 = vmatpush1.msra.mxu0 %v2269
  %2551 = vmatprep.subr.mxu0 0.0
  %2552 = vmatpush1.msra.mxu0 %v2268
  %2553 = vmatprep.subr.mxu0 0.0
  %2554 = vmatpush1.msra.mxu0 %v2267
  %2555 = vmatprep.subr.mxu0 0.0
  %2556 = vmatpush1.msra.mxu0 %v2266
  %2557 = vmatprep.subr.mxu0 0.0
  %2558 = vmatpush1.msra.mxu0 %v2265
  %2559 = vmatprep.subr.mxu0 0.0
  %2560 = vmatpush1.msra.mxu0 %v2264
  %2561 = vmatprep.subr.mxu0 0.0
  %2562 = vmatpush1.msra.mxu0 %v2263
  %2563 = vmatprep.subr.mxu0 0.0
  %2564 = vmatpush1.msra.mxu0 %v2262
  %2565 = vmatprep.subr.mxu0 0.0
  %2566 = vmatpush1.msra.mxu0 %v2261
  %2567 = vmatprep.subr.mxu0 0.0
  %2568 = vmatpush1.msra.mxu0 %v2260
  %2569 = vmatprep.subr.mxu0 0.0
  %2570 = vmatpush1.msra.mxu0 %v2259
  %2571 = vmatprep.subr.mxu0 0.0
  %2572 = vmatpush1.msra.mxu0 %v2258
  %2573 = vmatprep.subr.mxu0 0.0
  %2574 = vmatpush2.msra.mxu0 0.0
  %2575 = vmatprep.subr.mxu0 0.0
  %2576 = vmatpush2.msra.mxu0 0.0
  %2577 = vmatprep.subr.mxu0 0.0
  %2578 = vmatpush2.msra.mxu0 0.0
  %2579 = vmatprep.subr.mxu0 0.0
  %2580 = vmatpush2.msra.mxu0 0.0
  %2581 = vmatprep.subr.mxu0 0.0
  %2582 = vmatpush2.msra.mxu0 0.0
  %2583 = vmatprep.subr.mxu0 0.0
  %2584 = vmatpush2.msra.mxu0 0.0
  %2585 = vmatprep.subr.mxu0 0.0
  %2586 = vmatpush2.msra.mxu0 0.0
  %2587 = vmatprep.subr.mxu0 0.0
  %2588 = vmatpush2.msra.mxu0 0.0
  %2589 = vmatprep.subr.mxu0 0.0
  %2590 = vmatpush2.msra.mxu0 0.0
  %2591 = vmatprep.subr.mxu0 0.0
  %2592 = vmatpush2.msra.mxu0 0.0
  %2593 = vmatprep.subr.mxu0 0.0
  %2594 = vmatpush2.msra.mxu0 0.0
  %2595 = vmatprep.subr.mxu0 0.0
  %2596 = vmatpush2.msra.mxu0 0.0
  %2597 = vmatprep.subr.mxu0 0.0
  %2598 = vmatpush2.msra.mxu0 0.0
  %2599 = vmatprep.subr.mxu0 0.0
  %2600 = vmatpush2.msra.mxu0 0.0
  %2601 = vmatprep.subr.mxu0 0.0
  %2602 = vmatpush2.msra.mxu0 0.0
  %2603 = vmatprep.subr.mxu0 0.0
  %2604 = vmatpush2.msra.mxu0 0.0
  %2605 = vmatprep.mubr.f32.mxu0 0.0
  %2606 = vmatmul.mubr.f32.gmra.mxu0 %v2539
  %v2607 = vpop.f32.mrf.mxu0
  %v2608 = vadd.f32 %v68, %v2607
  %v2609 = vpop.f32.mrf.mxu0
  %2610 = vmatprep.mubr.f32.mxu0 0.0
  %2611 = vmatmul.mubr.f32.gmra.mxu0 %v2540
  %v2612 = vpop.f32.mrf.mxu0
  %v2613 = vadd.f32 %v69, %v2612
  %v2614 = vpop.f32.mrf.mxu0
  %2615 = vdwg.mxu0
  %v2616 = vsel %vm720, %v2608, -inf
  %2617 = vmax.xlane.f32.xlu0 %v2616
  %v2618 = vpop.xlane.xlu0 %2617
  %v2619 = vsel %vm720, %v2613, -inf
  %2620 = vmax.xlane.f32.xlu0 %v2619
  %v2621 = vpop.xlane.xlu0 %2620
  %v2622 = vsub.f32 %v2608, %v2618
  %v2623 = vsub.f32 %v2613, %v2621
  %v2624 = vmul.f32 %v2622, 1.442695
  %v2625 = vpow.pop %v2624
  %v2626 = vmul.f32 %v2623, 1.442695
  %v2627 = vpow.pop %v2626
  %v2628 = vsel %vm720, %v2625, 0.0
  %2629 = vadd.xlane.f32.xlu0 %v2628
  %v2630 = vpop.xlane.xlu0 %2629
  %v2631 = vsel %vm720, %v2627, 0.0
  %2632 = vadd.xlane.f32.xlu0 %v2631
  %v2633 = vpop.xlane.xlu0 %2632
  %v2634 = vmax.f32 %v2630, 1e-30
  %v2635 = vmax.f32 %v2633, 1e-30
  %v2636 = vrcp.pop %v2634
  %v2637 = vmul.f32 %v2625, %v2636
  %v2638 = vrcp.pop %v2635
  %v2639 = vmul.f32 %v2627, %v2638
  %v2641 = vlaneseq
  %v2642 = vshrl.u32 %v2641, 7
  %v2643 = vsub.s32 0, %v2642
  %v2644 = vrot.slane %v2274, %v2643
  %v2647 = vsel %vm720, %v2637, 0
  %v2650 = vsel %vm720, %v2639, 0
  %2652 = vmatprep.subr.mxu0 0.0
  %2653 = vmatpush1.msra.mxu0 0.0
  %2654 = vmatprep.subr.mxu0 0.0
  %2655 = vmatpush1.msra.mxu0 0.0
  %2656 = vmatprep.subr.mxu0 0.0
  %2657 = vmatpush1.msra.mxu0 0.0
  %2658 = vmatprep.subr.mxu0 0.0
  %2659 = vmatpush1.msra.mxu0 0.0
  %2660 = vmatprep.subr.mxu0 0.0
  %2661 = vmatpush1.msra.mxu0 0.0
  %2662 = vmatprep.subr.mxu0 0.0
  %2663 = vmatpush1.msra.mxu0 0.0
  %2664 = vmatprep.subr.mxu0 0.0
  %2665 = vmatpush1.msra.mxu0 0.0
  %2666 = vmatprep.subr.mxu0 0.0
  %2667 = vmatpush1.msra.mxu0 0.0
  %2668 = vmatprep.subr.mxu0 0.0
  %2669 = vmatpush1.msra.mxu0 0.0
  %2670 = vmatprep.subr.mxu0 0.0
  %2671 = vmatpush1.msra.mxu0 0.0
  %2672 = vmatprep.subr.mxu0 0.0
  %2673 = vmatpush1.msra.mxu0 0.0
  %2674 = vmatprep.subr.mxu0 0.0
  %2675 = vmatpush1.msra.mxu0 0.0
  %2676 = vmatprep.subr.mxu0 0.0
  %2677 = vmatpush1.msra.mxu0 0.0
  %2678 = vmatprep.subr.mxu0 0.0
  %2679 = vmatpush1.msra.mxu0 0.0
  %2680 = vmatprep.subr.mxu0 0.0
  %2681 = vmatpush1.msra.mxu0 %v2359
  %2682 = vmatprep.subr.mxu0 0.0
  %2683 = vmatpush1.msra.mxu0 %v2354
  %2684 = vmatprep.subr.mxu0 0.0
  %2685 = vmatpush2.msra.mxu0 0.0
  %2686 = vmatprep.subr.mxu0 0.0
  %2687 = vmatpush2.msra.mxu0 0.0
  %2688 = vmatprep.subr.mxu0 0.0
  %2689 = vmatpush2.msra.mxu0 0.0
  %2690 = vmatprep.subr.mxu0 0.0
  %2691 = vmatpush2.msra.mxu0 0.0
  %2692 = vmatprep.subr.mxu0 0.0
  %2693 = vmatpush2.msra.mxu0 0.0
  %2694 = vmatprep.subr.mxu0 0.0
  %2695 = vmatpush2.msra.mxu0 0.0
  %2696 = vmatprep.subr.mxu0 0.0
  %2697 = vmatpush2.msra.mxu0 0.0
  %2698 = vmatprep.subr.mxu0 0.0
  %2699 = vmatpush2.msra.mxu0 0.0
  %2700 = vmatprep.subr.mxu0 0.0
  %2701 = vmatpush2.msra.mxu0 0.0
  %2702 = vmatprep.subr.mxu0 0.0
  %2703 = vmatpush2.msra.mxu0 0.0
  %2704 = vmatprep.subr.mxu0 0.0
  %2705 = vmatpush2.msra.mxu0 0.0
  %2706 = vmatprep.subr.mxu0 0.0
  %2707 = vmatpush2.msra.mxu0 0.0
  %2708 = vmatprep.subr.mxu0 0.0
  %2709 = vmatpush2.msra.mxu0 0.0
  %2710 = vmatprep.subr.mxu0 0.0
  %2711 = vmatpush2.msra.mxu0 0.0
  %2712 = vmatprep.subr.mxu0 0.0
  %2713 = vmatpush2.msra.mxu0 0.0
  %2714 = vmatprep.subr.mxu0 0.0
  %2715 = vmatpush2.msra.mxu0 0.0
  %2716 = vmatprep.mubr.f32.mxu0 0.0
  %2717 = vmatmul.mubr.f32.gmra.mxu0 %v2647
  %v2718 = vpop.f32.mrf.mxu0
  %v2719 = vadd.f32 %v2644, %v2718
  %v2720 = vpop.f32.mrf.mxu0
  %2721 = vmatprep.mubr.f32.mxu0 0.0
  %2722 = vmatmul.mubr.f32.gmra.mxu0 %v2650
  %v2723 = vpop.f32.mrf.mxu0
  %v2724 = vadd.f32 %v2644, %v2723
  %v2725 = vpop.f32.mrf.mxu0
  %2726 = vdwg.mxu0
  %v2727 = vld [vmem:[%s19] sm:$0xff]
  %v2728 = vld [vmem:[%s20] sm:$0x1]
  %v2730 = vlaneseq
  %v2731 = vshrl.u32 %v2730, 7
  %v2732 = vsub.s32 0, %v2731
  %v2733 = vrot.slane %v2728, %v2732
  %v2736 = vsel %vm180, %v2719, 0
  %v2739 = vsel %vm180, %v2724, 0
  %2741 = vmatprep.subr.mxu0 0.0
  %2742 = vmatpush1.msra.mxu0 0.0
  %2743 = vmatprep.subr.mxu0 0.0
  %2744 = vmatpush1.msra.mxu0 0.0
  %2745 = vmatprep.subr.mxu0 0.0
  %2746 = vmatpush1.msra.mxu0 0.0
  %2747 = vmatprep.subr.mxu0 0.0
  %2748 = vmatpush1.msra.mxu0 0.0
  %2749 = vmatprep.subr.mxu0 0.0
  %2750 = vmatpush1.msra.mxu0 0.0
  %2751 = vmatprep.subr.mxu0 0.0
  %2752 = vmatpush1.msra.mxu0 0.0
  %2753 = vmatprep.subr.mxu0 0.0
  %2754 = vmatpush1.msra.mxu0 0.0
  %2755 = vmatprep.subr.mxu0 0.0
  %2756 = vmatpush1.msra.mxu0 0.0
  %2757 = vmatprep.subr.mxu0 0.0
  %2758 = vmatpush1.msra.mxu0 0.0
  %2759 = vmatprep.subr.mxu0 0.0
  %2760 = vmatpush1.msra.mxu0 0.0
  %2761 = vmatprep.subr.mxu0 0.0
  %2762 = vmatpush1.msra.mxu0 0.0
  %2763 = vmatprep.subr.mxu0 0.0
  %2764 = vmatpush1.msra.mxu0 0.0
  %2765 = vmatprep.subr.mxu0 0.0
  %2766 = vmatpush1.msra.mxu0 0.0
  %2767 = vmatprep.subr.mxu0 0.0
  %2768 = vmatpush1.msra.mxu0 0.0
  %2769 = vmatprep.subr.mxu0 0.0
  %2770 = vmatpush1.msra.mxu0 0.0
  %2771 = vmatprep.subr.mxu0 0.0
  %2772 = vmatpush1.msra.mxu0 %v2727
  %2773 = vmatprep.subr.mxu0 0.0
  %2774 = vmatpush2.msra.mxu0 0.0
  %2775 = vmatprep.subr.mxu0 0.0
  %2776 = vmatpush2.msra.mxu0 0.0
  %2777 = vmatprep.subr.mxu0 0.0
  %2778 = vmatpush2.msra.mxu0 0.0
  %2779 = vmatprep.subr.mxu0 0.0
  %2780 = vmatpush2.msra.mxu0 0.0
  %2781 = vmatprep.subr.mxu0 0.0
  %2782 = vmatpush2.msra.mxu0 0.0
  %2783 = vmatprep.subr.mxu0 0.0
  %2784 = vmatpush2.msra.mxu0 0.0
  %2785 = vmatprep.subr.mxu0 0.0
  %2786 = vmatpush2.msra.mxu0 0.0
  %2787 = vmatprep.subr.mxu0 0.0
  %2788 = vmatpush2.msra.mxu0 0.0
  %2789 = vmatprep.subr.mxu0 0.0
  %2790 = vmatpush2.msra.mxu0 0.0
  %2791 = vmatprep.subr.mxu0 0.0
  %2792 = vmatpush2.msra.mxu0 0.0
  %2793 = vmatprep.subr.mxu0 0.0
  %2794 = vmatpush2.msra.mxu0 0.0
  %2795 = vmatprep.subr.mxu0 0.0
  %2796 = vmatpush2.msra.mxu0 0.0
  %2797 = vmatprep.subr.mxu0 0.0
  %2798 = vmatpush2.msra.mxu0 0.0
  %2799 = vmatprep.subr.mxu0 0.0
  %2800 = vmatpush2.msra.mxu0 0.0
  %2801 = vmatprep.subr.mxu0 0.0
  %2802 = vmatpush2.msra.mxu0 0.0
  %2803 = vmatprep.subr.mxu0 0.0
  %2804 = vmatpush2.msra.mxu0 0.0
  %2805 = vmatprep.mubr.f32.mxu0 0.0
  %2806 = vmatmul.mubr.f32.gmra.mxu0 %v2736
  %v2807 = vpop.f32.mrf.mxu0
  %v2808 = vadd.f32 %v2733, %v2807
  %v2809 = vpop.f32.mrf.mxu0
  %2810 = vmatprep.mubr.f32.mxu0 0.0
  %2811 = vmatmul.mubr.f32.gmra.mxu0 %v2739
  %v2812 = vpop.f32.mrf.mxu0
  %v2813 = vadd.f32 %v2733, %v2812
  %v2814 = vpop.f32.mrf.mxu0
  %2815 = vdwg.mxu0
  %vm2816 = vcmask 31744
  %2817 = vst.msk [vmem:[%s21] sm:$0xff] %vm2816, %v2808
  %2818 = vst.msk [vmem:[%s21 + $0x8] sm:$0xff] %vm2816, %v2813
  // Predicated region
  $region86: #{tpu_custom_call.1} parent=0 // pred_check
    _
  $region87: #{tpu_custom_call.1} parent=0 // pred_check_branch
    %2820 = sbr.rel (0) target = $region89
  $region88: #{tpu_custom_call.1} parent=0 // pred_region
    _
  $region89: #{tpu_custom_call.1} parent=0 // pred_fallthru
    _
  // Predicated region
  $region90: #{tpu_custom_call.1} parent=0 // pred_check
    _
  $region91: #{tpu_custom_call.1} parent=0 // pred_check_branch
    %2822 = sbr.rel (0) target = $region93
  $region92: #{tpu_custom_call.1} parent=0 // pred_region
    _
  $region93: #{tpu_custom_call.1} parent=0 // pred_fallthru
    _

</llo_original>
